<compile_context>
chip_gen: v7x
topology: tpu7x:2x2x1
jax: 0.10.0
libtpu: 0.0.40
codegen_flags: <defaults>
</compile_context>

<pallas_src>
import jax
import jax.numpy as jnp
from jax import lax
from jax.experimental import pallas as pl
from jax.experimental.pallas import tpu as pltpu


# ------------------------- shared math helpers (used in-kernel & in reference)
def _qmul(a, b):
    """Hamilton product, (w, x, y, z) convention, shapes [..., 4]."""
    aw, ax, ay, az = a[..., 0:1], a[..., 1:2], a[..., 2:3], a[..., 3:4]
    bw, bx, by, bz = b[..., 0:1], b[..., 1:2], b[..., 2:3], b[..., 3:4]
    return jnp.concatenate([
        aw * bw - ax * bx - ay * by - az * bz,
        aw * bx + ax * bw + ay * bz - az * by,
        aw * by - ax * bz + ay * bw + az * bx,
        aw * bz + ax * by - ay * bx + az * bw,
    ], axis=-1)


def _qinv(q):
    """Quaternion inverse: conjugate / squared norm (== conjugate for unit q)."""
    n2 = jnp.maximum(jnp.sum(q * q, axis=-1, keepdims=True), 1e-24)
    conj = jnp.concatenate([q[..., 0:1], -q[..., 1:4]], axis=-1)
    return conj / n2


def _cross(a, b):
    ax, ay, az = a[..., 0:1], a[..., 1:2], a[..., 2:3]
    bx, by, bz = b[..., 0:1], b[..., 1:2], b[..., 2:3]
    return jnp.concatenate(
        [ay * bz - az * by, az * bx - ax * bz, ax * by - ay * bx], axis=-1)


def _qrotate(q, v):
    """Rotate vectors v [..., 3] by unit quaternions q [..., 4]."""
    w = q[..., 0:1]
    u = q[..., 1:4]
    return v + 2.0 * _cross(u, _cross(u, v) + w * v)


def _mlp(x, w1, b1, w2, b2):
    """Linear -> ReLU -> Linear (reference path only)."""
    hid = jnp.maximum(
        jnp.dot(x, w1, preferred_element_type=jnp.float32) + b1, 0.0)
    return jnp.dot(hid, w2, preferred_element_type=jnp.float32) + b2


def _choose_ti(N, E, M, T, vmem_budget=20 << 20, target_rows=256):
    """Receiver tile size: divisor of N, (== N or % 8 == 0), VMEM-budgeted."""
    cands = [d for d in range(1, N + 1)
             if N % d == 0 and (d == N or d % 8 == 0)]
    def tile_bytes(ti):
        rows = ti * N
        # double-buffered e tile + dx out tile + dominant f32 intermediates
        return 4 * (2 * rows * E + 2 * rows * 3 + rows * T + rows * M + rows * 9)
    fits = [d for d in cands if tile_bytes(d) <= vmem_budget]
    if not fits:
        return cands[0]
    big = [d for d in fits if d * N >= target_rows]
    return big[0] if big else fits[-1]


# ----------------------------------------------------------------- kernel 1
def _message_pass(params, mask_col, mask_row, h, e, x, q):
    B, N, H = h.shape
    E = e.shape[-1]
    T = params["wm1"].shape[1]          # transition size (64)
    M = params["wm2"].shape[1]          # message size
    O = params["wf2"].shape[1]          # node output size
    TI = _choose_ti(N, E, M, T)
    n_tiles = N // TI
    F1 = 2 * H + E + 9                  # message-MLP input width
    OF = F1                             # feature-MLP first-layer rows start
    OT = OF + H + M                     # translation-MLP rows start
    OQ = OT + M                         # quat-MLP rows start

    # Pack the 16 small weight/bias arrays into 4 slabs (fewer operands).
    w1 = jnp.concatenate([params["wm1"], params["wf1"],
                          params["wt1"], params["wq1"]], axis=0)   # [OQ+M, T]
    b1 = jnp.concatenate([params["bm1"], params["bf1"],
                          params["bt1"], params["bq1"]], axis=0)   # [4, T]
    w2 = jnp.concatenate([params["wm2"], params["wf2"],
                          params["wt2"], params["wq2"]], axis=1)   # [T, M+O+7]
    b2 = jnp.concatenate([params["bm2"], params["bf2"],
                          params["bt2"], params["bq2"]], axis=1)   # [1, M+O+7]

    def kernel(maskc_ref, maskr_ref, h_ref, e_ref, x_ref, q_ref,
               w1_ref, b1_ref, w2_ref, b2_ref,
               o_ref, uq_ref, dx_ref, hj_ref):
        it = pl.program_id(1)
        start = pl.multiple_of(it * TI, TI)

        h_all = h_ref[0]                                   # [N, H]
        x_all = x_ref[0]                                   # [N, 3]
        q_all = q_ref[0]                                   # [N, 4]
        mask_send = maskr_ref[0]                           # [1, N]

        # ---- receiver-invariant partial product, hoisted once per batch b
        @pl.when(it == 0)
        def _():
            hj_ref[...] = (jnp.dot(h_all, w1_ref[pl.ds(H, H), :],
                                   preferred_element_type=jnp.float32)
                           + b1_ref[pl.ds(0, 1), :])

        # ---- receiver tile
        h_i = h_ref[0, pl.ds(start, TI), :]                # [TI, H]
        x_i = x_ref[0, pl.ds(start, TI), :]                # [TI, 3]
        q_i = q_ref[0, pl.ds(start, TI), :]                # [TI, 4]
        mask_recv = maskc_ref[0, pl.ds(start, TI), :]      # [TI, 1]

        recv_ids = start + lax.broadcasted_iota(jnp.int32, (TI, N), 0)
        send_ids = lax.broadcasted_iota(jnp.int32, (TI, N), 1)
        not_diag = (recv_ids != send_ids).astype(jnp.float32)
        msg_mask = mask_recv * mask_send * not_diag        # [TI, N]
        msg_mask3 = msg_mask[:, :, None]

        # ---- geometric pair features
        diff = x_i[:, None, :] - x_all[None, :, :]         # x_i - x_j [TI,N,3]
        d2 = jnp.sum(diff * diff, axis=-1, keepdims=True)  # [TI, N, 1]
        qdot = jnp.abs(jnp.sum(q_i[:, None, :] * q_all[None, :, :],
                               axis=-1, keepdims=True))    # [TI, N, 1]
        q_inv_j = _qinv(q_all)                             # [N, 4]
        local_x = _qrotate(q_inv_j[None, :, :], diff)      # R_j^-1 (x_i - x_j)
        local_q = _qmul(q_inv_j[None, :, :], q_i[:, None, :])   # q_j^-1 * q_i

        rows = TI * N

        # ---- message-MLP hidden layer via split matmuls (no lane concat)
        hi_hid = jnp.dot(h_i, w1_ref[pl.ds(0, H), :],
                         preferred_element_type=jnp.float32)          # [TI,T]
        e_hid = jnp.dot(e_ref[0].reshape(rows, E),
                        w1_ref[pl.ds(2 * H, E), :],
                        preferred_element_type=jnp.float32)
        lx_hid = jnp.dot(local_x.reshape(rows, 3),
                         w1_ref[pl.ds(2 * H + E, 3), :],
                         preferred_element_type=jnp.float32)
        lq_hid = jnp.dot(local_q.reshape(rows, 4),
                         w1_ref[pl.ds(2 * H + E + 3, 4), :],
                         preferred_element_type=jnp.float32)
        d2_hid = d2.reshape(rows, 1) * w1_ref[pl.ds(2 * H + E + 7, 1), :]
        qd_hid = qdot.reshape(rows, 1) * w1_ref[pl.ds(2 * H + E + 8, 1), :]
        pair_hid = (e_hid + lx_hid + lq_hid + d2_hid + qd_hid).reshape(TI, N, T)

        hid = jnp.maximum(
            hi_hid[:, None, :] + hj_ref[...][None, :, :] + pair_hid, 0.0)

        # ---- messages + masked sum over senders
        m = (jnp.dot(hid.reshape(rows, T), w2_ref[:, pl.ds(0, M)],
                     preferred_element_type=jnp.float32)
             + b2_ref[:, pl.ds(0, M)]).reshape(TI, N, M) * msg_mask3
        m_sum = jnp.sum(m, axis=1)                                    # [TI, M]

        # ---- node feature update (split matmuls instead of concat)
        f_hid = jnp.maximum(
            jnp.dot(h_i, w1_ref[pl.ds(OF, H), :],
                    preferred_element_type=jnp.float32)
            + jnp.dot(m_sum, w1_ref[pl.ds(OF + H, M), :],
                      preferred_element_type=jnp.float32)
            + b1_ref[pl.ds(1, 1), :], 0.0)
        o = (jnp.dot(f_hid, w2_ref[:, pl.ds(M, O)],
                     preferred_element_type=jnp.float32)
             + b2_ref[:, pl.ds(M, O)])                                # [TI, O]

        # ---- per-edge translation update (expressed in sender frame)
        t_hid = jnp.maximum(
            jnp.dot(m.reshape(rows, M), w1_ref[pl.ds(OT, M), :],
                    preferred_element_type=jnp.float32)
            + b1_ref[pl.ds(2, 1), :], 0.0)
        dx = ((jnp.dot(t_hid, w2_ref[:, pl.ds(M + O, 3)],
                       preferred_element_type=jnp.float32)
               + b2_ref[:, pl.ds(M + O, 3)]).reshape(TI, N, 3) * msg_mask3)

        # ---- quaternion update
        q_hid = jnp.maximum(
            jnp.dot(m_sum, w1_ref[pl.ds(OQ, M), :],
                    preferred_element_type=jnp.float32)
            + b1_ref[pl.ds(3, 1), :], 0.0)
        dq = (jnp.dot(q_hid, w2_ref[:, pl.ds(M + O + 3, 4)],
                      preferred_element_type=jnp.float32)
              + b2_ref[:, pl.ds(M + O + 3, 4)])                       # [TI, 4]

        lane4 = lax.broadcasted_iota(jnp.int32, (1, 4), 1)
        ident = (lane4 == 0).astype(jnp.float32)                      # [1,0,0,0]
        sel = mask_recv > 0.5
        dq = jnp.where(sel, dq, ident)
        dq = dq * lax.rsqrt(jnp.maximum(
            jnp.sum(dq * dq, axis=-1, keepdims=True), 1e-24))
        uq = _qmul(q_i, dq)
        uq = jnp.where(sel, uq, ident)
        uq = uq * lax.rsqrt(jnp.maximum(
            jnp.sum(uq * uq, axis=-1, keepdims=True), 1e-24))

        o_ref[0] = o
        uq_ref[0] = uq
        dx_ref[0] = dx

    grid_spec = pltpu.PrefetchScalarGridSpec(
        num_scalar_prefetch=0, grid=(B, n_tiles),
        in_specs=[
            pl.BlockSpec((1, N, 1), lambda b, i: (b, 0, 0)),         # mask col
            pl.BlockSpec((1, 1, N), lambda b, i: (b, 0, 0)),         # mask row
            pl.BlockSpec((1, N, H), lambda b, i: (b, 0, 0)),         # h (all j)
            pl.BlockSpec((1, TI, N, E), lambda b, i: (b, i, 0, 0)),  # e tile
            pl.BlockSpec((1, N, 3), lambda b, i: (b, 0, 0)),         # x
            pl.BlockSpec((1, N, 4), lambda b, i: (b, 0, 0)),         # q
            pl.BlockSpec(w1.shape, lambda b, i: (0, 0)),             # packed W1
            pl.BlockSpec(b1.shape, lambda b, i: (0, 0)),             # packed b1
            pl.BlockSpec(w2.shape, lambda b, i: (0, 0)),             # packed W2
            pl.BlockSpec(b2.shape, lambda b, i: (0, 0)),             # packed b2
        ],
        out_specs=[
            pl.BlockSpec((1, TI, O), lambda b, i: (b, i, 0)),        # o tile
            pl.BlockSpec((1, TI, 4), lambda b, i: (b, i, 0)),        # upd_q tile
            pl.BlockSpec((1, TI, N, 3), lambda b, i: (b, i, 0, 0)),  # dx tile
        ],
        scratch_shapes=[pltpu.VMEM((N, T), jnp.float32)],            # hj hidden
    )
    out_shape = (
        jax.ShapeDtypeStruct((B, N, O), jnp.float32),
        jax.ShapeDtypeStruct((B, N, 4), jnp.float32),
        jax.ShapeDtypeStruct((B, N, N, 3), jnp.float32),
    )
    return pl.pallas_call(
        kernel, out_shape=out_shape, grid_spec=grid_spec,
        compiler_params=pltpu.CompilerParams(
            # Receiver-tile axis must stay "arbitrary": the hj scratch is
            # filled under pl.when(it == 0) and reused for later tiles of the
            # same batch element.
            dimension_semantics=("parallel", "arbitrary"),
            vmem_limit_bytes=32 * 1024 * 1024),
    )(mask_col, mask_row, h, e, x, q, w1, b1, w2, b2)


# ----------------------------------------------------------------- kernel 2
def _update_x(mask_row, x, uq, dx):
    B, N, _ = x.shape

    def kernel(maskr_ref, x_ref, uq_ref, dx_ref, ux_ref):
        mask = maskr_ref[0]                                 # [1, N]
        n_nodes = jnp.sum(mask)                             # scalar
        qn = uq_ref[0]                                      # [N, 4]
        qn = qn * lax.rsqrt(jnp.maximum(
            jnp.sum(qn * qn, axis=-1, keepdims=True), 1e-24))
        rot = _qrotate(qn[None, :, :], dx_ref[0])           # R(uq_j) dx[i,j]
        s = jnp.sum(rot, axis=1)                            # [N, 3]
        ux_ref[0] = x_ref[0] + s / (n_nodes - 1.0)

    grid_spec = pltpu.PrefetchScalarGridSpec(
        num_scalar_prefetch=0, grid=(B,),
        in_specs=[
            pl.BlockSpec((1, 1, N), lambda b: (b, 0, 0)),
            pl.BlockSpec((1, N, 3), lambda b: (b, 0, 0)),
            pl.BlockSpec((1, N, 4), lambda b: (b, 0, 0)),
            pl.BlockSpec((1, N, N, 3), lambda b: (b, 0, 0, 0)),
        ],
        out_specs=pl.BlockSpec((1, N, 3), lambda b: (b, 0, 0)),
    )
    return pl.pallas_call(
        kernel,
        out_shape=jax.ShapeDtypeStruct((B, N, 3), jnp.float32),
        grid_spec=grid_spec,
        compiler_params=pltpu.CompilerParams(
            dimension_semantics=("parallel",),
            vmem_limit_bytes=32 * 1024 * 1024),
    )(mask_row, x, uq, dx)


# ---------------------------------------------------------------- full layer
@jax.jit
def egnn_pallas(params, x, q, h, e, node_mask):
    B, N = node_mask.shape
    maskf = node_mask.astype(jnp.float32)
    mask_col = maskf.reshape(B, N, 1)
    mask_row = maskf.reshape(B, 1, N)
    o, uq, dx = _message_pass(params, mask_col, mask_row, h, e, x, q)
    ux = _update_x(mask_row, x, uq, dx)
    return uq, ux, o


# ------------------------------------------------------------ pure-JAX check
def egnn_reference(params, x, q, h, e, node_mask):
    B, N, H = h.shape
    mask = node_mask.astype(jnp.float32)
    eye = jnp.eye(N, dtype=jnp.float32)
    msg_mask = mask[:, :, None] * mask[:, None, :] * (1.0 - eye)[None]
    n_nodes = jnp.sum(mask, axis=-1)

    diff = x[:, :, None, :] - x[:, None, :, :]
    d2 = jnp.sum(diff * diff, axis=-1, keepdims=True)
    qdot = jnp.abs(jnp.sum(q[:, :, None, :] * q[:, None, :, :],
                           axis=-1, keepdims=True))
    q_inv_j = jnp.broadcast_to(_qinv(q)[:, None, :, :], (B, N, N, 4))
    local_x = _qrotate(q_inv_j, diff)
    local_q = _qmul(q_inv_j, jnp.broadcast_to(q[:, :, None, :], (B, N, N, 4)))
    hi = jnp.broadcast_to(h[:, :, None, :], (B, N, N, H))
    hj = jnp.broadcast_to(h[:, None, :, :], (B, N, N, H))
    feat = jnp.concatenate([hi, hj, e, local_x, local_q, d2, qdot], axis=-1)
    m = _mlp(feat, params["wm1"], params["bm1"],
             params["wm2"], params["bm2"]) * msg_mask[..., None]
    m_sum = jnp.sum(m, axis=-2)
    o = _mlp(jnp.concatenate([h, m_sum], axis=-1),
             params["wf1"], params["bf1"], params["wf2"], params["bf2"])
    dx = _mlp(m, params["wt1"], params["bt1"],
              params["wt2"], params["bt2"]) * msg_mask[..., None]
    dq = _mlp(m_sum, params["wq1"], params["bq1"],
              params["wq2"], params["bq2"])
    ident = jnp.array([1.0, 0.0, 0.0, 0.0], jnp.float32)
    sel = mask[..., None] > 0.5
    dq = jnp.where(sel, dq, ident)
    dq = dq / jnp.maximum(jnp.linalg.norm(dq, axis=-1, keepdims=True), 1e-12)
    uq = _qmul(q, dq)
    uq = jnp.where(sel, uq, ident)
    uq = uq / jnp.linalg.norm(uq, axis=-1, keepdims=True)
    rot = jnp.broadcast_to(uq[:, None, :, :], (B, N, N, 4))
    ux = x + jnp.sum(_qrotate(rot, dx), axis=-2) / (n_nodes[:, None, None] - 1.0)
    return uq, ux, o


# ----------------------------------------------------------------- params
def init_params(key, H, E, O, M, T=64):
    def lin(k, fi, fo):
        k1, k2 = jax.random.split(k)
        bound = 1.0 / (fi ** 0.5)
        w = jax.random.uniform(k1, (fi, fo), jnp.float32, -bound, bound)
        b = jax.random.uniform(k2, (1, fo), jnp.float32, -bound, bound)
        return w, b
    keys = jax.random.split(key, 8)
    p = {}
    p["wm1"], p["bm1"] = lin(keys[0], 2 * H + E + 9, T)
    p["wm2"], p["bm2"] = lin(keys[1], T, M)
    p["wf1"], p["bf1"] = lin(keys[2], H + M, T)
    p["wf2"], p["bf2"] = lin(keys[3], T, O)
    p["wt1"], p["bt1"] = lin(keys[4], M, T)
    p["wt2"], p["bt2"] = lin(keys[5], T, 3)
    p["wq1"], p["bq1"] = lin(keys[6], M, T)
    p["wq2"], p["bq2"] = lin(keys[7], T, 4)
    return p


if __name__ == "__main__":
    B, N, H, E, O, M = 2, 8, 16, 8, 16, 16
    key = jax.random.PRNGKey(0)
    kp, kx, kq, kh, ke, km = jax.random.split(key, 6)

    params = init_params(kp, H, E, O, M)
    x = jax.random.normal(kx, (B, N, 3), jnp.float32)
    q = jax.random.normal(kq, (B, N, 4), jnp.float32)
    q = q / jnp.linalg.norm(q, axis=-1, keepdims=True)   # unit quaternions
    h = jax.random.normal(kh, (B, N, H), jnp.float32)
    e = jax.random.normal(ke, (B, N, N, E), jnp.float32)
    node_mask = (jax.random.uniform(km, (B, N)) > 0.25).astype(jnp.float32)
    node_mask = node_mask.at[:, :3].set(1.0)             # >= 3 live nodes / ex.

    uq, ux, o = egnn_pallas(params, x, q, h, e, node_mask)
    jax.block_until_ready((uq, ux, o))

    uq_r, ux_r, o_r = egnn_reference(params, x, q, h, e, node_mask)
    assert jnp.allclose(uq, uq_r, atol=2e-3, rtol=2e-3)
    assert jnp.allclose(ux, ux_r, atol=2e-3, rtol=2e-3)
    assert jnp.allclose(o, o_r, atol=2e-3, rtol=2e-3)

    print("KERNEL_OK")
</pallas_src>

<mosaic_0001>
module attributes {stable_mosaic.version = 11 : i64} {
  func.func @kernel(%arg0: i32, %arg1: memref<1x1x8xf32, #tpu.memory_space<vmem>>, %arg2: memref<1x8x3xf32, #tpu.memory_space<vmem>>, %arg3: memref<1x8x4xf32, #tpu.memory_space<vmem>>, %arg4: memref<1x8x8x3xf32, #tpu.memory_space<vmem>>, %arg5: memref<1x8x3xf32, #tpu.memory_space<vmem>>) attributes {dimension_semantics = [#tpu.dimension_semantics<parallel>], iteration_bounds = array<i64: 2>, scalar_prefetch = 0 : i64, scratch_operands = 0 : i64, tpu.core_type = #tpu.core_type<tc>, window_params = [{transform_indices = @transform_0, window_bounds = array<i64: 1, 1, 8>}, {transform_indices = @transform_1, window_bounds = array<i64: 1, 8, 3>}, {transform_indices = @transform_2, window_bounds = array<i64: 1, 8, 4>}, {transform_indices = @transform_3, window_bounds = array<i64: 1, 8, 8, 3>}, {transform_indices = @transform_4, window_bounds = array<i64: 1, 8, 3>}]} {
    %c0 = arith.constant 0 : index
    %c0_0 = arith.constant 0 : index
    %c0_1 = arith.constant 0 : index
    %0 = vector.load %arg1[%c0, %c0_0, %c0_1] : memref<1x1x8xf32, #tpu.memory_space<vmem>>, vector<1x1x8xf32>
    %1 = vector.shape_cast %0 : vector<1x1x8xf32> to vector<1x8xf32>
    %2 = vector.shape_cast %1 : vector<1x8xf32> to vector<1x1x8xf32>
    %cst = arith.constant dense<0.000000e+00> : vector<1xf32>
    %3 = vector.multi_reduction <add>, %2, %cst [1, 2] : vector<1x1x8xf32> to vector<1xf32>
    %4 = vector.shape_cast %3 : vector<1xf32> to vector<1x1x1xf32>
    %5 = vector.extract %4[0, 0, 0] : f32 from vector<1x1x1xf32>
    %c0_2 = arith.constant 0 : index
    %c0_3 = arith.constant 0 : index
    %c0_4 = arith.constant 0 : index
    %6 = vector.load %arg3[%c0_2, %c0_3, %c0_4] : memref<1x8x4xf32, #tpu.memory_space<vmem>>, vector<1x8x4xf32>
    %7 = vector.shape_cast %6 : vector<1x8x4xf32> to vector<8x4xf32>
    %8 = arith.mulf %7, %7 : vector<8x4xf32>
    %cst_5 = arith.constant dense<0.000000e+00> : vector<8xf32>
    %9 = vector.multi_reduction <add>, %8, %cst_5 [1] : vector<8x4xf32> to vector<8xf32>
    %10 = vector.shape_cast %9 : vector<8xf32> to vector<8x1xf32>
    %cst_6 = arith.constant 1.000000e-24 : f32
    %11 = vector.broadcast %cst_6 : f32 to vector<8x1xf32>
    %12 = arith.maximumf %10, %11 : vector<8x1xf32>
    %13 = math.rsqrt %12 : vector<8x1xf32>
    %14 = vector.broadcast %13 : vector<8x1xf32> to vector<8x4xf32>
    %15 = arith.mulf %7, %14 : vector<8x4xf32>
    %16 = vector.shape_cast %15 : vector<8x4xf32> to vector<1x8x4xf32>
    %c0_7 = arith.constant 0 : index
    %c0_8 = arith.constant 0 : index
    %c0_9 = arith.constant 0 : index
    %c0_10 = arith.constant 0 : index
    %17 = vector.load %arg4[%c0_7, %c0_8, %c0_9, %c0_10] : memref<1x8x8x3xf32, #tpu.memory_space<vmem>>, vector<1x8x8x3xf32>
    %18 = vector.shape_cast %17 : vector<1x8x8x3xf32> to vector<8x8x3xf32>
    %19 = vector.extract_strided_slice %16 {offsets = [0, 0, 0], sizes = [1, 8, 1], strides = [1, 1, 1]} : vector<1x8x4xf32> to vector<1x8x1xf32>
    %20 = vector.extract_strided_slice %16 {offsets = [0, 0, 1], sizes = [1, 8, 3], strides = [1, 1, 1]} : vector<1x8x4xf32> to vector<1x8x3xf32>
    %21 = vector.extract_strided_slice %20 {offsets = [0, 0, 0], sizes = [1, 8, 1], strides = [1, 1, 1]} : vector<1x8x3xf32> to vector<1x8x1xf32>
    %22 = vector.extract_strided_slice %20 {offsets = [0, 0, 1], sizes = [1, 8, 1], strides = [1, 1, 1]} : vector<1x8x3xf32> to vector<1x8x1xf32>
    %23 = vector.extract_strided_slice %20 {offsets = [0, 0, 2], sizes = [1, 8, 1], strides = [1, 1, 1]} : vector<1x8x3xf32> to vector<1x8x1xf32>
    %24 = vector.extract_strided_slice %18 {offsets = [0, 0, 0], sizes = [8, 8, 1], strides = [1, 1, 1]} : vector<8x8x3xf32> to vector<8x8x1xf32>
    %25 = vector.extract_strided_slice %18 {offsets = [0, 0, 1], sizes = [8, 8, 1], strides = [1, 1, 1]} : vector<8x8x3xf32> to vector<8x8x1xf32>
    %26 = vector.extract_strided_slice %18 {offsets = [0, 0, 2], sizes = [8, 8, 1], strides = [1, 1, 1]} : vector<8x8x3xf32> to vector<8x8x1xf32>
    %27 = vector.broadcast %22 : vector<1x8x1xf32> to vector<8x8x1xf32>
    %28 = arith.mulf %27, %26 : vector<8x8x1xf32>
    %29 = vector.broadcast %23 : vector<1x8x1xf32> to vector<8x8x1xf32>
    %30 = arith.mulf %29, %25 : vector<8x8x1xf32>
    %31 = arith.subf %28, %30 : vector<8x8x1xf32>
    %32 = vector.broadcast %23 : vector<1x8x1xf32> to vector<8x8x1xf32>
    %33 = arith.mulf %32, %24 : vector<8x8x1xf32>
    %34 = vector.broadcast %21 : vector<1x8x1xf32> to vector<8x8x1xf32>
    %35 = arith.mulf %34, %26 : vector<8x8x1xf32>
    %36 = arith.subf %33, %35 : vector<8x8x1xf32>
    %37 = vector.broadcast %21 : vector<1x8x1xf32> to vector<8x8x1xf32>
    %38 = arith.mulf %37, %25 : vector<8x8x1xf32>
    %39 = vector.broadcast %22 : vector<1x8x1xf32> to vector<8x8x1xf32>
    %40 = arith.mulf %39, %24 : vector<8x8x1xf32>
    %41 = arith.subf %38, %40 : vector<8x8x1xf32>
    %42 = tpu.concatenate %31, %36, %41 in 2 : vector<8x8x1xf32>, vector<8x8x1xf32>, vector<8x8x1xf32> -> vector<8x8x3xf32>
    %43 = vector.broadcast %19 : vector<1x8x1xf32> to vector<8x8x3xf32>
    %44 = arith.mulf %43, %18 : vector<8x8x3xf32>
    %45 = arith.addf %42, %44 : vector<8x8x3xf32>
    %46 = vector.extract_strided_slice %20 {offsets = [0, 0, 0], sizes = [1, 8, 1], strides = [1, 1, 1]} : vector<1x8x3xf32> to vector<1x8x1xf32>
    %47 = vector.extract_strided_slice %20 {offsets = [0, 0, 1], sizes = [1, 8, 1], strides = [1, 1, 1]} : vector<1x8x3xf32> to vector<1x8x1xf32>
    %48 = vector.extract_strided_slice %20 {offsets = [0, 0, 2], sizes = [1, 8, 1], strides = [1, 1, 1]} : vector<1x8x3xf32> to vector<1x8x1xf32>
    %49 = vector.extract_strided_slice %45 {offsets = [0, 0, 0], sizes = [8, 8, 1], strides = [1, 1, 1]} : vector<8x8x3xf32> to vector<8x8x1xf32>
    %50 = vector.extract_strided_slice %45 {offsets = [0, 0, 1], sizes = [8, 8, 1], strides = [1, 1, 1]} : vector<8x8x3xf32> to vector<8x8x1xf32>
    %51 = vector.extract_strided_slice %45 {offsets = [0, 0, 2], sizes = [8, 8, 1], strides = [1, 1, 1]} : vector<8x8x3xf32> to vector<8x8x1xf32>
    %52 = vector.broadcast %47 : vector<1x8x1xf32> to vector<8x8x1xf32>
    %53 = arith.mulf %52, %51 : vector<8x8x1xf32>
    %54 = vector.broadcast %48 : vector<1x8x1xf32> to vector<8x8x1xf32>
    %55 = arith.mulf %54, %50 : vector<8x8x1xf32>
    %56 = arith.subf %53, %55 : vector<8x8x1xf32>
    %57 = vector.broadcast %48 : vector<1x8x1xf32> to vector<8x8x1xf32>
    %58 = arith.mulf %57, %49 : vector<8x8x1xf32>
    %59 = vector.broadcast %46 : vector<1x8x1xf32> to vector<8x8x1xf32>
    %60 = arith.mulf %59, %51 : vector<8x8x1xf32>
    %61 = arith.subf %58, %60 : vector<8x8x1xf32>
    %62 = vector.broadcast %46 : vector<1x8x1xf32> to vector<8x8x1xf32>
    %63 = arith.mulf %62, %50 : vector<8x8x1xf32>
    %64 = vector.broadcast %47 : vector<1x8x1xf32> to vector<8x8x1xf32>
    %65 = arith.mulf %64, %49 : vector<8x8x1xf32>
    %66 = arith.subf %63, %65 : vector<8x8x1xf32>
    %67 = tpu.concatenate %56, %61, %66 in 2 : vector<8x8x1xf32>, vector<8x8x1xf32>, vector<8x8x1xf32> -> vector<8x8x3xf32>
    %cst_11 = arith.constant 2.000000e+00 : f32
    %68 = vector.broadcast %cst_11 : f32 to vector<8x8x3xf32>
    %69 = arith.mulf %68, %67 : vector<8x8x3xf32>
    %70 = arith.addf %18, %69 : vector<8x8x3xf32>
    %cst_12 = arith.constant dense<0.000000e+00> : vector<8x3xf32>
    %71 = vector.multi_reduction <add>, %70, %cst_12 [1] : vector<8x8x3xf32> to vector<8x3xf32>
    %c0_13 = arith.constant 0 : index
    %c0_14 = arith.constant 0 : index
    %c0_15 = arith.constant 0 : index
    %72 = vector.load %arg2[%c0_13, %c0_14, %c0_15] : memref<1x8x3xf32, #tpu.memory_space<vmem>>, vector<1x8x3xf32>
    %73 = vector.shape_cast %72 : vector<1x8x3xf32> to vector<8x3xf32>
    %cst_16 = arith.constant 1.000000e+00 : f32
    %74 = arith.subf %5, %cst_16 : f32
    %75 = vector.broadcast %74 : f32 to vector<8x3xf32>
    %76 = arith.divf %71, %75 : vector<8x3xf32>
    %77 = arith.addf %73, %76 : vector<8x3xf32>
    %c0_17 = arith.constant 0 : index
    %c0_18 = arith.constant 0 : index
    %c0_19 = arith.constant 0 : index
    %78 = vector.load %arg5[%c0_17, %c0_18, %c0_19] : memref<1x8x3xf32, #tpu.memory_space<vmem>>, vector<1x8x3xf32>
    %79 = vector.shape_cast %78 : vector<1x8x3xf32> to vector<8x3xf32>
    %80 = vector.shape_cast %77 : vector<8x3xf32> to vector<1x8x3xf32>
    tpu.vector_store %arg5[%c0_17, %c0_18, %c0_19], %80 {strides = array<i32>} : memref<1x8x3xf32, #tpu.memory_space<vmem>>, vector<1x8x3xf32>,
    return
  }
  func.func @transform_0(%arg0: i32) -> (i32, i32, i32) {
    %c0_i32 = arith.constant 0 : i32
    %c0_i32_0 = arith.constant 0 : i32
    %c0_i32_1 = arith.constant 0 : i32
    return %arg0, %c0_i32, %c0_i32_0 : i32, i32, i32
  }
  func.func @transform_1(%arg0: i32) -> (i32, i32, i32) {
    %c0_i32 = arith.constant 0 : i32
    %c0_i32_0 = arith.constant 0 : i32
    %c0_i32_1 = arith.constant 0 : i32
    return %arg0, %c0_i32, %c0_i32_0 : i32, i32, i32
  }
  func.func @transform_2(%arg0: i32) -> (i32, i32, i32) {
    %c0_i32 = arith.constant 0 : i32
    %c0_i32_0 = arith.constant 0 : i32
    %c0_i32_1 = arith.constant 0 : i32
    return %arg0, %c0_i32, %c0_i32_0 : i32, i32, i32
  }
  func.func @transform_3(%arg0: i32) -> (i32, i32, i32, i32) {
    %c0_i32 = arith.constant 0 : i32
    %c0_i32_0 = arith.constant 0 : i32
    %c0_i32_1 = arith.constant 0 : i32
    %c0_i32_2 = arith.constant 0 : i32
    return %arg0, %c0_i32, %c0_i32_0, %c0_i32_1 : i32, i32, i32, i32
  }
  func.func @transform_4(%arg0: i32) -> (i32, i32, i32) {
    %c0_i32 = arith.constant 0 : i32
    %c0_i32_0 = arith.constant 0 : i32
    %c0_i32_1 = arith.constant 0 : i32
    return %arg0, %c0_i32, %c0_i32_0 : i32, i32, i32
  }
}

module attributes {stable_mosaic.version = 11 : i64} {
  func.func @kernel(%arg0: i32, %arg1: i32, %arg2: memref<1x8x1xf32, #tpu.memory_space<vmem>>, %arg3: memref<1x1x8xf32, #tpu.memory_space<vmem>>, %arg4: memref<1x8x16xf32, #tpu.memory_space<vmem>>, %arg5: memref<1x8x8x8xf32, #tpu.memory_space<vmem>>, %arg6: memref<1x8x3xf32, #tpu.memory_space<vmem>>, %arg7: memref<1x8x4xf32, #tpu.memory_space<vmem>>, %arg8: memref<113x64xf32, #tpu.memory_space<vmem>>, %arg9: memref<4x64xf32, #tpu.memory_space<vmem>>, %arg10: memref<64x39xf32, #tpu.memory_space<vmem>>, %arg11: memref<1x39xf32, #tpu.memory_space<vmem>>, %arg12: memref<1x8x16xf32, #tpu.memory_space<vmem>>, %arg13: memref<1x8x4xf32, #tpu.memory_space<vmem>>, %arg14: memref<1x8x8x3xf32, #tpu.memory_space<vmem>>, %arg15: memref<8x64xf32, #tpu.memory_space<vmem>>) attributes {dimension_semantics = [#tpu.dimension_semantics<parallel>, #tpu.dimension_semantics<arbitrary>], iteration_bounds = array<i64: 2, 1>, scalar_prefetch = 0 : i64, scratch_operands = 1 : i64, tpu.core_type = #tpu.core_type<tc>, window_params = [{transform_indices = @transform_0, window_bounds = array<i64: 1, 8, 1>}, {transform_indices = @transform_1, window_bounds = array<i64: 1, 1, 8>}, {transform_indices = @transform_2, window_bounds = array<i64: 1, 8, 16>}, {transform_indices = @transform_3, window_bounds = array<i64: 1, 8, 8, 8>}, {transform_indices = @transform_4, window_bounds = array<i64: 1, 8, 3>}, {transform_indices = @transform_5, window_bounds = array<i64: 1, 8, 4>}, {pipeline_mode = #tpu.pipeline_mode<synchronous>, transform_indices = @transform_6, window_bounds = array<i64: 113, 64>}, {pipeline_mode = #tpu.pipeline_mode<synchronous>, transform_indices = @transform_7, window_bounds = array<i64: 4, 64>}, {pipeline_mode = #tpu.pipeline_mode<synchronous>, transform_indices = @transform_8, window_bounds = array<i64: 64, 39>}, {pipeline_mode = #tpu.pipeline_mode<synchronous>, transform_indices = @transform_9, window_bounds = array<i64: 1, 39>}, {transform_indices = @transform_10, window_bounds = array<i64: 1, 8, 16>}, {transform_indices = @transform_11, window_bounds = array<i64: 1, 8, 4>}, {transform_indices = @transform_12, window_bounds = array<i64: 1, 8, 8, 3>}]} {
    %c8_i32 = arith.constant 8 : i32
    %0 = arith.muli %arg1, %c8_i32 : i32
    %1 = tpu.assume_multiple %0, 8 : i32
    %c0 = arith.constant 0 : index
    %c0_0 = arith.constant 0 : index
    %c0_1 = arith.constant 0 : index
    %2 = vector.load %arg4[%c0, %c0_0, %c0_1] : memref<1x8x16xf32, #tpu.memory_space<vmem>>, vector<1x8x16xf32>
    %3 = vector.shape_cast %2 : vector<1x8x16xf32> to vector<8x16xf32>
    %c0_2 = arith.constant 0 : index
    %c0_3 = arith.constant 0 : index
    %c0_4 = arith.constant 0 : index
    %4 = vector.load %arg6[%c0_2, %c0_3, %c0_4] : memref<1x8x3xf32, #tpu.memory_space<vmem>>, vector<1x8x3xf32>
    %5 = vector.shape_cast %4 : vector<1x8x3xf32> to vector<8x3xf32>
    %c0_5 = arith.constant 0 : index
    %c0_6 = arith.constant 0 : index
    %c0_7 = arith.constant 0 : index
    %6 = vector.load %arg7[%c0_5, %c0_6, %c0_7] : memref<1x8x4xf32, #tpu.memory_space<vmem>>, vector<1x8x4xf32>
    %7 = vector.shape_cast %6 : vector<1x8x4xf32> to vector<8x4xf32>
    %c0_8 = arith.constant 0 : index
    %c0_9 = arith.constant 0 : index
    %c0_10 = arith.constant 0 : index
    %8 = vector.load %arg3[%c0_8, %c0_9, %c0_10] : memref<1x1x8xf32, #tpu.memory_space<vmem>>, vector<1x1x8xf32>
    %9 = vector.shape_cast %8 : vector<1x1x8xf32> to vector<1x8xf32>
    %c0_i32 = arith.constant 0 : i32
    %10 = arith.cmpi eq, %arg1, %c0_i32 : i32
    %11 = arith.extui %10 : i1 to i32
    %c0_i32_11 = arith.constant 0 : i32
    %12 = arith.cmpi ne, %11, %c0_i32_11 : i32
    scf.if %12 {
      %c16_92 = arith.constant 16 : index
      %c0_93 = arith.constant 0 : index
      %358 = vector.load %arg8[%c16_92, %c0_93] : memref<113x64xf32, #tpu.memory_space<vmem>>, vector<16x64xf32>
      %cst_94 = arith.constant dense<0.000000e+00> : vector<8x64xf32>
      %359 = tpu.matmul %3, %358, %cst_94 {dimension_numbers = #tpu.dot_dimension_numbers<[1], [0], [0], [1], [0, 0, 1, 1], [], []>} : vector<8x16xf32>, vector<16x64xf32>, vector<8x64xf32> -> vector<8x64xf32>
      %c0_95 = arith.constant 0 : index
      %c0_96 = arith.constant 0 : index
      %360 = vector.load %arg9[%c0_95, %c0_96] : memref<4x64xf32, #tpu.memory_space<vmem>>, vector<1x64xf32>
      %361 = vector.broadcast %360 : vector<1x64xf32> to vector<8x64xf32>
      %362 = arith.addf %359, %361 : vector<8x64xf32>
      %c0_97 = arith.constant 0 : index
      %c0_98 = arith.constant 0 : index
      %363 = vector.load %arg15[%c0_97, %c0_98] : memref<8x64xf32, #tpu.memory_space<vmem>>, vector<8x64xf32>
      tpu.vector_store %arg15[%c0_97, %c0_98], %362 {strides = array<i32>} : memref<8x64xf32, #tpu.memory_space<vmem>>, vector<8x64xf32>,
    } else {
    }
    %c0_12 = arith.constant 0 : index
    %13 = arith.index_cast %1 : i32 to index
    %c0_13 = arith.constant 0 : index
    %14 = vector.load %arg4[%c0_12, %13, %c0_13] : memref<1x8x16xf32, #tpu.memory_space<vmem>>, vector<1x8x16xf32>
    %15 = vector.shape_cast %14 : vector<1x8x16xf32> to vector<8x16xf32>
    %c0_14 = arith.constant 0 : index
    %16 = arith.index_cast %1 : i32 to index
    %c0_15 = arith.constant 0 : index
    %17 = vector.load %arg6[%c0_14, %16, %c0_15] : memref<1x8x3xf32, #tpu.memory_space<vmem>>, vector<1x8x3xf32>
    %18 = vector.shape_cast %17 : vector<1x8x3xf32> to vector<8x3xf32>
    %c0_16 = arith.constant 0 : index
    %19 = arith.index_cast %1 : i32 to index
    %c0_17 = arith.constant 0 : index
    %20 = vector.load %arg7[%c0_16, %19, %c0_17] : memref<1x8x4xf32, #tpu.memory_space<vmem>>, vector<1x8x4xf32>
    %21 = vector.shape_cast %20 : vector<1x8x4xf32> to vector<8x4xf32>
    %c0_18 = arith.constant 0 : index
    %22 = arith.index_cast %1 : i32 to index
    %c0_19 = arith.constant 0 : index
    %23 = vector.load %arg2[%c0_18, %22, %c0_19] : memref<1x8x1xf32, #tpu.memory_space<vmem>>, vector<1x8x1xf32>
    %24 = vector.shape_cast %23 : vector<1x8x1xf32> to vector<8x1xf32>
    %25 = tpu.iota {dimensions = array<i32: 0>} : vector<8x8xi32>
    %26 = vector.broadcast %1 : i32 to vector<8x8xi32>
    %27 = arith.addi %26, %25 : vector<8x8xi32>
    %28 = tpu.iota {dimensions = array<i32: 1>} : vector<8x8xi32>
    %29 = arith.cmpi ne, %27, %28 : vector<8x8xi32>
    %30 = arith.extui %29 : vector<8x8xi1> to vector<8x8xi32>
    %31 = arith.sitofp %30 : vector<8x8xi32> to vector<8x8xf32>
    %32 = vector.broadcast %24 : vector<8x1xf32> to vector<8x8xf32>
    %33 = vector.broadcast %9 : vector<1x8xf32> to vector<8x8xf32>
    %34 = arith.mulf %32, %33 : vector<8x8xf32>
    %35 = arith.mulf %34, %31 : vector<8x8xf32>
    %36 = vector.shape_cast %35 : vector<8x8xf32> to vector<8x8x1xf32>
    %37 = vector.shape_cast %18 : vector<8x3xf32> to vector<8x1x3xf32>
    %38 = vector.shape_cast %5 : vector<8x3xf32> to vector<1x8x3xf32>
    %39 = vector.broadcast %37 : vector<8x1x3xf32> to vector<8x8x3xf32>
    %40 = vector.broadcast %38 : vector<1x8x3xf32> to vector<8x8x3xf32>
    %41 = arith.subf %39, %40 : vector<8x8x3xf32>
    %42 = arith.mulf %41, %41 : vector<8x8x3xf32>
    %cst = arith.constant dense<0.000000e+00> : vector<8x8xf32>
    %43 = vector.multi_reduction <add>, %42, %cst [2] : vector<8x8x3xf32> to vector<8x8xf32>
    %44 = vector.shape_cast %43 : vector<8x8xf32> to vector<8x8x1xf32>
    %45 = vector.shape_cast %21 : vector<8x4xf32> to vector<8x1x4xf32>
    %46 = vector.shape_cast %7 : vector<8x4xf32> to vector<1x8x4xf32>
    %47 = vector.broadcast %45 : vector<8x1x4xf32> to vector<8x8x4xf32>
    %48 = vector.broadcast %46 : vector<1x8x4xf32> to vector<8x8x4xf32>
    %49 = arith.mulf %47, %48 : vector<8x8x4xf32>
    %cst_20 = arith.constant dense<0.000000e+00> : vector<8x8xf32>
    %50 = vector.multi_reduction <add>, %49, %cst_20 [2] : vector<8x8x4xf32> to vector<8x8xf32>
    %51 = vector.shape_cast %50 : vector<8x8xf32> to vector<8x8x1xf32>
    %52 = math.absf %51 : vector<8x8x1xf32>
    %53 = arith.mulf %7, %7 : vector<8x4xf32>
    %cst_21 = arith.constant dense<0.000000e+00> : vector<8xf32>
    %54 = vector.multi_reduction <add>, %53, %cst_21 [1] : vector<8x4xf32> to vector<8xf32>
    %55 = vector.shape_cast %54 : vector<8xf32> to vector<8x1xf32>
    %cst_22 = arith.constant 1.000000e-24 : f32
    %56 = vector.broadcast %cst_22 : f32 to vector<8x1xf32>
    %57 = arith.maximumf %55, %56 : vector<8x1xf32>
    %58 = vector.extract_strided_slice %7 {offsets = [0, 0], sizes = [8, 1], strides = [1, 1]} : vector<8x4xf32> to vector<8x1xf32>
    %59 = vector.extract_strided_slice %7 {offsets = [0, 1], sizes = [8, 3], strides = [1, 1]} : vector<8x4xf32> to vector<8x3xf32>
    %cst_23 = arith.constant 0.000000e+00 : f32
    %60 = vector.broadcast %cst_23 : f32 to vector<8x3xf32>
    %61 = arith.subf %60, %59 : vector<8x3xf32>
    %62 = tpu.concatenate %58, %61 in 1 : vector<8x1xf32>, vector<8x3xf32> -> vector<8x4xf32>
    %63 = vector.broadcast %57 : vector<8x1xf32> to vector<8x4xf32>
    %64 = arith.divf %62, %63 : vector<8x4xf32>
    %65 = vector.shape_cast %64 : vector<8x4xf32> to vector<1x8x4xf32>
    %66 = vector.extract_strided_slice %65 {offsets = [0, 0, 0], sizes = [1, 8, 1], strides = [1, 1, 1]} : vector<1x8x4xf32> to vector<1x8x1xf32>
    %67 = vector.extract_strided_slice %65 {offsets = [0, 0, 1], sizes = [1, 8, 3], strides = [1, 1, 1]} : vector<1x8x4xf32> to vector<1x8x3xf32>
    %68 = vector.extract_strided_slice %67 {offsets = [0, 0, 0], sizes = [1, 8, 1], strides = [1, 1, 1]} : vector<1x8x3xf32> to vector<1x8x1xf32>
    %69 = vector.extract_strided_slice %67 {offsets = [0, 0, 1], sizes = [1, 8, 1], strides = [1, 1, 1]} : vector<1x8x3xf32> to vector<1x8x1xf32>
    %70 = vector.extract_strided_slice %67 {offsets = [0, 0, 2], sizes = [1, 8, 1], strides = [1, 1, 1]} : vector<1x8x3xf32> to vector<1x8x1xf32>
    %71 = vector.extract_strided_slice %41 {offsets = [0, 0, 0], sizes = [8, 8, 1], strides = [1, 1, 1]} : vector<8x8x3xf32> to vector<8x8x1xf32>
    %72 = vector.extract_strided_slice %41 {offsets = [0, 0, 1], sizes = [8, 8, 1], strides = [1, 1, 1]} : vector<8x8x3xf32> to vector<8x8x1xf32>
    %73 = vector.extract_strided_slice %41 {offsets = [0, 0, 2], sizes = [8, 8, 1], strides = [1, 1, 1]} : vector<8x8x3xf32> to vector<8x8x1xf32>
    %74 = vector.broadcast %69 : vector<1x8x1xf32> to vector<8x8x1xf32>
    %75 = arith.mulf %74, %73 : vector<8x8x1xf32>
    %76 = vector.broadcast %70 : vector<1x8x1xf32> to vector<8x8x1xf32>
    %77 = arith.mulf %76, %72 : vector<8x8x1xf32>
    %78 = arith.subf %75, %77 : vector<8x8x1xf32>
    %79 = vector.broadcast %70 : vector<1x8x1xf32> to vector<8x8x1xf32>
    %80 = arith.mulf %79, %71 : vector<8x8x1xf32>
    %81 = vector.broadcast %68 : vector<1x8x1xf32> to vector<8x8x1xf32>
    %82 = arith.mulf %81, %73 : vector<8x8x1xf32>
    %83 = arith.subf %80, %82 : vector<8x8x1xf32>
    %84 = vector.broadcast %68 : vector<1x8x1xf32> to vector<8x8x1xf32>
    %85 = arith.mulf %84, %72 : vector<8x8x1xf32>
    %86 = vector.broadcast %69 : vector<1x8x1xf32> to vector<8x8x1xf32>
    %87 = arith.mulf %86, %71 : vector<8x8x1xf32>
    %88 = arith.subf %85, %87 : vector<8x8x1xf32>
    %89 = tpu.concatenate %78, %83, %88 in 2 : vector<8x8x1xf32>, vector<8x8x1xf32>, vector<8x8x1xf32> -> vector<8x8x3xf32>
    %90 = vector.broadcast %66 : vector<1x8x1xf32> to vector<8x8x3xf32>
    %91 = arith.mulf %90, %41 : vector<8x8x3xf32>
    %92 = arith.addf %89, %91 : vector<8x8x3xf32>
    %93 = vector.extract_strided_slice %67 {offsets = [0, 0, 0], sizes = [1, 8, 1], strides = [1, 1, 1]} : vector<1x8x3xf32> to vector<1x8x1xf32>
    %94 = vector.extract_strided_slice %67 {offsets = [0, 0, 1], sizes = [1, 8, 1], strides = [1, 1, 1]} : vector<1x8x3xf32> to vector<1x8x1xf32>
    %95 = vector.extract_strided_slice %67 {offsets = [0, 0, 2], sizes = [1, 8, 1], strides = [1, 1, 1]} : vector<1x8x3xf32> to vector<1x8x1xf32>
    %96 = vector.extract_strided_slice %92 {offsets = [0, 0, 0], sizes = [8, 8, 1], strides = [1, 1, 1]} : vector<8x8x3xf32> to vector<8x8x1xf32>
    %97 = vector.extract_strided_slice %92 {offsets = [0, 0, 1], sizes = [8, 8, 1], strides = [1, 1, 1]} : vector<8x8x3xf32> to vector<8x8x1xf32>
    %98 = vector.extract_strided_slice %92 {offsets = [0, 0, 2], sizes = [8, 8, 1], strides = [1, 1, 1]} : vector<8x8x3xf32> to vector<8x8x1xf32>
    %99 = vector.broadcast %94 : vector<1x8x1xf32> to vector<8x8x1xf32>
    %100 = arith.mulf %99, %98 : vector<8x8x1xf32>
    %101 = vector.broadcast %95 : vector<1x8x1xf32> to vector<8x8x1xf32>
    %102 = arith.mulf %101, %97 : vector<8x8x1xf32>
    %103 = arith.subf %100, %102 : vector<8x8x1xf32>
    %104 = vector.broadcast %95 : vector<1x8x1xf32> to vector<8x8x1xf32>
    %105 = arith.mulf %104, %96 : vector<8x8x1xf32>
    %106 = vector.broadcast %93 : vector<1x8x1xf32> to vector<8x8x1xf32>
    %107 = arith.mulf %106, %98 : vector<8x8x1xf32>
    %108 = arith.subf %105, %107 : vector<8x8x1xf32>
    %109 = vector.broadcast %93 : vector<1x8x1xf32> to vector<8x8x1xf32>
    %110 = arith.mulf %109, %97 : vector<8x8x1xf32>
    %111 = vector.broadcast %94 : vector<1x8x1xf32> to vector<8x8x1xf32>
    %112 = arith.mulf %111, %96 : vector<8x8x1xf32>
    %113 = arith.subf %110, %112 : vector<8x8x1xf32>
    %114 = tpu.concatenate %103, %108, %113 in 2 : vector<8x8x1xf32>, vector<8x8x1xf32>, vector<8x8x1xf32> -> vector<8x8x3xf32>
    %cst_24 = arith.constant 2.000000e+00 : f32
    %115 = vector.broadcast %cst_24 : f32 to vector<8x8x3xf32>
    %116 = arith.mulf %115, %114 : vector<8x8x3xf32>
    %117 = arith.addf %41, %116 : vector<8x8x3xf32>
    %118 = vector.shape_cast %64 : vector<8x4xf32> to vector<1x8x4xf32>
    %119 = vector.shape_cast %21 : vector<8x4xf32> to vector<8x1x4xf32>
    %120 = vector.extract_strided_slice %118 {offsets = [0, 0, 0], sizes = [1, 8, 1], strides = [1, 1, 1]} : vector<1x8x4xf32> to vector<1x8x1xf32>
    %121 = vector.extract_strided_slice %118 {offsets = [0, 0, 1], sizes = [1, 8, 1], strides = [1, 1, 1]} : vector<1x8x4xf32> to vector<1x8x1xf32>
    %122 = vector.extract_strided_slice %118 {offsets = [0, 0, 2], sizes = [1, 8, 1], strides = [1, 1, 1]} : vector<1x8x4xf32> to vector<1x8x1xf32>
    %123 = vector.extract_strided_slice %118 {offsets = [0, 0, 3], sizes = [1, 8, 1], strides = [1, 1, 1]} : vector<1x8x4xf32> to vector<1x8x1xf32>
    %124 = vector.extract_strided_slice %119 {offsets = [0, 0, 0], sizes = [8, 1, 1], strides = [1, 1, 1]} : vector<8x1x4xf32> to vector<8x1x1xf32>
    %125 = vector.extract_strided_slice %119 {offsets = [0, 0, 1], sizes = [8, 1, 1], strides = [1, 1, 1]} : vector<8x1x4xf32> to vector<8x1x1xf32>
    %126 = vector.extract_strided_slice %119 {offsets = [0, 0, 2], sizes = [8, 1, 1], strides = [1, 1, 1]} : vector<8x1x4xf32> to vector<8x1x1xf32>
    %127 = vector.extract_strided_slice %119 {offsets = [0, 0, 3], sizes = [8, 1, 1], strides = [1, 1, 1]} : vector<8x1x4xf32> to vector<8x1x1xf32>
    %128 = vector.broadcast %120 : vector<1x8x1xf32> to vector<8x8x1xf32>
    %129 = vector.broadcast %124 : vector<8x1x1xf32> to vector<8x8x1xf32>
    %130 = arith.mulf %128, %129 : vector<8x8x1xf32>
    %131 = vector.broadcast %121 : vector<1x8x1xf32> to vector<8x8x1xf32>
    %132 = vector.broadcast %125 : vector<8x1x1xf32> to vector<8x8x1xf32>
    %133 = arith.mulf %131, %132 : vector<8x8x1xf32>
    %134 = arith.subf %130, %133 : vector<8x8x1xf32>
    %135 = vector.broadcast %122 : vector<1x8x1xf32> to vector<8x8x1xf32>
    %136 = vector.broadcast %126 : vector<8x1x1xf32> to vector<8x8x1xf32>
    %137 = arith.mulf %135, %136 : vector<8x8x1xf32>
    %138 = arith.subf %134, %137 : vector<8x8x1xf32>
    %139 = vector.broadcast %123 : vector<1x8x1xf32> to vector<8x8x1xf32>
    %140 = vector.broadcast %127 : vector<8x1x1xf32> to vector<8x8x1xf32>
    %141 = arith.mulf %139, %140 : vector<8x8x1xf32>
    %142 = arith.subf %138, %141 : vector<8x8x1xf32>
    %143 = vector.broadcast %120 : vector<1x8x1xf32> to vector<8x8x1xf32>
    %144 = vector.broadcast %125 : vector<8x1x1xf32> to vector<8x8x1xf32>
    %145 = arith.mulf %143, %144 : vector<8x8x1xf32>
    %146 = vector.broadcast %121 : vector<1x8x1xf32> to vector<8x8x1xf32>
    %147 = vector.broadcast %124 : vector<8x1x1xf32> to vector<8x8x1xf32>
    %148 = arith.mulf %146, %147 : vector<8x8x1xf32>
    %149 = arith.addf %145, %148 : vector<8x8x1xf32>
    %150 = vector.broadcast %122 : vector<1x8x1xf32> to vector<8x8x1xf32>
    %151 = vector.broadcast %127 : vector<8x1x1xf32> to vector<8x8x1xf32>
    %152 = arith.mulf %150, %151 : vector<8x8x1xf32>
    %153 = arith.addf %149, %152 : vector<8x8x1xf32>
    %154 = vector.broadcast %123 : vector<1x8x1xf32> to vector<8x8x1xf32>
    %155 = vector.broadcast %126 : vector<8x1x1xf32> to vector<8x8x1xf32>
    %156 = arith.mulf %154, %155 : vector<8x8x1xf32>
    %157 = arith.subf %153, %156 : vector<8x8x1xf32>
    %158 = vector.broadcast %120 : vector<1x8x1xf32> to vector<8x8x1xf32>
    %159 = vector.broadcast %126 : vector<8x1x1xf32> to vector<8x8x1xf32>
    %160 = arith.mulf %158, %159 : vector<8x8x1xf32>
    %161 = vector.broadcast %121 : vector<1x8x1xf32> to vector<8x8x1xf32>
    %162 = vector.broadcast %127 : vector<8x1x1xf32> to vector<8x8x1xf32>
    %163 = arith.mulf %161, %162 : vector<8x8x1xf32>
    %164 = arith.subf %160, %163 : vector<8x8x1xf32>
    %165 = vector.broadcast %122 : vector<1x8x1xf32> to vector<8x8x1xf32>
    %166 = vector.broadcast %124 : vector<8x1x1xf32> to vector<8x8x1xf32>
    %167 = arith.mulf %165, %166 : vector<8x8x1xf32>
    %168 = arith.addf %164, %167 : vector<8x8x1xf32>
    %169 = vector.broadcast %123 : vector<1x8x1xf32> to vector<8x8x1xf32>
    %170 = vector.broadcast %125 : vector<8x1x1xf32> to vector<8x8x1xf32>
    %171 = arith.mulf %169, %170 : vector<8x8x1xf32>
    %172 = arith.addf %168, %171 : vector<8x8x1xf32>
    %173 = vector.broadcast %120 : vector<1x8x1xf32> to vector<8x8x1xf32>
    %174 = vector.broadcast %127 : vector<8x1x1xf32> to vector<8x8x1xf32>
    %175 = arith.mulf %173, %174 : vector<8x8x1xf32>
    %176 = vector.broadcast %121 : vector<1x8x1xf32> to vector<8x8x1xf32>
    %177 = vector.broadcast %126 : vector<8x1x1xf32> to vector<8x8x1xf32>
    %178 = arith.mulf %176, %177 : vector<8x8x1xf32>
    %179 = arith.addf %175, %178 : vector<8x8x1xf32>
    %180 = vector.broadcast %122 : vector<1x8x1xf32> to vector<8x8x1xf32>
    %181 = vector.broadcast %125 : vector<8x1x1xf32> to vector<8x8x1xf32>
    %182 = arith.mulf %180, %181 : vector<8x8x1xf32>
    %183 = arith.subf %179, %182 : vector<8x8x1xf32>
    %184 = vector.broadcast %123 : vector<1x8x1xf32> to vector<8x8x1xf32>
    %185 = vector.broadcast %124 : vector<8x1x1xf32> to vector<8x8x1xf32>
    %186 = arith.mulf %184, %185 : vector<8x8x1xf32>
    %187 = arith.addf %183, %186 : vector<8x8x1xf32>
    %188 = tpu.concatenate %142, %157, %172, %187 in 2 : vector<8x8x1xf32>, vector<8x8x1xf32>, vector<8x8x1xf32>, vector<8x8x1xf32> -> vector<8x8x4xf32>
    %c0_25 = arith.constant 0 : index
    %c0_26 = arith.constant 0 : index
    %189 = vector.load %arg8[%c0_25, %c0_26] : memref<113x64xf32, #tpu.memory_space<vmem>>, vector<16x64xf32>
    %cst_27 = arith.constant dense<0.000000e+00> : vector<8x64xf32>
    %190 = tpu.matmul %15, %189, %cst_27 {dimension_numbers = #tpu.dot_dimension_numbers<[1], [0], [0], [1], [0, 0, 1, 1], [], []>} : vector<8x16xf32>, vector<16x64xf32>, vector<8x64xf32> -> vector<8x64xf32>
    %c0_28 = arith.constant 0 : index
    %c0_29 = arith.constant 0 : index
    %c0_30 = arith.constant 0 : index
    %c0_31 = arith.constant 0 : index
    %191 = vector.load %arg5[%c0_28, %c0_29, %c0_30, %c0_31] : memref<1x8x8x8xf32, #tpu.memory_space<vmem>>, vector<1x8x8x8xf32>
    %192 = vector.shape_cast %191 : vector<1x8x8x8xf32> to vector<8x8x8xf32>
    %193 = vector.shape_cast %192 : vector<8x8x8xf32> to vector<64x8xf32>
    %c32 = arith.constant 32 : index
    %c0_32 = arith.constant 0 : index
    %194 = vector.load %arg8[%c32, %c0_32] : memref<113x64xf32, #tpu.memory_space<vmem>>, vector<8x64xf32>
    %cst_33 = arith.constant dense<0.000000e+00> : vector<64x64xf32>
    %195 = tpu.matmul %193, %194, %cst_33 {dimension_numbers = #tpu.dot_dimension_numbers<[1], [0], [0], [1], [0, 0, 1, 1], [], []>} : vector<64x8xf32>, vector<8x64xf32>, vector<64x64xf32> -> vector<64x64xf32>
    %196 = vector.shape_cast %117 : vector<8x8x3xf32> to vector<64x3xf32>
    %c40 = arith.constant 40 : index
    %c0_34 = arith.constant 0 : index
    %197 = vector.load %arg8[%c40, %c0_34] : memref<113x64xf32, #tpu.memory_space<vmem>>, vector<3x64xf32>
    %cst_35 = arith.constant dense<0.000000e+00> : vector<64x64xf32>
    %198 = tpu.matmul %196, %197, %cst_35 {dimension_numbers = #tpu.dot_dimension_numbers<[1], [0], [0], [1], [0, 0, 1, 1], [], []>} : vector<64x3xf32>, vector<3x64xf32>, vector<64x64xf32> -> vector<64x64xf32>
    %199 = vector.shape_cast %188 : vector<8x8x4xf32> to vector<64x4xf32>
    %c43 = arith.constant 43 : index
    %c0_36 = arith.constant 0 : index
    %200 = vector.load %arg8[%c43, %c0_36] : memref<113x64xf32, #tpu.memory_space<vmem>>, vector<4x64xf32>
    %cst_37 = arith.constant dense<0.000000e+00> : vector<64x64xf32>
    %201 = tpu.matmul %199, %200, %cst_37 {dimension_numbers = #tpu.dot_dimension_numbers<[1], [0], [0], [1], [0, 0, 1, 1], [], []>} : vector<64x4xf32>, vector<4x64xf32>, vector<64x64xf32> -> vector<64x64xf32>
    %202 = vector.shape_cast %44 : vector<8x8x1xf32> to vector<64x1xf32>
    %c47 = arith.constant 47 : index
    %c0_38 = arith.constant 0 : index
    %203 = vector.load %arg8[%c47, %c0_38] : memref<113x64xf32, #tpu.memory_space<vmem>>, vector<1x64xf32>
    %204 = vector.broadcast %202 : vector<64x1xf32> to vector<64x64xf32>
    %205 = vector.broadcast %203 : vector<1x64xf32> to vector<64x64xf32>
    %206 = arith.mulf %204, %205 : vector<64x64xf32>
    %207 = vector.shape_cast %52 : vector<8x8x1xf32> to vector<64x1xf32>
    %c48 = arith.constant 48 : index
    %c0_39 = arith.constant 0 : index
    %208 = vector.load %arg8[%c48, %c0_39] : memref<113x64xf32, #tpu.memory_space<vmem>>, vector<1x64xf32>
    %209 = vector.broadcast %207 : vector<64x1xf32> to vector<64x64xf32>
    %210 = vector.broadcast %208 : vector<1x64xf32> to vector<64x64xf32>
    %211 = arith.mulf %209, %210 : vector<64x64xf32>
    %212 = arith.addf %195, %198 : vector<64x64xf32>
    %213 = arith.addf %212, %201 : vector<64x64xf32>
    %214 = arith.addf %213, %206 : vector<64x64xf32>
    %215 = arith.addf %214, %211 : vector<64x64xf32>
    %216 = vector.shape_cast %215 : vector<64x64xf32> to vector<8x8x64xf32>
    %217 = vector.shape_cast %190 : vector<8x64xf32> to vector<8x1x64xf32>
    %c0_40 = arith.constant 0 : index
    %c0_41 = arith.constant 0 : index
    %218 = vector.load %arg15[%c0_40, %c0_41] : memref<8x64xf32, #tpu.memory_space<vmem>>, vector<8x64xf32>
    %219 = vector.shape_cast %218 : vector<8x64xf32> to vector<1x8x64xf32>
    %220 = vector.broadcast %217 : vector<8x1x64xf32> to vector<8x8x64xf32>
    %221 = vector.broadcast %219 : vector<1x8x64xf32> to vector<8x8x64xf32>
    %222 = arith.addf %220, %221 : vector<8x8x64xf32>
    %223 = arith.addf %222, %216 : vector<8x8x64xf32>
    %cst_42 = arith.constant 0.000000e+00 : f32
    %224 = vector.broadcast %cst_42 : f32 to vector<8x8x64xf32>
    %225 = arith.maximumf %223, %224 : vector<8x8x64xf32>
    %226 = vector.shape_cast %225 : vector<8x8x64xf32> to vector<64x64xf32>
    %c0_43 = arith.constant 0 : index
    %c0_44 = arith.constant 0 : index
    %227 = vector.load %arg10[%c0_43, %c0_44] : memref<64x39xf32, #tpu.memory_space<vmem>>, vector<64x16xf32>
    %cst_45 = arith.constant dense<0.000000e+00> : vector<64x16xf32>
    %228 = tpu.matmul %226, %227, %cst_45 {dimension_numbers = #tpu.dot_dimension_numbers<[1], [0], [0], [1], [0, 0, 1, 1], [], []>} : vector<64x64xf32>, vector<64x16xf32>, vector<64x16xf32> -> vector<64x16xf32>
    %c0_46 = arith.constant 0 : index
    %c0_47 = arith.constant 0 : index
    %229 = vector.load %arg11[%c0_46, %c0_47] : memref<1x39xf32, #tpu.memory_space<vmem>>, vector<1x16xf32>
    %230 = vector.broadcast %229 : vector<1x16xf32> to vector<64x16xf32>
    %231 = arith.addf %228, %230 : vector<64x16xf32>
    %232 = vector.shape_cast %231 : vector<64x16xf32> to vector<8x8x16xf32>
    %233 = vector.broadcast %36 : vector<8x8x1xf32> to vector<8x8x16xf32>
    %234 = arith.mulf %232, %233 : vector<8x8x16xf32>
    %cst_48 = arith.constant dense<0.000000e+00> : vector<8x16xf32>
    %235 = vector.multi_reduction <add>, %234, %cst_48 [1] : vector<8x8x16xf32> to vector<8x16xf32>
    %c49 = arith.constant 49 : index
    %c0_49 = arith.constant 0 : index
    %236 = vector.load %arg8[%c49, %c0_49] : memref<113x64xf32, #tpu.memory_space<vmem>>, vector<16x64xf32>
    %cst_50 = arith.constant dense<0.000000e+00> : vector<8x64xf32>
    %237 = tpu.matmul %15, %236, %cst_50 {dimension_numbers = #tpu.dot_dimension_numbers<[1], [0], [0], [1], [0, 0, 1, 1], [], []>} : vector<8x16xf32>, vector<16x64xf32>, vector<8x64xf32> -> vector<8x64xf32>
    %c65 = arith.constant 65 : index
    %c0_51 = arith.constant 0 : index
    %238 = vector.load %arg8[%c65, %c0_51] : memref<113x64xf32, #tpu.memory_space<vmem>>, vector<16x64xf32>
    %cst_52 = arith.constant dense<0.000000e+00> : vector<8x64xf32>
    %239 = tpu.matmul %235, %238, %cst_52 {dimension_numbers = #tpu.dot_dimension_numbers<[1], [0], [0], [1], [0, 0, 1, 1], [], []>} : vector<8x16xf32>, vector<16x64xf32>, vector<8x64xf32> -> vector<8x64xf32>
    %240 = arith.addf %237, %239 : vector<8x64xf32>
    %c1 = arith.constant 1 : index
    %c0_53 = arith.constant 0 : index
    %241 = vector.load %arg9[%c1, %c0_53] : memref<4x64xf32, #tpu.memory_space<vmem>>, vector<1x64xf32>
    %242 = vector.broadcast %241 : vector<1x64xf32> to vector<8x64xf32>
    %243 = arith.addf %240, %242 : vector<8x64xf32>
    %cst_54 = arith.constant 0.000000e+00 : f32
    %244 = vector.broadcast %cst_54 : f32 to vector<8x64xf32>
    %245 = arith.maximumf %243, %244 : vector<8x64xf32>
    %c0_55 = arith.constant 0 : index
    %c16 = arith.constant 16 : index
    %246 = vector.load %arg10[%c0_55, %c16] : memref<64x39xf32, #tpu.memory_space<vmem>>, vector<64x16xf32>
    %cst_56 = arith.constant dense<0.000000e+00> : vector<8x16xf32>
    %247 = tpu.matmul %245, %246, %cst_56 {dimension_numbers = #tpu.dot_dimension_numbers<[1], [0], [0], [1], [0, 0, 1, 1], [], []>} : vector<8x64xf32>, vector<64x16xf32>, vector<8x16xf32> -> vector<8x16xf32>
    %c0_57 = arith.constant 0 : index
    %c16_58 = arith.constant 16 : index
    %248 = vector.load %arg11[%c0_57, %c16_58] : memref<1x39xf32, #tpu.memory_space<vmem>>, vector<1x16xf32>
    %249 = vector.broadcast %248 : vector<1x16xf32> to vector<8x16xf32>
    %250 = arith.addf %247, %249 : vector<8x16xf32>
    %251 = vector.shape_cast %234 : vector<8x8x16xf32> to vector<64x16xf32>
    %c81 = arith.constant 81 : index
    %c0_59 = arith.constant 0 : index
    %252 = vector.load %arg8[%c81, %c0_59] : memref<113x64xf32, #tpu.memory_space<vmem>>, vector<16x64xf32>
    %cst_60 = arith.constant dense<0.000000e+00> : vector<64x64xf32>
    %253 = tpu.matmul %251, %252, %cst_60 {dimension_numbers = #tpu.dot_dimension_numbers<[1], [0], [0], [1], [0, 0, 1, 1], [], []>} : vector<64x16xf32>, vector<16x64xf32>, vector<64x64xf32> -> vector<64x64xf32>
    %c2 = arith.constant 2 : index
    %c0_61 = arith.constant 0 : index
    %254 = vector.load %arg9[%c2, %c0_61] : memref<4x64xf32, #tpu.memory_space<vmem>>, vector<1x64xf32>
    %255 = vector.broadcast %254 : vector<1x64xf32> to vector<64x64xf32>
    %256 = arith.addf %253, %255 : vector<64x64xf32>
    %cst_62 = arith.constant 0.000000e+00 : f32
    %257 = vector.broadcast %cst_62 : f32 to vector<64x64xf32>
    %258 = arith.maximumf %256, %257 : vector<64x64xf32>
    %c0_63 = arith.constant 0 : index
    %c32_64 = arith.constant 32 : index
    %259 = vector.load %arg10[%c0_63, %c32_64] : memref<64x39xf32, #tpu.memory_space<vmem>>, vector<64x3xf32>
    %cst_65 = arith.constant dense<0.000000e+00> : vector<64x3xf32>
    %260 = tpu.matmul %258, %259, %cst_65 {dimension_numbers = #tpu.dot_dimension_numbers<[1], [0], [0], [1], [0, 0, 1, 1], [], []>} : vector<64x64xf32>, vector<64x3xf32>, vector<64x3xf32> -> vector<64x3xf32>
    %c0_66 = arith.constant 0 : index
    %c32_67 = arith.constant 32 : index
    %261 = vector.load %arg11[%c0_66, %c32_67] : memref<1x39xf32, #tpu.memory_space<vmem>>, vector<1x3xf32>
    %262 = vector.broadcast %261 : vector<1x3xf32> to vector<64x3xf32>
    %263 = arith.addf %260, %262 : vector<64x3xf32>
    %264 = vector.shape_cast %263 : vector<64x3xf32> to vector<8x8x3xf32>
    %265 = vector.broadcast %36 : vector<8x8x1xf32> to vector<8x8x3xf32>
    %266 = arith.mulf %264, %265 : vector<8x8x3xf32>
    %c97 = arith.constant 97 : index
    %c0_68 = arith.constant 0 : index
    %267 = vector.load %arg8[%c97, %c0_68] : memref<113x64xf32, #tpu.memory_space<vmem>>, vector<16x64xf32>
    %cst_69 = arith.constant dense<0.000000e+00> : vector<8x64xf32>
    %268 = tpu.matmul %235, %267, %cst_69 {dimension_numbers = #tpu.dot_dimension_numbers<[1], [0], [0], [1], [0, 0, 1, 1], [], []>} : vector<8x16xf32>, vector<16x64xf32>, vector<8x64xf32> -> vector<8x64xf32>
    %c3 = arith.constant 3 : index
    %c0_70 = arith.constant 0 : index
    %269 = vector.load %arg9[%c3, %c0_70] : memref<4x64xf32, #tpu.memory_space<vmem>>, vector<1x64xf32>
    %270 = vector.broadcast %269 : vector<1x64xf32> to vector<8x64xf32>
    %271 = arith.addf %268, %270 : vector<8x64xf32>
    %cst_71 = arith.constant 0.000000e+00 : f32
    %272 = vector.broadcast %cst_71 : f32 to vector<8x64xf32>
    %273 = arith.maximumf %271, %272 : vector<8x64xf32>
    %c0_72 = arith.constant 0 : index
    %c35 = arith.constant 35 : index
    %274 = vector.load %arg10[%c0_72, %c35] : memref<64x39xf32, #tpu.memory_space<vmem>>, vector<64x4xf32>
    %cst_73 = arith.constant dense<0.000000e+00> : vector<8x4xf32>
    %275 = tpu.matmul %273, %274, %cst_73 {dimension_numbers = #tpu.dot_dimension_numbers<[1], [0], [0], [1], [0, 0, 1, 1], [], []>} : vector<8x64xf32>, vector<64x4xf32>, vector<8x4xf32> -> vector<8x4xf32>
    %c0_74 = arith.constant 0 : index
    %c35_75 = arith.constant 35 : index
    %276 = vector.load %arg11[%c0_74, %c35_75] : memref<1x39xf32, #tpu.memory_space<vmem>>, vector<1x4xf32>
    %277 = vector.broadcast %276 : vector<1x4xf32> to vector<8x4xf32>
    %278 = arith.addf %275, %277 : vector<8x4xf32>
    %279 = tpu.iota {dimensions = array<i32: 1>} : vector<1x4xi32>
    %c0_i32_76 = arith.constant 0 : i32
    %280 = vector.broadcast %c0_i32_76 : i32 to vector<1x4xi32>
    %281 = arith.cmpi eq, %279, %280 : vector<1x4xi32>
    %282 = arith.extui %281 : vector<1x4xi1> to vector<1x4xi32>
    %283 = arith.sitofp %282 : vector<1x4xi32> to vector<1x4xf32>
    %cst_77 = arith.constant 5.000000e-01 : f32
    %284 = vector.broadcast %cst_77 : f32 to vector<8x1xf32>
    %285 = arith.cmpf ogt, %24, %284 : vector<8x1xf32>
    %286 = vector.shape_cast %285 : vector<8x1xi1> to vector<8x1xi1>
    %287 = vector.broadcast %286 : vector<8x1xi1> to vector<8x4xi1>
    %288 = vector.shape_cast %283 : vector<1x4xf32> to vector<1x4xf32>
    %289 = vector.broadcast %288 : vector<1x4xf32> to vector<8x4xf32>
    %290 = arith.select %287, %278, %289 : vector<8x4xi1>, vector<8x4xf32>
    %291 = arith.mulf %290, %290 : vector<8x4xf32>
    %cst_78 = arith.constant dense<0.000000e+00> : vector<8xf32>
    %292 = vector.multi_reduction <add>, %291, %cst_78 [1] : vector<8x4xf32> to vector<8xf32>
    %293 = vector.shape_cast %292 : vector<8xf32> to vector<8x1xf32>
    %cst_79 = arith.constant 1.000000e-24 : f32
    %294 = vector.broadcast %cst_79 : f32 to vector<8x1xf32>
    %295 = arith.maximumf %293, %294 : vector<8x1xf32>
    %296 = math.rsqrt %295 : vector<8x1xf32>
    %297 = vector.broadcast %296 : vector<8x1xf32> to vector<8x4xf32>
    %298 = arith.mulf %290, %297 : vector<8x4xf32>
    %299 = vector.extract_strided_slice %21 {offsets = [0, 0], sizes = [8, 1], strides = [1, 1]} : vector<8x4xf32> to vector<8x1xf32>
    %300 = vector.extract_strided_slice %21 {offsets = [0, 1], sizes = [8, 1], strides = [1, 1]} : vector<8x4xf32> to vector<8x1xf32>
    %301 = vector.extract_strided_slice %21 {offsets = [0, 2], sizes = [8, 1], strides = [1, 1]} : vector<8x4xf32> to vector<8x1xf32>
    %302 = vector.extract_strided_slice %21 {offsets = [0, 3], sizes = [8, 1], strides = [1, 1]} : vector<8x4xf32> to vector<8x1xf32>
    %303 = vector.extract_strided_slice %298 {offsets = [0, 0], sizes = [8, 1], strides = [1, 1]} : vector<8x4xf32> to vector<8x1xf32>
    %304 = vector.extract_strided_slice %298 {offsets = [0, 1], sizes = [8, 1], strides = [1, 1]} : vector<8x4xf32> to vector<8x1xf32>
    %305 = vector.extract_strided_slice %298 {offsets = [0, 2], sizes = [8, 1], strides = [1, 1]} : vector<8x4xf32> to vector<8x1xf32>
    %306 = vector.extract_strided_slice %298 {offsets = [0, 3], sizes = [8, 1], strides = [1, 1]} : vector<8x4xf32> to vector<8x1xf32>
    %307 = arith.mulf %299, %303 : vector<8x1xf32>
    %308 = arith.mulf %300, %304 : vector<8x1xf32>
    %309 = arith.subf %307, %308 : vector<8x1xf32>
    %310 = arith.mulf %301, %305 : vector<8x1xf32>
    %311 = arith.subf %309, %310 : vector<8x1xf32>
    %312 = arith.mulf %302, %306 : vector<8x1xf32>
    %313 = arith.subf %311, %312 : vector<8x1xf32>
    %314 = arith.mulf %299, %304 : vector<8x1xf32>
    %315 = arith.mulf %300, %303 : vector<8x1xf32>
    %316 = arith.addf %314, %315 : vector<8x1xf32>
    %317 = arith.mulf %301, %306 : vector<8x1xf32>
    %318 = arith.addf %316, %317 : vector<8x1xf32>
    %319 = arith.mulf %302, %305 : vector<8x1xf32>
    %320 = arith.subf %318, %319 : vector<8x1xf32>
    %321 = arith.mulf %299, %305 : vector<8x1xf32>
    %322 = arith.mulf %300, %306 : vector<8x1xf32>
    %323 = arith.subf %321, %322 : vector<8x1xf32>
    %324 = arith.mulf %301, %303 : vector<8x1xf32>
    %325 = arith.addf %323, %324 : vector<8x1xf32>
    %326 = arith.mulf %302, %304 : vector<8x1xf32>
    %327 = arith.addf %325, %326 : vector<8x1xf32>
    %328 = arith.mulf %299, %306 : vector<8x1xf32>
    %329 = arith.mulf %300, %305 : vector<8x1xf32>
    %330 = arith.addf %328, %329 : vector<8x1xf32>
    %331 = arith.mulf %301, %304 : vector<8x1xf32>
    %332 = arith.subf %330, %331 : vector<8x1xf32>
    %333 = arith.mulf %302, %303 : vector<8x1xf32>
    %334 = arith.addf %332, %333 : vector<8x1xf32>
    %335 = tpu.concatenate %313, %320, %327, %334 in 1 : vector<8x1xf32>, vector<8x1xf32>, vector<8x1xf32>, vector<8x1xf32> -> vector<8x4xf32>
    %336 = vector.shape_cast %285 : vector<8x1xi1> to vector<8x1xi1>
    %337 = vector.broadcast %336 : vector<8x1xi1> to vector<8x4xi1>
    %338 = vector.shape_cast %283 : vector<1x4xf32> to vector<1x4xf32>
    %339 = vector.broadcast %338 : vector<1x4xf32> to vector<8x4xf32>
    %340 = arith.select %337, %335, %339 : vector<8x4xi1>, vector<8x4xf32>
    %341 = arith.mulf %340, %340 : vector<8x4xf32>
    %cst_80 = arith.constant dense<0.000000e+00> : vector<8xf32>
    %342 = vector.multi_reduction <add>, %341, %cst_80 [1] : vector<8x4xf32> to vector<8xf32>
    %343 = vector.shape_cast %342 : vector<8xf32> to vector<8x1xf32>
    %cst_81 = arith.constant 1.000000e-24 : f32
    %344 = vector.broadcast %cst_81 : f32 to vector<8x1xf32>
    %345 = arith.maximumf %343, %344 : vector<8x1xf32>
    %346 = math.rsqrt %345 : vector<8x1xf32>
    %347 = vector.broadcast %346 : vector<8x1xf32> to vector<8x4xf32>
    %348 = arith.mulf %340, %347 : vector<8x4xf32>
    %c0_82 = arith.constant 0 : index
    %c0_83 = arith.constant 0 : index
    %c0_84 = arith.constant 0 : index
    %349 = vector.load %arg12[%c0_82, %c0_83, %c0_84] : memref<1x8x16xf32, #tpu.memory_space<vmem>>, vector<1x8x16xf32>
    %350 = vector.shape_cast %349 : vector<1x8x16xf32> to vector<8x16xf32>
    %351 = vector.shape_cast %250 : vector<8x16xf32> to vector<1x8x16xf32>
    tpu.vector_store %arg12[%c0_82, %c0_83, %c0_84], %351 {strides = array<i32>} : memref<1x8x16xf32, #tpu.memory_space<vmem>>, vector<1x8x16xf32>,
    %c0_85 = arith.constant 0 : index
    %c0_86 = arith.constant 0 : index
    %c0_87 = arith.constant 0 : index
    %352 = vector.load %arg13[%c0_85, %c0_86, %c0_87] : memref<1x8x4xf32, #tpu.memory_space<vmem>>, vector<1x8x4xf32>
    %353 = vector.shape_cast %352 : vector<1x8x4xf32> to vector<8x4xf32>
    %354 = vector.shape_cast %348 : vector<8x4xf32> to vector<1x8x4xf32>
    tpu.vector_store %arg13[%c0_85, %c0_86, %c0_87], %354 {strides = array<i32>} : memref<1x8x4xf32, #tpu.memory_space<vmem>>, vector<1x8x4xf32>,
    %c0_88 = arith.constant 0 : index
    %c0_89 = arith.constant 0 : index
    %c0_90 = arith.constant 0 : index
    %c0_91 = arith.constant 0 : index
    %355 = vector.load %arg14[%c0_88, %c0_89, %c0_90, %c0_91] : memref<1x8x8x3xf32, #tpu.memory_space<vmem>>, vector<1x8x8x3xf32>
    %356 = vector.shape_cast %355 : vector<1x8x8x3xf32> to vector<8x8x3xf32>
    %357 = vector.shape_cast %266 : vector<8x8x3xf32> to vector<1x8x8x3xf32>
    tpu.vector_store %arg14[%c0_88, %c0_89, %c0_90, %c0_91], %357 {strides = array<i32>} : memref<1x8x8x3xf32, #tpu.memory_space<vmem>>, vector<1x8x8x3xf32>,
    return
  }
  func.func @transform_0(%arg0: i32, %arg1: i32) -> (i32, i32, i32) {
    %c0_i32 = arith.constant 0 : i32
    %c0_i32_0 = arith.constant 0 : i32
    %c0_i32_1 = arith.constant 0 : i32
    return %arg0, %c0_i32, %c0_i32_0 : i32, i32, i32
  }
  func.func @transform_1(%arg0: i32, %arg1: i32) -> (i32, i32, i32) {
    %c0_i32 = arith.constant 0 : i32
    %c0_i32_0 = arith.constant 0 : i32
    %c0_i32_1 = arith.constant 0 : i32
    return %arg0, %c0_i32, %c0_i32_0 : i32, i32, i32
  }
  func.func @transform_2(%arg0: i32, %arg1: i32) -> (i32, i32, i32) {
    %c0_i32 = arith.constant 0 : i32
    %c0_i32_0 = arith.constant 0 : i32
    %c0_i32_1 = arith.constant 0 : i32
    return %arg0, %c0_i32, %c0_i32_0 : i32, i32, i32
  }
  func.func @transform_3(%arg0: i32, %arg1: i32) -> (i32, i32, i32, i32) {
    %c0_i32 = arith.constant 0 : i32
    %c0_i32_0 = arith.constant 0 : i32
    %c0_i32_1 = arith.constant 0 : i32
    return %arg0, %arg1, %c0_i32, %c0_i32_0 : i32, i32, i32, i32
  }
  func.func @transform_4(%arg0: i32, %arg1: i32) -> (i32, i32, i32) {
    %c0_i32 = arith.constant 0 : i32
    %c0_i32_0 = arith.constant 0 : i32
    %c0_i32_1 = arith.constant 0 : i32
    return %arg0, %c0_i32, %c0_i32_0 : i32, i32, i32
  }
  func.func @transform_5(%arg0: i32, %arg1: i32) -> (i32, i32, i32) {
    %c0_i32 = arith.constant 0 : i32
    %c0_i32_0 = arith.constant 0 : i32
    %c0_i32_1 = arith.constant 0 : i32
    return %arg0, %c0_i32, %c0_i32_0 : i32, i32, i32
  }
  func.func @transform_6(%arg0: i32, %arg1: i32) -> (i32, i32) {
    %c0_i32 = arith.constant 0 : i32
    %c0_i32_0 = arith.constant 0 : i32
    %c0_i32_1 = arith.constant 0 : i32
    return %c0_i32, %c0_i32_0 : i32, i32
  }
  func.func @transform_7(%arg0: i32, %arg1: i32) -> (i32, i32) {
    %c0_i32 = arith.constant 0 : i32
    %c0_i32_0 = arith.constant 0 : i32
    %c0_i32_1 = arith.constant 0 : i32
    return %c0_i32, %c0_i32_0 : i32, i32
  }
  func.func @transform_8(%arg0: i32, %arg1: i32) -> (i32, i32) {
    %c0_i32 = arith.constant 0 : i32
    %c0_i32_0 = arith.constant 0 : i32
    %c0_i32_1 = arith.constant 0 : i32
    return %c0_i32, %c0_i32_0 : i32, i32
  }
  func.func @transform_9(%arg0: i32, %arg1: i32) -> (i32, i32) {
    %c0_i32 = arith.constant 0 : i32
    %c0_i32_0 = arith.constant 0 : i32
    %c0_i32_1 = arith.constant 0 : i32
    return %c0_i32, %c0_i32_0 : i32, i32
  }
  func.func @transform_10(%arg0: i32, %arg1: i32) -> (i32, i32, i32) {
    %c0_i32 = arith.constant 0 : i32
    %c0_i32_0 = arith.constant 0 : i32
    return %arg0, %arg1, %c0_i32 : i32, i32, i32
  }
  func.func @transform_11(%arg0: i32, %arg1: i32) -> (i32, i32, i32) {
    %c0_i32 = arith.constant 0 : i32
    %c0_i32_0 = arith.constant 0 : i32
    return %arg0, %arg1, %c0_i32 : i32, i32, i32
  }
  func.func @transform_12(%arg0: i32, %arg1: i32) -> (i32, i32, i32, i32) {
    %c0_i32 = arith.constant 0 : i32
    %c0_i32_0 = arith.constant 0 : i32
    %c0_i32_1 = arith.constant 0 : i32
    return %arg0, %arg1, %c0_i32, %c0_i32_0 : i32, i32, i32, i32
  }
}

</mosaic_0001>

<llo_original>
// kernel: egnn_pallas.3
$region0: #{egnn_pallas.3}
  #allocation0 [shape = 'u32[]', space=smem, size = 0x4, offset = 0x4, fixed_abs, tag = 'smem constant byte address 0x4 - core index']
  #allocation1 [shape = 'u32[144,128]{1,0:T(1,128)}', space=vmem, size = 0x12000, scoped, tag = 'internal scratch']
  %s0 = inlined_call_operand.vmem [shape: f32[2,1,8], index: 0, kind: input, shape index: {}]
  %s1 = inlined_call_operand.vmem [shape: f32[2,8,3], index: 1, kind: input, shape index: {}]
  %s2 = inlined_call_operand.vmem [shape: f32[2,8,4], index: 2, kind: input, shape index: {}]
  %s3 = inlined_call_operand.vmem [shape: f32[2,8,8,3], index: 3, kind: input, shape index: {}]
  %s4 = inlined_call_operand.vmem [shape: f32[2,8,3], index: 4, kind: output, shape index: {}]
  %s5 = sld [smem:[#allocation0]]
  $region49: #{egnn_pallas.3} parent=0
    _
  %s7 = ssub.s32 1, %s5
  %s8 = scalar_select 0, %s7, %s5
  loop: start=0, step=1, limit=4
  $region2: #{egnn_pallas.3} parent=0 // loop_pre_header
    _
  $region3: #{egnn_pallas.3} parent=0 // loop_header
    %s10 = sphi 0, %s14
    %p11 = scmp.ge.s32.totalorder %s10, 4
    %s20 = sphi 0, %s22
    %s23 = sphi 0, %s20
    %s24 = sphi 0, %s23
    %s40 = sphi 0, %s24
    %s46 = sphi 0, %s48
    %s49 = sphi 0, %s46
    %s50 = sphi 0, %s49
    %s66 = sphi 0, %s50
    %s72 = sphi 0, %s74
    %s75 = sphi 0, %s72
    %s76 = sphi 0, %s75
    %s92 = sphi 0, %s76
    %s98 = sphi 0, %s100
    %s101 = sphi 0, %s98
    %s102 = sphi 0, %s101
    %s118 = sphi 0, %s102
    %s124 = sphi 0, %s126
    %s127 = sphi 0, %s124
    %s128 = sphi 0, %s127
    %s144 = sphi 0, %s128
  $region4: #{egnn_pallas.3} parent=0 // loop_header_branch
    %13 = sbr.rel (%p11) target = $region8
  $region5: #{egnn_pallas.3} parent=0 // loop_body
    %s15 = ssub.s32 %s10, 1
    %s16 = ssub.s32 %s10, 2
    %s17 = sadd.s32 %s10, 1
    %s18 = ssub.s32 %s10, %s17
    %p19 = scmp.eq.s32.totalorder %s18, 0
    %s21 = sadd.s32 %s20, 1
    %s22 = scalar_select %p19, %s20, %s21
    %p25 = pneg %p19
    %p26 = scmp.eq.s32.totalorder %s10, 1
    %p27 = por %p25, %p26
    %p28 = scmp.ne.s32.totalorder %s20, %s23
    %p29 = scmp.eq.s32.totalorder %s10, 0
    %p30 = por %p28, %p29
    %p31 = scmp.ne.s32.totalorder %s20, %s23
    %p32 = scmp.eq.s32.totalorder %s15, 1
    %p33 = por %p31, %p32
    %p34 = scmp.ne.s32.totalorder %s23, %s24
    %p35 = scmp.eq.s32.totalorder %s15, 0
    %p36 = por %p34, %p35
    %p37 = scmp.ne.s32.totalorder %s23, %s24
    %p38 = scmp.eq.s32.totalorder %s16, 1
    %p39 = por %p37, %p38
    %p41 = scmp.ne.s32.totalorder %s24, %s40
    %p42 = scmp.eq.s32.totalorder %s16, 0
    %p43 = por %p41, %p42
    %s44 = ssub.s32 %s10, %s17
    %p45 = scmp.eq.s32.totalorder %s44, 0
    %s47 = sadd.s32 %s46, 1
    %s48 = scalar_select %p45, %s46, %s47
    %p51 = pneg %p45
    %p52 = scmp.eq.s32.totalorder %s10, 1
    %p53 = por %p51, %p52
    %p54 = scmp.ne.s32.totalorder %s46, %s49
    %p55 = scmp.eq.s32.totalorder %s10, 0
    %p56 = por %p54, %p55
    %p57 = scmp.ne.s32.totalorder %s46, %s49
    %p58 = scmp.eq.s32.totalorder %s15, 1
    %p59 = por %p57, %p58
    %p60 = scmp.ne.s32.totalorder %s49, %s50
    %p61 = scmp.eq.s32.totalorder %s15, 0
    %p62 = por %p60, %p61
    %p63 = scmp.ne.s32.totalorder %s49, %s50
    %p64 = scmp.eq.s32.totalorder %s16, 1
    %p65 = por %p63, %p64
    %p67 = scmp.ne.s32.totalorder %s50, %s66
    %p68 = scmp.eq.s32.totalorder %s16, 0
    %p69 = por %p67, %p68
    %s70 = ssub.s32 %s10, %s17
    %p71 = scmp.eq.s32.totalorder %s70, 0
    %s73 = sadd.s32 %s72, 1
    %s74 = scalar_select %p71, %s72, %s73
    %p77 = pneg %p71
    %p78 = scmp.eq.s32.totalorder %s10, 1
    %p79 = por %p77, %p78
    %p80 = scmp.ne.s32.totalorder %s72, %s75
    %p81 = scmp.eq.s32.totalorder %s10, 0
    %p82 = por %p80, %p81
    %p83 = scmp.ne.s32.totalorder %s72, %s75
    %p84 = scmp.eq.s32.totalorder %s15, 1
    %p85 = por %p83, %p84
    %p86 = scmp.ne.s32.totalorder %s75, %s76
    %p87 = scmp.eq.s32.totalorder %s15, 0
    %p88 = por %p86, %p87
    %p89 = scmp.ne.s32.totalorder %s75, %s76
    %p90 = scmp.eq.s32.totalorder %s16, 1
    %p91 = por %p89, %p90
    %p93 = scmp.ne.s32.totalorder %s76, %s92
    %p94 = scmp.eq.s32.totalorder %s16, 0
    %p95 = por %p93, %p94
    %s96 = ssub.s32 %s10, %s17
    %p97 = scmp.eq.s32.totalorder %s96, 0
    %s99 = sadd.s32 %s98, 1
    %s100 = scalar_select %p97, %s98, %s99
    %p103 = pneg %p97
    %p104 = scmp.eq.s32.totalorder %s10, 1
    %p105 = por %p103, %p104
    %p106 = scmp.ne.s32.totalorder %s98, %s101
    %p107 = scmp.eq.s32.totalorder %s10, 0
    %p108 = por %p106, %p107
    %p109 = scmp.ne.s32.totalorder %s98, %s101
    %p110 = scmp.eq.s32.totalorder %s15, 1
    %p111 = por %p109, %p110
    %p112 = scmp.ne.s32.totalorder %s101, %s102
    %p113 = scmp.eq.s32.totalorder %s15, 0
    %p114 = por %p112, %p113
    %p115 = scmp.ne.s32.totalorder %s101, %s102
    %p116 = scmp.eq.s32.totalorder %s16, 1
    %p117 = por %p115, %p116
    %p119 = scmp.ne.s32.totalorder %s102, %s118
    %p120 = scmp.eq.s32.totalorder %s16, 0
    %p121 = por %p119, %p120
    %s122 = ssub.s32 %s10, %s17
    %p123 = scmp.eq.s32.totalorder %s122, 0
    %s125 = sadd.s32 %s124, 1
    %s126 = scalar_select %p123, %s124, %s125
    %p129 = pneg %p123
    %p130 = scmp.eq.s32.totalorder %s10, 1
    %p131 = por %p129, %p130
    %p132 = scmp.ne.s32.totalorder %s124, %s127
    %p133 = scmp.eq.s32.totalorder %s10, 0
    %p134 = por %p132, %p133
    %p135 = scmp.ne.s32.totalorder %s124, %s127
    %p136 = scmp.eq.s32.totalorder %s15, 1
    %p137 = por %p135, %p136
    %p138 = scmp.ne.s32.totalorder %s127, %s128
    %p139 = scmp.eq.s32.totalorder %s15, 0
    %p140 = por %p138, %p139
    %p141 = scmp.ne.s32.totalorder %s127, %s128
    %p142 = scmp.eq.s32.totalorder %s16, 1
    %p143 = por %p141, %p142
    %p145 = scmp.ne.s32.totalorder %s128, %s144
    %p146 = scmp.eq.s32.totalorder %s16, 0
    %p147 = por %p145, %p146
    %p148 = scmp.le.s32.totalorder 1, %s10
    %p149 = scmp.lt.s32.totalorder %s10, 3
    %p150 = pnand %p148, %p149
    %p151 = pneg %p150
    // Predicated region
    $region9: #{egnn_pallas.3} parent=5 // pred_check
      _
    $region10: #{egnn_pallas.3} parent=5 // pred_check_branch
      %153 = sbr.rel (%p150) target = $region12
    $region11: #{egnn_pallas.3} parent=5 // pred_region
      %s154 = ssub.s32 %s10, 1
    $region12: #{egnn_pallas.3} parent=5 // pred_fallthru
      _
    %p155 = scmp.lt.s32.totalorder %s10, 2
    // Predicated region
    $region13: #{egnn_pallas.3} parent=5 // pred_check
      %p156 = pneg %p155
    $region14: #{egnn_pallas.3} parent=5 // pred_check_branch
      %158 = sbr.rel (%p156) target = $region16
    $region15: #{egnn_pallas.3} parent=5 // pred_region
      // Predicated region
      $region17: #{egnn_pallas.3} parent=15 // pred_check
        %p159 = pneg %p30
      $region18: #{egnn_pallas.3} parent=15 // pred_check_branch
        %161 = sbr.rel (%p159) target = $region20
      $region19: #{egnn_pallas.3} parent=15 // pred_region
        %p162 = scmp.lt.s32.totalorder %s10, 1
        %s163 = scalar_select %p162, %s10, 1
        %s164 = scalar_lea.vmem %s0, %s163
      $region20: #{egnn_pallas.3} parent=15 // pred_fallthru
        _
      // Predicated region
      $region21: #{egnn_pallas.3} parent=15 // pred_check
        %p165 = pneg %p56
      $region22: #{egnn_pallas.3} parent=15 // pred_check_branch
        %167 = sbr.rel (%p165) target = $region24
      $region23: #{egnn_pallas.3} parent=15 // pred_region
        %p168 = scmp.lt.s32.totalorder %s10, 1
        %s169 = scalar_select %p168, %s10, 1
        %s170 = smul.addr %s169, 8
        %s171 = scalar_lea.vmem %s1, %s170
      $region24: #{egnn_pallas.3} parent=15 // pred_fallthru
        _
      // Predicated region
      $region25: #{egnn_pallas.3} parent=15 // pred_check
        %p172 = pneg %p82
      $region26: #{egnn_pallas.3} parent=15 // pred_check_branch
        %174 = sbr.rel (%p172) target = $region28
      $region27: #{egnn_pallas.3} parent=15 // pred_region
        %p175 = scmp.lt.s32.totalorder %s10, 1
        %s176 = scalar_select %p175, %s10, 1
        %s177 = smul.addr %s176, 8
        %s178 = scalar_lea.vmem %s2, %s177
      $region28: #{egnn_pallas.3} parent=15 // pred_fallthru
        _
      // Predicated region
      $region29: #{egnn_pallas.3} parent=15 // pred_check
        %p179 = pneg %p108
      $region30: #{egnn_pallas.3} parent=15 // pred_check_branch
        %181 = sbr.rel (%p179) target = $region32
      $region31: #{egnn_pallas.3} parent=15 // pred_region
        %p182 = scmp.lt.s32.totalorder %s10, 1
        %s183 = scalar_select %p182, %s10, 1
        %s184 = smul.addr %s183, 8
        %s185 = smul.addr %s184, 8
        %s186 = scalar_lea.vmem %s3, %s185
      $region32: #{egnn_pallas.3} parent=15 // pred_fallthru
        _
    $region16: #{egnn_pallas.3} parent=5 // pred_fallthru
      _
    %p187 = scmp.le.s32.totalorder 1, %s10
    %p188 = scmp.lt.s32.totalorder %s10, 3
    %p189 = pnand %p187, %p188
    %p190 = pneg %p189
    // Predicated region
    $region33: #{egnn_pallas.3} parent=5 // pred_check
      _
    $region34: #{egnn_pallas.3} parent=5 // pred_check_branch
      %192 = sbr.rel (%p189) target = $region36
    $region35: #{egnn_pallas.3} parent=5 // pred_region
      %s193 = ssub.s32 %s10, 1
      %p194 = scmp.lt.s32.totalorder %s15, 1
      %s195 = scalar_select %p194, %s15, 1
      %s196 = scalar_lea.vmem %s0, %s195
      %p197 = pneg %p36
      %p198 = pneg %p33
      %p199 = scmp.lt.s32.totalorder %s15, 1
      %s200 = scalar_select %p199, %s15, 1
      %s201 = smul.addr %s200, 8
      %s202 = scalar_lea.vmem %s1, %s201
      %p203 = pneg %p62
      %p204 = pneg %p59
      %p205 = scmp.lt.s32.totalorder %s15, 1
      %s206 = scalar_select %p205, %s15, 1
      %s207 = smul.addr %s206, 8
      %s208 = scalar_lea.vmem %s2, %s207
      %p209 = pneg %p88
      %p210 = pneg %p85
      %p211 = scmp.lt.s32.totalorder %s15, 1
      %s212 = scalar_select %p211, %s15, 1
      %s213 = smul.addr %s212, 8
      %s214 = smul.addr %s213, 8
      %s215 = scalar_lea.vmem %s3, %s214
      %p216 = pneg %p114
      %p217 = pneg %p111
      %p218 = pneg %p140
      %p219 = pneg %p137
      %p220 = scmp.lt.s32.totalorder %s15, 1
      %s221 = scalar_select %p220, %s15, 1
      %s222 = smul.addr %s221, 8
      %s223 = scalar_lea.vmem %s4, %s222
      %p224 = scmp.lt.s32.totalorder %s15, 1
      %s225 = scalar_select %p224, %s15, 1
      %s226 = scalar_lea.vmem %s0, %s225
      %p227 = scmp.lt.s32.totalorder %s15, 1
      %s228 = scalar_select %p227, %s15, 1
      %s229 = smul.addr %s228, 8
      %s230 = scalar_lea.vmem %s1, %s229
      %p231 = scmp.lt.s32.totalorder %s15, 1
      %s232 = scalar_select %p231, %s15, 1
      %s233 = smul.addr %s232, 8
      %s234 = scalar_lea.vmem %s2, %s233
      %p235 = scmp.lt.s32.totalorder %s15, 1
      %s236 = scalar_select %p235, %s15, 1
      %s237 = smul.addr %s236, 8
      %s238 = smul.addr %s237, 8
      %s239 = scalar_lea.vmem %s3, %s238
      %p240 = scmp.lt.s32.totalorder %s15, 1
      %s241 = scalar_select %p240, %s15, 1
      %s242 = smul.addr %s241, 8
      %s243 = scalar_lea.vmem %s4, %s242
      %v244 = vld [vmem:[%s226] sm:$0x1]
      %vm245 = vcmask 57344
      %v246 = vsel %vm245, %v244, 0.0
      %247 = vadd.xlane.f32.xlu0 %v246
      %v248 = vpop.xlane.xlu0 %247
      %v249 = vrot.slane %v248, 4
      %v250 = vadd.f32 %v248, %v249
      %v251 = vrot.slane %v250, 2
      %v252 = vadd.f32 %v250, %v251
      %v253 = vrot.slane %v252, 1
      %v254 = vadd.f32 %v252, %v253
      %s255 = vtos %v254
      %v256 = vld [vmem:[%s234] sm:$0xff]
      %v257 = vmul.f32 %v256, %v256
      %vm258 = vcmask 31744
      %v259 = vsel %vm258, %v257, 0.0
      %260 = vadd.xlane.f32.xlu0 %v259
      %v261 = vpop.xlane.xlu0 %260
      %v262 = vmax.f32 %v261, 1e-24
      %v263 = vrsqrt.pop %v262
      %v264 = vmul.f32 %v256, %v263
      %v265 = vld [vmem:[%s239] sm:$0xff]
      %v266 = vld [vmem:[%s239 + $0x8] sm:$0xff]
      %v267 = vld [vmem:[%s239 + $0x10] sm:$0xff]
      %v268 = vld [vmem:[%s239 + $0x18] sm:$0xff]
      %v269 = vld [vmem:[%s239 + $0x20] sm:$0xff]
      %v270 = vld [vmem:[%s239 + $0x28] sm:$0xff]
      %v271 = vld [vmem:[%s239 + $0x30] sm:$0xff]
      %v272 = vld [vmem:[%s239 + $0x38] sm:$0xff]
      %v273 = vmul.f32 %v264, %v265
      %v274 = vmul.f32 %v264, %v266
      %v275 = vmul.f32 %v264, %v267
      %v276 = vmul.f32 %v264, %v268
      %v277 = vmul.f32 %v264, %v269
      %v278 = vmul.f32 %v264, %v270
      %v279 = vmul.f32 %v264, %v271
      %v280 = vmul.f32 %v264, %v272
      %289 = vrot.lane.b32.xlu0 %v265, 2
      %v290 = vpop.permute.xlu0 %289
      %291 = vrot.lane.b32.xlu0 %v266, 2
      %v292 = vpop.permute.xlu0 %291
      %293 = vrot.lane.b32.xlu0 %v267, 2
      %v294 = vpop.permute.xlu0 %293
      %295 = vrot.lane.b32.xlu0 %v268, 2
      %v296 = vpop.permute.xlu0 %295
      %297 = vrot.lane.b32.xlu0 %v269, 2
      %v298 = vpop.permute.xlu0 %297
      %299 = vrot.lane.b32.xlu0 %v270, 2
      %v300 = vpop.permute.xlu0 %299
      %301 = vrot.lane.b32.xlu0 %v271, 2
      %v302 = vpop.permute.xlu0 %301
      %303 = vrot.lane.b32.xlu0 %v272, 2
      %v304 = vpop.permute.xlu0 %303
      %v313 = vmul.f32 %v264, %v290
      %v314 = vmul.f32 %v264, %v292
      %v315 = vmul.f32 %v264, %v294
      %v316 = vmul.f32 %v264, %v296
      %v317 = vmul.f32 %v264, %v298
      %v318 = vmul.f32 %v264, %v300
      %v319 = vmul.f32 %v264, %v302
      %v320 = vmul.f32 %v264, %v304
      %329 = vrot.lane.b32.xlu0 %v313, 127
      %v330 = vpop.permute.xlu0 %329
      %331 = vrot.lane.b32.xlu0 %v314, 127
      %v332 = vpop.permute.xlu0 %331
      %333 = vrot.lane.b32.xlu0 %v315, 127
      %v334 = vpop.permute.xlu0 %333
      %335 = vrot.lane.b32.xlu0 %v316, 127
      %v336 = vpop.permute.xlu0 %335
      %337 = vrot.lane.b32.xlu0 %v317, 127
      %v338 = vpop.permute.xlu0 %337
      %339 = vrot.lane.b32.xlu0 %v318, 127
      %v340 = vpop.permute.xlu0 %339
      %341 = vrot.lane.b32.xlu0 %v319, 127
      %v342 = vpop.permute.xlu0 %341
      %343 = vrot.lane.b32.xlu0 %v320, 127
      %v344 = vpop.permute.xlu0 %343
      %v353 = vsub.f32 %v273, %v330
      %v354 = vsub.f32 %v274, %v332
      %v355 = vsub.f32 %v275, %v334
      %v356 = vsub.f32 %v276, %v336
      %v357 = vsub.f32 %v277, %v338
      %v358 = vsub.f32 %v278, %v340
      %v359 = vsub.f32 %v279, %v342
      %v360 = vsub.f32 %v280, %v344
      %361 = vrot.lane.b32.xlu0 %v265, 3
      %v362 = vpop.permute.xlu0 %361
      %363 = vrot.lane.b32.xlu0 %v266, 3
      %v364 = vpop.permute.xlu0 %363
      %365 = vrot.lane.b32.xlu0 %v267, 3
      %v366 = vpop.permute.xlu0 %365
      %367 = vrot.lane.b32.xlu0 %v268, 3
      %v368 = vpop.permute.xlu0 %367
      %369 = vrot.lane.b32.xlu0 %v269, 3
      %v370 = vpop.permute.xlu0 %369
      %371 = vrot.lane.b32.xlu0 %v270, 3
      %v372 = vpop.permute.xlu0 %371
      %373 = vrot.lane.b32.xlu0 %v271, 3
      %v374 = vpop.permute.xlu0 %373
      %375 = vrot.lane.b32.xlu0 %v272, 3
      %v376 = vpop.permute.xlu0 %375
      %v385 = vmul.f32 %v264, %v362
      %v386 = vmul.f32 %v264, %v364
      %v387 = vmul.f32 %v264, %v366
      %v388 = vmul.f32 %v264, %v368
      %v389 = vmul.f32 %v264, %v370
      %v390 = vmul.f32 %v264, %v372
      %v391 = vmul.f32 %v264, %v374
      %v392 = vmul.f32 %v264, %v376
      %393 = vrot.lane.b32.xlu0 %v265, 127
      %v394 = vpop.permute.xlu0 %393
      %395 = vrot.lane.b32.xlu0 %v266, 127
      %v396 = vpop.permute.xlu0 %395
      %397 = vrot.lane.b32.xlu0 %v267, 127
      %v398 = vpop.permute.xlu0 %397
      %399 = vrot.lane.b32.xlu0 %v268, 127
      %v400 = vpop.permute.xlu0 %399
      %401 = vrot.lane.b32.xlu0 %v269, 127
      %v402 = vpop.permute.xlu0 %401
      %403 = vrot.lane.b32.xlu0 %v270, 127
      %v404 = vpop.permute.xlu0 %403
      %405 = vrot.lane.b32.xlu0 %v271, 127
      %v406 = vpop.permute.xlu0 %405
      %407 = vrot.lane.b32.xlu0 %v272, 127
      %v408 = vpop.permute.xlu0 %407
      %v417 = vmul.f32 %v264, %v394
      %v418 = vmul.f32 %v264, %v396
      %v419 = vmul.f32 %v264, %v398
      %v420 = vmul.f32 %v264, %v400
      %v421 = vmul.f32 %v264, %v402
      %v422 = vmul.f32 %v264, %v404
      %v423 = vmul.f32 %v264, %v406
      %v424 = vmul.f32 %v264, %v408
      %433 = vrot.lane.b32.xlu0 %v417, 2
      %v434 = vpop.permute.xlu0 %433
      %435 = vrot.lane.b32.xlu0 %v418, 2
      %v436 = vpop.permute.xlu0 %435
      %437 = vrot.lane.b32.xlu0 %v419, 2
      %v438 = vpop.permute.xlu0 %437
      %439 = vrot.lane.b32.xlu0 %v420, 2
      %v440 = vpop.permute.xlu0 %439
      %441 = vrot.lane.b32.xlu0 %v421, 2
      %v442 = vpop.permute.xlu0 %441
      %443 = vrot.lane.b32.xlu0 %v422, 2
      %v444 = vpop.permute.xlu0 %443
      %445 = vrot.lane.b32.xlu0 %v423, 2
      %v446 = vpop.permute.xlu0 %445
      %447 = vrot.lane.b32.xlu0 %v424, 2
      %v448 = vpop.permute.xlu0 %447
      %v457 = vsub.f32 %v385, %v434
      %v458 = vsub.f32 %v386, %v436
      %v459 = vsub.f32 %v387, %v438
      %v460 = vsub.f32 %v388, %v440
      %v461 = vsub.f32 %v389, %v442
      %v462 = vsub.f32 %v390, %v444
      %v463 = vsub.f32 %v391, %v446
      %v464 = vsub.f32 %v392, %v448
      %473 = vrot.lane.b32.xlu0 %v353, 126
      %v474 = vpop.permute.xlu0 %473
      %475 = vrot.lane.b32.xlu0 %v354, 126
      %v476 = vpop.permute.xlu0 %475
      %477 = vrot.lane.b32.xlu0 %v355, 126
      %v478 = vpop.permute.xlu0 %477
      %479 = vrot.lane.b32.xlu0 %v356, 126
      %v480 = vpop.permute.xlu0 %479
      %481 = vrot.lane.b32.xlu0 %v357, 126
      %v482 = vpop.permute.xlu0 %481
      %483 = vrot.lane.b32.xlu0 %v358, 126
      %v484 = vpop.permute.xlu0 %483
      %485 = vrot.lane.b32.xlu0 %v359, 126
      %v486 = vpop.permute.xlu0 %485
      %487 = vrot.lane.b32.xlu0 %v360, 126
      %v488 = vpop.permute.xlu0 %487
      %505 = vrot.lane.b32.xlu0 %v457, 126
      %v506 = vpop.permute.xlu0 %505
      %507 = vrot.lane.b32.xlu0 %v458, 126
      %v508 = vpop.permute.xlu0 %507
      %509 = vrot.lane.b32.xlu0 %v459, 126
      %v510 = vpop.permute.xlu0 %509
      %511 = vrot.lane.b32.xlu0 %v460, 126
      %v512 = vpop.permute.xlu0 %511
      %513 = vrot.lane.b32.xlu0 %v461, 126
      %v514 = vpop.permute.xlu0 %513
      %515 = vrot.lane.b32.xlu0 %v462, 126
      %v516 = vpop.permute.xlu0 %515
      %517 = vrot.lane.b32.xlu0 %v463, 126
      %v518 = vpop.permute.xlu0 %517
      %519 = vrot.lane.b32.xlu0 %v464, 126
      %v520 = vpop.permute.xlu0 %519
      %529 = vrot.lane.b32.xlu0 %v353, 1
      %v530 = vpop.permute.xlu0 %529
      %531 = vrot.lane.b32.xlu0 %v354, 1
      %v532 = vpop.permute.xlu0 %531
      %533 = vrot.lane.b32.xlu0 %v355, 1
      %v534 = vpop.permute.xlu0 %533
      %535 = vrot.lane.b32.xlu0 %v356, 1
      %v536 = vpop.permute.xlu0 %535
      %537 = vrot.lane.b32.xlu0 %v357, 1
      %v538 = vpop.permute.xlu0 %537
      %539 = vrot.lane.b32.xlu0 %v358, 1
      %v540 = vpop.permute.xlu0 %539
      %541 = vrot.lane.b32.xlu0 %v359, 1
      %v542 = vpop.permute.xlu0 %541
      %543 = vrot.lane.b32.xlu0 %v360, 1
      %v544 = vpop.permute.xlu0 %543
      %vm553 = vcmask 7168
      %v554 = vsel %vm553, %v474, %v506
      %v555 = vsel %vm553, %v476, %v508
      %v556 = vsel %vm553, %v478, %v510
      %v557 = vsel %vm553, %v480, %v512
      %v558 = vsel %vm553, %v482, %v514
      %v559 = vsel %vm553, %v484, %v516
      %v560 = vsel %vm553, %v486, %v518
      %v561 = vsel %vm553, %v488, %v520
      %vm562 = vcmask 15360
      %v563 = vsel %vm562, %v554, %v530
      %v564 = vsel %vm562, %v555, %v532
      %v565 = vsel %vm562, %v556, %v534
      %v566 = vsel %vm562, %v557, %v536
      %v567 = vsel %vm562, %v558, %v538
      %v568 = vsel %vm562, %v559, %v540
      %v569 = vsel %vm562, %v560, %v542
      %v570 = vsel %vm562, %v561, %v544
      %572 = vset.pattern.permute.xlu0 0
      %573 = vperm.xlu0 %572, %v264
      %v574 = vpop.permute.xlu0 %573
      %v576 = vmul.f32 %v574, %v265
      %v577 = vmul.f32 %v574, %v266
      %v578 = vmul.f32 %v574, %v267
      %v579 = vmul.f32 %v574, %v268
      %v580 = vmul.f32 %v574, %v269
      %v581 = vmul.f32 %v574, %v270
      %v582 = vmul.f32 %v574, %v271
      %v583 = vmul.f32 %v574, %v272
      %v584 = vadd.f32 %v563, %v576
      %v585 = vadd.f32 %v564, %v577
      %v586 = vadd.f32 %v565, %v578
      %v587 = vadd.f32 %v566, %v579
      %v588 = vadd.f32 %v567, %v580
      %v589 = vadd.f32 %v568, %v581
      %v590 = vadd.f32 %v569, %v582
      %v591 = vadd.f32 %v570, %v583
      %v592 = vmul.f32 %v264, %v584
      %v593 = vmul.f32 %v264, %v585
      %v594 = vmul.f32 %v264, %v586
      %v595 = vmul.f32 %v264, %v587
      %v596 = vmul.f32 %v264, %v588
      %v597 = vmul.f32 %v264, %v589
      %v598 = vmul.f32 %v264, %v590
      %v599 = vmul.f32 %v264, %v591
      %608 = vrot.lane.b32.xlu0 %v584, 2
      %v609 = vpop.permute.xlu0 %608
      %610 = vrot.lane.b32.xlu0 %v585, 2
      %v611 = vpop.permute.xlu0 %610
      %612 = vrot.lane.b32.xlu0 %v586, 2
      %v613 = vpop.permute.xlu0 %612
      %614 = vrot.lane.b32.xlu0 %v587, 2
      %v615 = vpop.permute.xlu0 %614
      %616 = vrot.lane.b32.xlu0 %v588, 2
      %v617 = vpop.permute.xlu0 %616
      %618 = vrot.lane.b32.xlu0 %v589, 2
      %v619 = vpop.permute.xlu0 %618
      %620 = vrot.lane.b32.xlu0 %v590, 2
      %v621 = vpop.permute.xlu0 %620
      %622 = vrot.lane.b32.xlu0 %v591, 2
      %v623 = vpop.permute.xlu0 %622
      %v632 = vmul.f32 %v264, %v609
      %v633 = vmul.f32 %v264, %v611
      %v634 = vmul.f32 %v264, %v613
      %v635 = vmul.f32 %v264, %v615
      %v636 = vmul.f32 %v264, %v617
      %v637 = vmul.f32 %v264, %v619
      %v638 = vmul.f32 %v264, %v621
      %v639 = vmul.f32 %v264, %v623
      %648 = vrot.lane.b32.xlu0 %v632, 127
      %v649 = vpop.permute.xlu0 %648
      %650 = vrot.lane.b32.xlu0 %v633, 127
      %v651 = vpop.permute.xlu0 %650
      %652 = vrot.lane.b32.xlu0 %v634, 127
      %v653 = vpop.permute.xlu0 %652
      %654 = vrot.lane.b32.xlu0 %v635, 127
      %v655 = vpop.permute.xlu0 %654
      %656 = vrot.lane.b32.xlu0 %v636, 127
      %v657 = vpop.permute.xlu0 %656
      %658 = vrot.lane.b32.xlu0 %v637, 127
      %v659 = vpop.permute.xlu0 %658
      %660 = vrot.lane.b32.xlu0 %v638, 127
      %v661 = vpop.permute.xlu0 %660
      %662 = vrot.lane.b32.xlu0 %v639, 127
      %v663 = vpop.permute.xlu0 %662
      %v672 = vsub.f32 %v592, %v649
      %v673 = vsub.f32 %v593, %v651
      %v674 = vsub.f32 %v594, %v653
      %v675 = vsub.f32 %v595, %v655
      %v676 = vsub.f32 %v596, %v657
      %v677 = vsub.f32 %v597, %v659
      %v678 = vsub.f32 %v598, %v661
      %v679 = vsub.f32 %v599, %v663
      %680 = vrot.lane.b32.xlu0 %v584, 3
      %v681 = vpop.permute.xlu0 %680
      %682 = vrot.lane.b32.xlu0 %v585, 3
      %v683 = vpop.permute.xlu0 %682
      %684 = vrot.lane.b32.xlu0 %v586, 3
      %v685 = vpop.permute.xlu0 %684
      %686 = vrot.lane.b32.xlu0 %v587, 3
      %v687 = vpop.permute.xlu0 %686
      %688 = vrot.lane.b32.xlu0 %v588, 3
      %v689 = vpop.permute.xlu0 %688
      %690 = vrot.lane.b32.xlu0 %v589, 3
      %v691 = vpop.permute.xlu0 %690
      %692 = vrot.lane.b32.xlu0 %v590, 3
      %v693 = vpop.permute.xlu0 %692
      %694 = vrot.lane.b32.xlu0 %v591, 3
      %v695 = vpop.permute.xlu0 %694
      %v704 = vmul.f32 %v264, %v681
      %v705 = vmul.f32 %v264, %v683
      %v706 = vmul.f32 %v264, %v685
      %v707 = vmul.f32 %v264, %v687
      %v708 = vmul.f32 %v264, %v689
      %v709 = vmul.f32 %v264, %v691
      %v710 = vmul.f32 %v264, %v693
      %v711 = vmul.f32 %v264, %v695
      %712 = vrot.lane.b32.xlu0 %v584, 127
      %v713 = vpop.permute.xlu0 %712
      %714 = vrot.lane.b32.xlu0 %v585, 127
      %v715 = vpop.permute.xlu0 %714
      %716 = vrot.lane.b32.xlu0 %v586, 127
      %v717 = vpop.permute.xlu0 %716
      %718 = vrot.lane.b32.xlu0 %v587, 127
      %v719 = vpop.permute.xlu0 %718
      %720 = vrot.lane.b32.xlu0 %v588, 127
      %v721 = vpop.permute.xlu0 %720
      %722 = vrot.lane.b32.xlu0 %v589, 127
      %v723 = vpop.permute.xlu0 %722
      %724 = vrot.lane.b32.xlu0 %v590, 127
      %v725 = vpop.permute.xlu0 %724
      %726 = vrot.lane.b32.xlu0 %v591, 127
      %v727 = vpop.permute.xlu0 %726
      %v736 = vmul.f32 %v264, %v713
      %v737 = vmul.f32 %v264, %v715
      %v738 = vmul.f32 %v264, %v717
      %v739 = vmul.f32 %v264, %v719
      %v740 = vmul.f32 %v264, %v721
      %v741 = vmul.f32 %v264, %v723
      %v742 = vmul.f32 %v264, %v725
      %v743 = vmul.f32 %v264, %v727
      %752 = vrot.lane.b32.xlu0 %v736, 2
      %v753 = vpop.permute.xlu0 %752
      %754 = vrot.lane.b32.xlu0 %v737, 2
      %v755 = vpop.permute.xlu0 %754
      %756 = vrot.lane.b32.xlu0 %v738, 2
      %v757 = vpop.permute.xlu0 %756
      %758 = vrot.lane.b32.xlu0 %v739, 2
      %v759 = vpop.permute.xlu0 %758
      %760 = vrot.lane.b32.xlu0 %v740, 2
      %v761 = vpop.permute.xlu0 %760
      %762 = vrot.lane.b32.xlu0 %v741, 2
      %v763 = vpop.permute.xlu0 %762
      %764 = vrot.lane.b32.xlu0 %v742, 2
      %v765 = vpop.permute.xlu0 %764
      %766 = vrot.lane.b32.xlu0 %v743, 2
      %v767 = vpop.permute.xlu0 %766
      %v776 = vsub.f32 %v704, %v753
      %v777 = vsub.f32 %v705, %v755
      %v778 = vsub.f32 %v706, %v757
      %v779 = vsub.f32 %v707, %v759
      %v780 = vsub.f32 %v708, %v761
      %v781 = vsub.f32 %v709, %v763
      %v782 = vsub.f32 %v710, %v765
      %v783 = vsub.f32 %v711, %v767
      %792 = vrot.lane.b32.xlu0 %v672, 126
      %v793 = vpop.permute.xlu0 %792
      %794 = vrot.lane.b32.xlu0 %v673, 126
      %v795 = vpop.permute.xlu0 %794
      %796 = vrot.lane.b32.xlu0 %v674, 126
      %v797 = vpop.permute.xlu0 %796
      %798 = vrot.lane.b32.xlu0 %v675, 126
      %v799 = vpop.permute.xlu0 %798
      %800 = vrot.lane.b32.xlu0 %v676, 126
      %v801 = vpop.permute.xlu0 %800
      %802 = vrot.lane.b32.xlu0 %v677, 126
      %v803 = vpop.permute.xlu0 %802
      %804 = vrot.lane.b32.xlu0 %v678, 126
      %v805 = vpop.permute.xlu0 %804
      %806 = vrot.lane.b32.xlu0 %v679, 126
      %v807 = vpop.permute.xlu0 %806
      %824 = vrot.lane.b32.xlu0 %v776, 126
      %v825 = vpop.permute.xlu0 %824
      %826 = vrot.lane.b32.xlu0 %v777, 126
      %v827 = vpop.permute.xlu0 %826
      %828 = vrot.lane.b32.xlu0 %v778, 126
      %v829 = vpop.permute.xlu0 %828
      %830 = vrot.lane.b32.xlu0 %v779, 126
      %v831 = vpop.permute.xlu0 %830
      %832 = vrot.lane.b32.xlu0 %v780, 126
      %v833 = vpop.permute.xlu0 %832
      %834 = vrot.lane.b32.xlu0 %v781, 126
      %v835 = vpop.permute.xlu0 %834
      %836 = vrot.lane.b32.xlu0 %v782, 126
      %v837 = vpop.permute.xlu0 %836
      %838 = vrot.lane.b32.xlu0 %v783, 126
      %v839 = vpop.permute.xlu0 %838
      %848 = vrot.lane.b32.xlu0 %v672, 1
      %v849 = vpop.permute.xlu0 %848
      %850 = vrot.lane.b32.xlu0 %v673, 1
      %v851 = vpop.permute.xlu0 %850
      %852 = vrot.lane.b32.xlu0 %v674, 1
      %v853 = vpop.permute.xlu0 %852
      %854 = vrot.lane.b32.xlu0 %v675, 1
      %v855 = vpop.permute.xlu0 %854
      %856 = vrot.lane.b32.xlu0 %v676, 1
      %v857 = vpop.permute.xlu0 %856
      %858 = vrot.lane.b32.xlu0 %v677, 1
      %v859 = vpop.permute.xlu0 %858
      %860 = vrot.lane.b32.xlu0 %v678, 1
      %v861 = vpop.permute.xlu0 %860
      %862 = vrot.lane.b32.xlu0 %v679, 1
      %v863 = vpop.permute.xlu0 %862
      %v872 = vsel %vm553, %v793, %v825
      %v873 = vsel %vm553, %v795, %v827
      %v874 = vsel %vm553, %v797, %v829
      %v875 = vsel %vm553, %v799, %v831
      %v876 = vsel %vm553, %v801, %v833
      %v877 = vsel %vm553, %v803, %v835
      %v878 = vsel %vm553, %v805, %v837
      %v879 = vsel %vm553, %v807, %v839
      %v880 = vsel %vm562, %v872, %v849
      %v881 = vsel %vm562, %v873, %v851
      %v882 = vsel %vm562, %v874, %v853
      %v883 = vsel %vm562, %v875, %v855
      %v884 = vsel %vm562, %v876, %v857
      %v885 = vsel %vm562, %v877, %v859
      %v886 = vsel %vm562, %v878, %v861
      %v887 = vsel %vm562, %v879, %v863
      %v888 = vmul.f32 %v880, 2.0
      %v889 = vmul.f32 %v881, 2.0
      %v890 = vmul.f32 %v882, 2.0
      %v891 = vmul.f32 %v883, 2.0
      %v892 = vmul.f32 %v884, 2.0
      %v893 = vmul.f32 %v885, 2.0
      %v894 = vmul.f32 %v886, 2.0
      %v895 = vmul.f32 %v887, 2.0
      %v896 = vadd.f32 %v265, %v888
      %v897 = vadd.f32 %v266, %v889
      %v898 = vadd.f32 %v267, %v890
      %v899 = vadd.f32 %v268, %v891
      %v900 = vadd.f32 %v269, %v892
      %v901 = vadd.f32 %v270, %v893
      %v902 = vadd.f32 %v271, %v894
      %v903 = vadd.f32 %v272, %v895
      %vm904 = vcmask 23552
      %v905 = vsel %vm904, %v896, 0.0
      %v906 = vrot.slane %v905, 4
      %v907 = vadd.f32 %v905, %v906
      %v908 = vrot.slane %v907, 2
      %v909 = vadd.f32 %v907, %v908
      %v910 = vrot.slane %v909, 1
      %v911 = vadd.f32 %v909, %v910
      %v912 = vsel %vm904, %v897, 0.0
      %v913 = vrot.slane %v912, 4
      %v914 = vadd.f32 %v912, %v913
      %v915 = vrot.slane %v914, 2
      %v916 = vadd.f32 %v914, %v915
      %v917 = vrot.slane %v916, 1
      %v918 = vadd.f32 %v916, %v917
      %v919 = vsel %vm904, %v898, 0.0
      %v920 = vrot.slane %v919, 4
      %v921 = vadd.f32 %v919, %v920
      %v922 = vrot.slane %v921, 2
      %v923 = vadd.f32 %v921, %v922
      %v924 = vrot.slane %v923, 1
      %v925 = vadd.f32 %v923, %v924
      %v926 = vsel %vm904, %v899, 0.0
      %v927 = vrot.slane %v926, 4
      %v928 = vadd.f32 %v926, %v927
      %v929 = vrot.slane %v928, 2
      %v930 = vadd.f32 %v928, %v929
      %v931 = vrot.slane %v930, 1
      %v932 = vadd.f32 %v930, %v931
      %v933 = vsel %vm904, %v900, 0.0
      %v934 = vrot.slane %v933, 4
      %v935 = vadd.f32 %v933, %v934
      %v936 = vrot.slane %v935, 2
      %v937 = vadd.f32 %v935, %v936
      %v938 = vrot.slane %v937, 1
      %v939 = vadd.f32 %v937, %v938
      %v940 = vsel %vm904, %v901, 0.0
      %v941 = vrot.slane %v940, 4
      %v942 = vadd.f32 %v940, %v941
      %v943 = vrot.slane %v942, 2
      %v944 = vadd.f32 %v942, %v943
      %v945 = vrot.slane %v944, 1
      %v946 = vadd.f32 %v944, %v945
      %v947 = vsel %vm904, %v902, 0.0
      %v948 = vrot.slane %v947, 4
      %v949 = vadd.f32 %v947, %v948
      %v950 = vrot.slane %v949, 2
      %v951 = vadd.f32 %v949, %v950
      %v952 = vrot.slane %v951, 1
      %v953 = vadd.f32 %v951, %v952
      %v954 = vsel %vm904, %v903, 0.0
      %v955 = vrot.slane %v954, 4
      %v956 = vadd.f32 %v954, %v955
      %v957 = vrot.slane %v956, 2
      %v958 = vadd.f32 %v956, %v957
      %v959 = vrot.slane %v958, 1
      %v960 = vadd.f32 %v958, %v959
      %v961 = vld [vmem:[%s230] sm:$0xff]
      %s962 = ssub.f32 %s255, 1.0
      %v963 = vstv %s962
      %v964 = vrcp.pop %v963
      %v965 = vmul.f32 %v911, %v964
      %v966 = vmul.f32 %v918, %v964
      %v967 = vmul.f32 %v925, %v964
      %v968 = vmul.f32 %v932, %v964
      %v969 = vmul.f32 %v939, %v964
      %v970 = vmul.f32 %v946, %v964
      %v971 = vmul.f32 %v953, %v964
      %v972 = vmul.f32 %v960, %v964
      %vm981 = vcmask 1041409
      %v982 = vsel %vm981, %v966, %v965
      %vm983 = vcmask 1042434
      %v984 = vsel %vm983, %v967, %v982
      %vm985 = vcmask 1043459
      %v986 = vsel %vm985, %v968, %v984
      %vm987 = vcmask 1044484
      %v988 = vsel %vm987, %v969, %v986
      %vm989 = vcmask 1045509
      %v990 = vsel %vm989, %v970, %v988
      %vm991 = vcmask 1046534
      %v992 = vsel %vm991, %v971, %v990
      %vm993 = vcmask 1047559
      %v994 = vsel %vm993, %v972, %v992
      %v996 = vadd.f32 %v961, %v994
      %997 = vst.msk [vmem:[%s243] sm:$0xff] %vm904, %v996
      %p998 = scmp.lt.s32.totalorder %s15, 1
      %s999 = scalar_select %p998, %s15, 1
      %s1000 = smul.addr %s999, 8
      %s1001 = scalar_lea.vmem %s4, %s1000
      // Predicated region
      $region37: #{egnn_pallas.3} parent=35 // pred_check
        %p1002 = pneg %p137
      $region38: #{egnn_pallas.3} parent=35 // pred_check_branch
        %1004 = sbr.rel (%p1002) target = $region40
      $region39: #{egnn_pallas.3} parent=35 // pred_region
        _
      $region40: #{egnn_pallas.3} parent=35 // pred_fallthru
        _
    $region36: #{egnn_pallas.3} parent=5 // pred_fallthru
      _
    %p1005 = scmp.le.s32.totalorder 2, %s10
    // Predicated region
    $region41: #{egnn_pallas.3} parent=5 // pred_check
      %p1006 = pneg %p1005
    $region42: #{egnn_pallas.3} parent=5 // pred_check_branch
      %1008 = sbr.rel (%p1006) target = $region44
    $region43: #{egnn_pallas.3} parent=5 // pred_region
      %s1009 = ssub.s32 %s10, 2
      // Predicated region
      $region45: #{egnn_pallas.3} parent=43 // pred_check
        %p1010 = pneg %p143
      $region46: #{egnn_pallas.3} parent=43 // pred_check_branch
        %1012 = sbr.rel (%p1010) target = $region48
      $region47: #{egnn_pallas.3} parent=43 // pred_region
        %p1013 = scmp.lt.s32.totalorder %s16, 1
        %s1014 = scalar_select %p1013, %s16, 1
        %s1015 = smul.addr %s1014, 8
        %s1016 = scalar_lea.vmem %s4, %s1015
      $region48: #{egnn_pallas.3} parent=43 // pred_fallthru
        _
    $region44: #{egnn_pallas.3} parent=5 // pred_fallthru
      _
  $region6: #{egnn_pallas.3} parent=0 // loop_footer
    %s14 = sadd.s32 1, %s10
  $region7: #{egnn_pallas.3} parent=0 // loop_footer_branch
    %9 = sbr.rel target = $region3
  $region8: #{egnn_pallas.3} parent=0 // loop_exit
    _

// kernel: egnn_pallas.2
$region0: #{egnn_pallas.2}
  #allocation0 [shape = 'u32[]', space=smem, size = 0x4, offset = 0x4, fixed_abs, tag = 'smem constant byte address 0x4 - core index']
  #allocation1 [shape = 'u32[144,128]{1,0:T(1,128)}', space=vmem, size = 0x12000, scoped, tag = 'internal scratch']
  #allocation2 [shape = 'f32[8,64]{1,0:T(8,128)}', space=vmem, size = 0x1000, scoped, tag = 'scratch operand']
  %s0 = inlined_call_operand.vmem [shape: f32[2,8,1], index: 0, kind: input, shape index: {}]
  %s1 = inlined_call_operand.vmem [shape: f32[2,1,8], index: 1, kind: input, shape index: {}]
  %s2 = inlined_call_operand.vmem [shape: f32[2,8,16], index: 2, kind: input, shape index: {}]
  %s3 = inlined_call_operand.vmem [shape: f32[2,8,8,8], index: 3, kind: input, shape index: {}]
  %s4 = inlined_call_operand.vmem [shape: f32[2,8,3], index: 4, kind: input, shape index: {}]
  %s5 = inlined_call_operand.vmem [shape: f32[2,8,4], index: 5, kind: input, shape index: {}]
  %s6 = inlined_call_operand.vmem [shape: f32[113,64], index: 6, kind: input, shape index: {}]
  %s7 = inlined_call_operand.vmem [shape: f32[4,64], index: 7, kind: input, shape index: {}]
  %s8 = inlined_call_operand.vmem [shape: f32[64,39], index: 8, kind: input, shape index: {}]
  %s9 = inlined_call_operand.vmem [shape: f32[1,39], index: 9, kind: input, shape index: {}]
  %s10 = inlined_call_operand.hbm [shape: f32[2,8,16], index: 10, kind: output, shape index: {0}]
  %s11 = inlined_call_operand.vmem [shape: f32[2,8,4], index: 11, kind: output, shape index: {1}]
  %s12 = inlined_call_operand.vmem [shape: f32[2,8,8,3], index: 12, kind: output, shape index: {2}]
  %13 = xla_tuple %s10, %s11, %s12
  %s14 = sld [smem:[#allocation0]]
  $region93: #{egnn_pallas.2} parent=0
    _
  %s16 = ssub.s32 1, %s14
  %s17 = scalar_select 0, %s16, %s14
  $region1: #{egnn_pallas.2} parent=0
    #allocation3 [shape = 'u8[8192]{0}', space=vmem, size = 0x2000, scoped, tag = 'output window, operand 0']
    #allocation4 [shape = 's32[2]{0}', space=sflag, size = 0x8, scoped, tag = 'scoped memory for egnn_pallas.2']
    %18 = vsyncpa [#allocation4], 0
    %s19 = scalar_lea.sflag [#allocation4], 1
    %20 = vsyncpa %s19, 0
    loop: start=0, step=1, limit=4
    $region2: #{egnn_pallas.2} parent=1 // loop_pre_header
      _
    $region3: #{egnn_pallas.2} parent=1 // loop_header
      %s22 = sphi 0, %s26
      %p23 = scmp.ge.s32.totalorder %s22, 4
      %s29 = sphi 0, %s41
      %s30 = sphi 0, %s37
      %s31 = sphi 0, %s29
      %s32 = sphi 0, %s30
      %s33 = sphi 0, %s31
      %s34 = sphi 0, %s32
      %s44 = sphi 0, %s46
      %s47 = sphi 0, %s44
      %s48 = sphi 0, %s47
      %s64 = sphi 0, %s48
      %s70 = sphi 0, %s72
      %s73 = sphi 0, %s70
      %s74 = sphi 0, %s73
      %s90 = sphi 0, %s74
      %s96 = sphi 0, %s98
      %s99 = sphi 0, %s96
      %s100 = sphi 0, %s99
      %s116 = sphi 0, %s100
      %s124 = sphi 0, %s126
      %s127 = sphi 0, %s124
      %s128 = sphi 0, %s127
      %s144 = sphi 0, %s128
      %s150 = sphi 0, %s152
      %s153 = sphi 0, %s150
      %s154 = sphi 0, %s153
      %s170 = sphi 0, %s154
      %s176 = sphi 0, %s178
      %s179 = sphi 0, %s176
      %s180 = sphi 0, %s179
      %s196 = sphi 0, %s180
      %s200 = sphi 0, %s200
      %s202 = sphi 0, %s200
      %s203 = sphi 0, %s202
      %s217 = sphi 0, %s203
      %s221 = sphi 0, %s221
      %s223 = sphi 0, %s221
      %s224 = sphi 0, %s223
      %s238 = sphi 0, %s224
      %s242 = sphi 0, %s242
      %s244 = sphi 0, %s242
      %s245 = sphi 0, %s244
      %s259 = sphi 0, %s245
      %s263 = sphi 0, %s263
      %s265 = sphi 0, %s263
      %s266 = sphi 0, %s265
      %s280 = sphi 0, %s266
      %s288 = sphi 0, %s290
      %s291 = sphi 0, %s288
      %s292 = sphi 0, %s291
      %s308 = sphi 0, %s292
      %s316 = sphi 0, %s318
      %s319 = sphi 0, %s316
      %s320 = sphi 0, %s319
      %s336 = sphi 0, %s320
      %s344 = sphi 0, %s346
      %s347 = sphi 0, %s344
      %s348 = sphi 0, %s347
      %s364 = sphi 0, %s348
    $region4: #{egnn_pallas.2} parent=1 // loop_header_branch
      %25 = sbr.rel (%p23) target = $region8
    $region5: #{egnn_pallas.2} parent=1 // loop_body
      %s27 = ssub.s32 %s22, 1
      %s28 = ssub.s32 %s22, 2
      %s35 = sadd.s32 1, %s30
      %p36 = scmp.ge.s32.totalorder %s35, 1
      %s37 = scalar_select %p36, 0, %s35
      %s38 = sadd.s32 1, %s29
      %s39 = scalar_select %p36, %s38, %s29
      %p40 = scmp.ge.s32.totalorder %s39, 2
      %s41 = scalar_select %p40, 0, %s39
      %s42 = ssub.s32 %s29, %s41
      %p43 = scmp.eq.s32.totalorder %s42, 0
      %s45 = sadd.s32 %s44, 1
      %s46 = scalar_select %p43, %s44, %s45
      %p49 = pneg %p43
      %p50 = scmp.eq.s32.totalorder %s22, 1
      %p51 = por %p49, %p50
      %p52 = scmp.ne.s32.totalorder %s44, %s47
      %p53 = scmp.eq.s32.totalorder %s22, 0
      %p54 = por %p52, %p53
      %p55 = scmp.ne.s32.totalorder %s44, %s47
      %p56 = scmp.eq.s32.totalorder %s27, 1
      %p57 = por %p55, %p56
      %p58 = scmp.ne.s32.totalorder %s47, %s48
      %p59 = scmp.eq.s32.totalorder %s27, 0
      %p60 = por %p58, %p59
      %p61 = scmp.ne.s32.totalorder %s47, %s48
      %p62 = scmp.eq.s32.totalorder %s28, 1
      %p63 = por %p61, %p62
      %p65 = scmp.ne.s32.totalorder %s48, %s64
      %p66 = scmp.eq.s32.totalorder %s28, 0
      %p67 = por %p65, %p66
      %s68 = ssub.s32 %s29, %s41
      %p69 = scmp.eq.s32.totalorder %s68, 0
      %s71 = sadd.s32 %s70, 1
      %s72 = scalar_select %p69, %s70, %s71
      %p75 = pneg %p69
      %p76 = scmp.eq.s32.totalorder %s22, 1
      %p77 = por %p75, %p76
      %p78 = scmp.ne.s32.totalorder %s70, %s73
      %p79 = scmp.eq.s32.totalorder %s22, 0
      %p80 = por %p78, %p79
      %p81 = scmp.ne.s32.totalorder %s70, %s73
      %p82 = scmp.eq.s32.totalorder %s27, 1
      %p83 = por %p81, %p82
      %p84 = scmp.ne.s32.totalorder %s73, %s74
      %p85 = scmp.eq.s32.totalorder %s27, 0
      %p86 = por %p84, %p85
      %p87 = scmp.ne.s32.totalorder %s73, %s74
      %p88 = scmp.eq.s32.totalorder %s28, 1
      %p89 = por %p87, %p88
      %p91 = scmp.ne.s32.totalorder %s74, %s90
      %p92 = scmp.eq.s32.totalorder %s28, 0
      %p93 = por %p91, %p92
      %s94 = ssub.s32 %s29, %s41
      %p95 = scmp.eq.s32.totalorder %s94, 0
      %s97 = sadd.s32 %s96, 1
      %s98 = scalar_select %p95, %s96, %s97
      %p101 = pneg %p95
      %p102 = scmp.eq.s32.totalorder %s22, 1
      %p103 = por %p101, %p102
      %p104 = scmp.ne.s32.totalorder %s96, %s99
      %p105 = scmp.eq.s32.totalorder %s22, 0
      %p106 = por %p104, %p105
      %p107 = scmp.ne.s32.totalorder %s96, %s99
      %p108 = scmp.eq.s32.totalorder %s27, 1
      %p109 = por %p107, %p108
      %p110 = scmp.ne.s32.totalorder %s99, %s100
      %p111 = scmp.eq.s32.totalorder %s27, 0
      %p112 = por %p110, %p111
      %p113 = scmp.ne.s32.totalorder %s99, %s100
      %p114 = scmp.eq.s32.totalorder %s28, 1
      %p115 = por %p113, %p114
      %p117 = scmp.ne.s32.totalorder %s100, %s116
      %p118 = scmp.eq.s32.totalorder %s28, 0
      %p119 = por %p117, %p118
      %s120 = ssub.s32 %s29, %s41
      %s121 = ssub.s32 %s30, %s37
      %s122 = sor.u32 %s120, %s121
      %p123 = scmp.eq.s32.totalorder %s122, 0
      %s125 = sadd.s32 %s124, 1
      %s126 = scalar_select %p123, %s124, %s125
      %p129 = pneg %p123
      %p130 = scmp.eq.s32.totalorder %s22, 1
      %p131 = por %p129, %p130
      %p132 = scmp.ne.s32.totalorder %s124, %s127
      %p133 = scmp.eq.s32.totalorder %s22, 0
      %p134 = por %p132, %p133
      %p135 = scmp.ne.s32.totalorder %s124, %s127
      %p136 = scmp.eq.s32.totalorder %s27, 1
      %p137 = por %p135, %p136
      %p138 = scmp.ne.s32.totalorder %s127, %s128
      %p139 = scmp.eq.s32.totalorder %s27, 0
      %p140 = por %p138, %p139
      %p141 = scmp.ne.s32.totalorder %s127, %s128
      %p142 = scmp.eq.s32.totalorder %s28, 1
      %p143 = por %p141, %p142
      %p145 = scmp.ne.s32.totalorder %s128, %s144
      %p146 = scmp.eq.s32.totalorder %s28, 0
      %p147 = por %p145, %p146
      %s148 = ssub.s32 %s29, %s41
      %p149 = scmp.eq.s32.totalorder %s148, 0
      %s151 = sadd.s32 %s150, 1
      %s152 = scalar_select %p149, %s150, %s151
      %p155 = pneg %p149
      %p156 = scmp.eq.s32.totalorder %s22, 1
      %p157 = por %p155, %p156
      %p158 = scmp.ne.s32.totalorder %s150, %s153
      %p159 = scmp.eq.s32.totalorder %s22, 0
      %p160 = por %p158, %p159
      %p161 = scmp.ne.s32.totalorder %s150, %s153
      %p162 = scmp.eq.s32.totalorder %s27, 1
      %p163 = por %p161, %p162
      %p164 = scmp.ne.s32.totalorder %s153, %s154
      %p165 = scmp.eq.s32.totalorder %s27, 0
      %p166 = por %p164, %p165
      %p167 = scmp.ne.s32.totalorder %s153, %s154
      %p168 = scmp.eq.s32.totalorder %s28, 1
      %p169 = por %p167, %p168
      %p171 = scmp.ne.s32.totalorder %s154, %s170
      %p172 = scmp.eq.s32.totalorder %s28, 0
      %p173 = por %p171, %p172
      %s174 = ssub.s32 %s29, %s41
      %p175 = scmp.eq.s32.totalorder %s174, 0
      %s177 = sadd.s32 %s176, 1
      %s178 = scalar_select %p175, %s176, %s177
      %p181 = pneg %p175
      %p182 = scmp.eq.s32.totalorder %s22, 1
      %p183 = por %p181, %p182
      %p184 = scmp.ne.s32.totalorder %s176, %s179
      %p185 = scmp.eq.s32.totalorder %s22, 0
      %p186 = por %p184, %p185
      %p187 = scmp.ne.s32.totalorder %s176, %s179
      %p188 = scmp.eq.s32.totalorder %s27, 1
      %p189 = por %p187, %p188
      %p190 = scmp.ne.s32.totalorder %s179, %s180
      %p191 = scmp.eq.s32.totalorder %s27, 0
      %p192 = por %p190, %p191
      %p193 = scmp.ne.s32.totalorder %s179, %s180
      %p194 = scmp.eq.s32.totalorder %s28, 1
      %p195 = por %p193, %p194
      %p197 = scmp.ne.s32.totalorder %s180, %s196
      %p198 = scmp.eq.s32.totalorder %s28, 0
      %p199 = por %p197, %p198
      %s201 = sadd.s32 %s200, 1
      %p204 = scmp.eq.s32.totalorder %s22, 1
      %p205 = scmp.ne.s32.totalorder %s200, %s202
      %p206 = scmp.eq.s32.totalorder %s22, 0
      %p207 = por %p205, %p206
      %p208 = scmp.ne.s32.totalorder %s200, %s202
      %p209 = scmp.eq.s32.totalorder %s27, 1
      %p210 = por %p208, %p209
      %p211 = scmp.ne.s32.totalorder %s202, %s203
      %p212 = scmp.eq.s32.totalorder %s27, 0
      %p213 = por %p211, %p212
      %p214 = scmp.ne.s32.totalorder %s202, %s203
      %p215 = scmp.eq.s32.totalorder %s28, 1
      %p216 = por %p214, %p215
      %p218 = scmp.ne.s32.totalorder %s203, %s217
      %p219 = scmp.eq.s32.totalorder %s28, 0
      %p220 = por %p218, %p219
      %s222 = sadd.s32 %s221, 1
      %p225 = scmp.eq.s32.totalorder %s22, 1
      %p226 = scmp.ne.s32.totalorder %s221, %s223
      %p227 = scmp.eq.s32.totalorder %s22, 0
      %p228 = por %p226, %p227
      %p229 = scmp.ne.s32.totalorder %s221, %s223
      %p230 = scmp.eq.s32.totalorder %s27, 1
      %p231 = por %p229, %p230
      %p232 = scmp.ne.s32.totalorder %s223, %s224
      %p233 = scmp.eq.s32.totalorder %s27, 0
      %p234 = por %p232, %p233
      %p235 = scmp.ne.s32.totalorder %s223, %s224
      %p236 = scmp.eq.s32.totalorder %s28, 1
      %p237 = por %p235, %p236
      %p239 = scmp.ne.s32.totalorder %s224, %s238
      %p240 = scmp.eq.s32.totalorder %s28, 0
      %p241 = por %p239, %p240
      %s243 = sadd.s32 %s242, 1
      %p246 = scmp.eq.s32.totalorder %s22, 1
      %p247 = scmp.ne.s32.totalorder %s242, %s244
      %p248 = scmp.eq.s32.totalorder %s22, 0
      %p249 = por %p247, %p248
      %p250 = scmp.ne.s32.totalorder %s242, %s244
      %p251 = scmp.eq.s32.totalorder %s27, 1
      %p252 = por %p250, %p251
      %p253 = scmp.ne.s32.totalorder %s244, %s245
      %p254 = scmp.eq.s32.totalorder %s27, 0
      %p255 = por %p253, %p254
      %p256 = scmp.ne.s32.totalorder %s244, %s245
      %p257 = scmp.eq.s32.totalorder %s28, 1
      %p258 = por %p256, %p257
      %p260 = scmp.ne.s32.totalorder %s245, %s259
      %p261 = scmp.eq.s32.totalorder %s28, 0
      %p262 = por %p260, %p261
      %s264 = sadd.s32 %s263, 1
      %p267 = scmp.eq.s32.totalorder %s22, 1
      %p268 = scmp.ne.s32.totalorder %s263, %s265
      %p269 = scmp.eq.s32.totalorder %s22, 0
      %p270 = por %p268, %p269
      %p271 = scmp.ne.s32.totalorder %s263, %s265
      %p272 = scmp.eq.s32.totalorder %s27, 1
      %p273 = por %p271, %p272
      %p274 = scmp.ne.s32.totalorder %s265, %s266
      %p275 = scmp.eq.s32.totalorder %s27, 0
      %p276 = por %p274, %p275
      %p277 = scmp.ne.s32.totalorder %s265, %s266
      %p278 = scmp.eq.s32.totalorder %s28, 1
      %p279 = por %p277, %p278
      %p281 = scmp.ne.s32.totalorder %s266, %s280
      %p282 = scmp.eq.s32.totalorder %s28, 0
      %p283 = por %p281, %p282
      %s284 = ssub.s32 %s29, %s41
      %s285 = ssub.s32 %s30, %s37
      %s286 = sor.u32 %s284, %s285
      %p287 = scmp.eq.s32.totalorder %s286, 0
      %s289 = sadd.s32 %s288, 1
      %s290 = scalar_select %p287, %s288, %s289
      %p293 = pneg %p287
      %p294 = scmp.eq.s32.totalorder %s22, 1
      %p295 = por %p293, %p294
      %p296 = scmp.ne.s32.totalorder %s288, %s291
      %p297 = scmp.eq.s32.totalorder %s22, 0
      %p298 = por %p296, %p297
      %p299 = scmp.ne.s32.totalorder %s288, %s291
      %p300 = scmp.eq.s32.totalorder %s27, 1
      %p301 = por %p299, %p300
      %p302 = scmp.ne.s32.totalorder %s291, %s292
      %p303 = scmp.eq.s32.totalorder %s27, 0
      %p304 = por %p302, %p303
      %p305 = scmp.ne.s32.totalorder %s291, %s292
      %p306 = scmp.eq.s32.totalorder %s28, 1
      %p307 = por %p305, %p306
      %p309 = scmp.ne.s32.totalorder %s292, %s308
      %p310 = scmp.eq.s32.totalorder %s28, 0
      %p311 = por %p309, %p310
      %s312 = ssub.s32 %s29, %s41
      %s313 = ssub.s32 %s30, %s37
      %s314 = sor.u32 %s312, %s313
      %p315 = scmp.eq.s32.totalorder %s314, 0
      %s317 = sadd.s32 %s316, 1
      %s318 = scalar_select %p315, %s316, %s317
      %p321 = pneg %p315
      %p322 = scmp.eq.s32.totalorder %s22, 1
      %p323 = por %p321, %p322
      %p324 = scmp.ne.s32.totalorder %s316, %s319
      %p325 = scmp.eq.s32.totalorder %s22, 0
      %p326 = por %p324, %p325
      %p327 = scmp.ne.s32.totalorder %s316, %s319
      %p328 = scmp.eq.s32.totalorder %s27, 1
      %p329 = por %p327, %p328
      %p330 = scmp.ne.s32.totalorder %s319, %s320
      %p331 = scmp.eq.s32.totalorder %s27, 0
      %p332 = por %p330, %p331
      %p333 = scmp.ne.s32.totalorder %s319, %s320
      %p334 = scmp.eq.s32.totalorder %s28, 1
      %p335 = por %p333, %p334
      %p337 = scmp.ne.s32.totalorder %s320, %s336
      %p338 = scmp.eq.s32.totalorder %s28, 0
      %p339 = por %p337, %p338
      %s340 = ssub.s32 %s29, %s41
      %s341 = ssub.s32 %s30, %s37
      %s342 = sor.u32 %s340, %s341
      %p343 = scmp.eq.s32.totalorder %s342, 0
      %s345 = sadd.s32 %s344, 1
      %s346 = scalar_select %p343, %s344, %s345
      %p349 = pneg %p343
      %p350 = scmp.eq.s32.totalorder %s22, 1
      %p351 = por %p349, %p350
      %p352 = scmp.ne.s32.totalorder %s344, %s347
      %p353 = scmp.eq.s32.totalorder %s22, 0
      %p354 = por %p352, %p353
      %p355 = scmp.ne.s32.totalorder %s344, %s347
      %p356 = scmp.eq.s32.totalorder %s27, 1
      %p357 = por %p355, %p356
      %p358 = scmp.ne.s32.totalorder %s347, %s348
      %p359 = scmp.eq.s32.totalorder %s27, 0
      %p360 = por %p358, %p359
      %p361 = scmp.ne.s32.totalorder %s347, %s348
      %p362 = scmp.eq.s32.totalorder %s28, 1
      %p363 = por %p361, %p362
      %p365 = scmp.ne.s32.totalorder %s348, %s364
      %p366 = scmp.eq.s32.totalorder %s28, 0
      %p367 = por %p365, %p366
      %p368 = scmp.le.s32.totalorder 1, %s22
      %p369 = scmp.lt.s32.totalorder %s22, 3
      %p370 = pnand %p368, %p369
      %p371 = pneg %p370
      // Predicated region
      $region9: #{egnn_pallas.2} parent=5 // pred_check
        _
      $region10: #{egnn_pallas.2} parent=5 // pred_check_branch
        %373 = sbr.rel (%p370) target = $region12
      $region11: #{egnn_pallas.2} parent=5 // pred_region
        %s374 = ssub.s32 %s22, 1
        // Predicated region
        $region13: #{egnn_pallas.2} parent=11 // pred_check
          %p375 = pneg %p213
        $region14: #{egnn_pallas.2} parent=11 // pred_check_branch
          %377 = sbr.rel (%p375) target = $region16
        $region15: #{egnn_pallas.2} parent=11 // pred_region
          _
        $region16: #{egnn_pallas.2} parent=11 // pred_fallthru
          _
        // Predicated region
        $region17: #{egnn_pallas.2} parent=11 // pred_check
          %p378 = pneg %p234
        $region18: #{egnn_pallas.2} parent=11 // pred_check_branch
          %380 = sbr.rel (%p378) target = $region20
        $region19: #{egnn_pallas.2} parent=11 // pred_region
          _
        $region20: #{egnn_pallas.2} parent=11 // pred_fallthru
          _
        // Predicated region
        $region21: #{egnn_pallas.2} parent=11 // pred_check
          %p381 = pneg %p255
        $region22: #{egnn_pallas.2} parent=11 // pred_check_branch
          %383 = sbr.rel (%p381) target = $region24
        $region23: #{egnn_pallas.2} parent=11 // pred_region
          _
        $region24: #{egnn_pallas.2} parent=11 // pred_fallthru
          _
        // Predicated region
        $region25: #{egnn_pallas.2} parent=11 // pred_check
          %p384 = pneg %p276
        $region26: #{egnn_pallas.2} parent=11 // pred_check_branch
          %386 = sbr.rel (%p384) target = $region28
        $region27: #{egnn_pallas.2} parent=11 // pred_region
          _
        $region28: #{egnn_pallas.2} parent=11 // pred_fallthru
          _
      $region12: #{egnn_pallas.2} parent=5 // pred_fallthru
        _
      %p387 = scmp.lt.s32.totalorder %s22, 2
      // Predicated region
      $region29: #{egnn_pallas.2} parent=5 // pred_check
        %p388 = pneg %p387
      $region30: #{egnn_pallas.2} parent=5 // pred_check_branch
        %390 = sbr.rel (%p388) target = $region32
      $region31: #{egnn_pallas.2} parent=5 // pred_region
        // Predicated region
        $region33: #{egnn_pallas.2} parent=31 // pred_check
          %p391 = pneg %p54
        $region34: #{egnn_pallas.2} parent=31 // pred_check_branch
          %393 = sbr.rel (%p391) target = $region36
        $region35: #{egnn_pallas.2} parent=31 // pred_region
          %p394 = scmp.lt.s32.totalorder %s29, 1
          %s395 = scalar_select %p394, %s29, 1
          %s396 = smul.addr %s395, 8
          %s397 = scalar_lea.vmem %s0, %s396
        $region36: #{egnn_pallas.2} parent=31 // pred_fallthru
          _
        // Predicated region
        $region37: #{egnn_pallas.2} parent=31 // pred_check
          %p398 = pneg %p80
        $region38: #{egnn_pallas.2} parent=31 // pred_check_branch
          %400 = sbr.rel (%p398) target = $region40
        $region39: #{egnn_pallas.2} parent=31 // pred_region
          %p401 = scmp.lt.s32.totalorder %s29, 1
          %s402 = scalar_select %p401, %s29, 1
          %s403 = scalar_lea.vmem %s1, %s402
        $region40: #{egnn_pallas.2} parent=31 // pred_fallthru
          _
        // Predicated region
        $region41: #{egnn_pallas.2} parent=31 // pred_check
          %p404 = pneg %p106
        $region42: #{egnn_pallas.2} parent=31 // pred_check_branch
          %406 = sbr.rel (%p404) target = $region44
        $region43: #{egnn_pallas.2} parent=31 // pred_region
          %p407 = scmp.lt.s32.totalorder %s29, 1
          %s408 = scalar_select %p407, %s29, 1
          %s409 = smul.addr %s408, 8
          %s410 = scalar_lea.vmem %s2, %s409
        $region44: #{egnn_pallas.2} parent=31 // pred_fallthru
          _
        // Predicated region
        $region45: #{egnn_pallas.2} parent=31 // pred_check
          %p411 = pneg %p134
        $region46: #{egnn_pallas.2} parent=31 // pred_check_branch
          %413 = sbr.rel (%p411) target = $region48
        $region47: #{egnn_pallas.2} parent=31 // pred_region
          %s414 = smul.u32 8, %s30
          %p415 = scmp.lt.s32.totalorder %s29, 1
          %s416 = scalar_select %p415, %s29, 1
          %p417 = scmp.lt.s32.totalorder %s414, 7
          %s418 = scalar_select %p417, %s414, 7
          %s419 = smul.addr %s416, 8
          %s420 = sadd.s32 %s418, %s419
          %s421 = smul.addr %s420, 8
          %s422 = scalar_lea.vmem %s3, %s421
          %s423 = smul.u32 8, %s30
        $region48: #{egnn_pallas.2} parent=31 // pred_fallthru
          _
        // Predicated region
        $region49: #{egnn_pallas.2} parent=31 // pred_check
          %p424 = pneg %p160
        $region50: #{egnn_pallas.2} parent=31 // pred_check_branch
          %426 = sbr.rel (%p424) target = $region52
        $region51: #{egnn_pallas.2} parent=31 // pred_region
          %p427 = scmp.lt.s32.totalorder %s29, 1
          %s428 = scalar_select %p427, %s29, 1
          %s429 = smul.addr %s428, 8
          %s430 = scalar_lea.vmem %s4, %s429
        $region52: #{egnn_pallas.2} parent=31 // pred_fallthru
          _
        // Predicated region
        $region53: #{egnn_pallas.2} parent=31 // pred_check
          %p431 = pneg %p186
        $region54: #{egnn_pallas.2} parent=31 // pred_check_branch
          %433 = sbr.rel (%p431) target = $region56
        $region55: #{egnn_pallas.2} parent=31 // pred_region
          %p434 = scmp.lt.s32.totalorder %s29, 1
          %s435 = scalar_select %p434, %s29, 1
          %s436 = smul.addr %s435, 8
          %s437 = scalar_lea.vmem %s5, %s436
        $region56: #{egnn_pallas.2} parent=31 // pred_fallthru
          _
      $region32: #{egnn_pallas.2} parent=5 // pred_fallthru
        _
      %p438 = scmp.le.s32.totalorder 1, %s22
      %p439 = scmp.lt.s32.totalorder %s22, 3
      %p440 = pnand %p438, %p439
      %p441 = pneg %p440
      // Predicated region
      $region57: #{egnn_pallas.2} parent=5 // pred_check
        _
      $region58: #{egnn_pallas.2} parent=5 // pred_check_branch
        %443 = sbr.rel (%p440) target = $region60
      $region59: #{egnn_pallas.2} parent=5 // pred_region
        %s444 = ssub.s32 %s22, 1
        %p445 = scmp.lt.s32.totalorder %s31, 1
        %s446 = scalar_select %p445, %s31, 1
        %s447 = smul.addr %s446, 8
        %s448 = scalar_lea.vmem %s0, %s447
        %p449 = pneg %p60
        %p450 = pneg %p57
        %p451 = scmp.lt.s32.totalorder %s31, 1
        %s452 = scalar_select %p451, %s31, 1
        %s453 = scalar_lea.vmem %s1, %s452
        %p454 = pneg %p86
        %p455 = pneg %p83
        %p456 = scmp.lt.s32.totalorder %s31, 1
        %s457 = scalar_select %p456, %s31, 1
        %s458 = smul.addr %s457, 8
        %s459 = scalar_lea.vmem %s2, %s458
        %p460 = pneg %p112
        %p461 = pneg %p109
        %s462 = smul.u32 8, %s32
        %p463 = scmp.lt.s32.totalorder %s31, 1
        %s464 = scalar_select %p463, %s31, 1
        %p465 = scmp.lt.s32.totalorder %s462, 7
        %s466 = scalar_select %p465, %s462, 7
        %s467 = smul.addr %s464, 8
        %s468 = sadd.s32 %s466, %s467
        %s469 = smul.addr %s468, 8
        %s470 = scalar_lea.vmem %s3, %s469
        %p471 = pneg %p140
        %p472 = pneg %p137
        %p473 = scmp.lt.s32.totalorder %s31, 1
        %s474 = scalar_select %p473, %s31, 1
        %s475 = smul.addr %s474, 8
        %s476 = scalar_lea.vmem %s4, %s475
        %p477 = pneg %p166
        %p478 = pneg %p163
        %p479 = scmp.lt.s32.totalorder %s31, 1
        %s480 = scalar_select %p479, %s31, 1
        %s481 = smul.addr %s480, 8
        %s482 = scalar_lea.vmem %s5, %s481
        %p483 = pneg %p192
        %p484 = pneg %p189
        %p485 = pneg %p213
        %p486 = pneg %p210
        %p487 = pneg %p234
        %p488 = pneg %p231
        %p489 = pneg %p255
        %p490 = pneg %p252
        %p491 = pneg %p276
        %p492 = pneg %p273
        %p493 = pneg %p304
        %p494 = pneg %p301
        %s495 = sand.u32 %s291, 1
        %s496 = scalar_lea.sflag [#allocation4], %s495
        %s497 = sand.u32 %s291, 1
        %s498 = smul.addr %s497, 8
        %s499 = scalar_lea.vmem [#allocation3], %s498
        %p500 = pneg %p332
        %p501 = pneg %p329
        %p502 = scmp.lt.s32.totalorder %s31, 1
        %s503 = scalar_select %p502, %s31, 1
        %p504 = scmp.lt.s32.totalorder %s32, 0
        %s505 = scalar_select %p504, %s32, 0
        %s506 = sadd.s32 %s505, %s503
        %s507 = smul.addr %s506, 8
        %s508 = scalar_lea.vmem %s11, %s507
        %p509 = pneg %p360
        %p510 = pneg %p357
        %s511 = smul.u32 8, %s32
        %p512 = scmp.lt.s32.totalorder %s31, 1
        %s513 = scalar_select %p512, %s31, 1
        %p514 = scmp.lt.s32.totalorder %s511, 7
        %s515 = scalar_select %p514, %s511, 7
        %s516 = smul.addr %s513, 8
        %s517 = sadd.s32 %s515, %s516
        %s518 = smul.addr %s517, 8
        %s519 = scalar_lea.vmem %s12, %s518
        %p520 = scmp.lt.s32.totalorder %s31, 1
        %s521 = scalar_select %p520, %s31, 1
        %s522 = smul.addr %s521, 8
        %s523 = scalar_lea.vmem %s0, %s522
        %p524 = scmp.lt.s32.totalorder %s31, 1
        %s525 = scalar_select %p524, %s31, 1
        %s526 = scalar_lea.vmem %s1, %s525
        %p527 = scmp.lt.s32.totalorder %s31, 1
        %s528 = scalar_select %p527, %s31, 1
        %s529 = smul.addr %s528, 8
        %s530 = scalar_lea.vmem %s2, %s529
        %s531 = smul.u32 8, %s32
        %p532 = scmp.lt.s32.totalorder %s31, 1
        %s533 = scalar_select %p532, %s31, 1
        %p534 = scmp.lt.s32.totalorder %s531, 7
        %s535 = scalar_select %p534, %s531, 7
        %s536 = smul.addr %s533, 8
        %s537 = sadd.s32 %s535, %s536
        %s538 = smul.addr %s537, 8
        %s539 = scalar_lea.vmem %s3, %s538
        %s540 = smul.u32 8, %s32
        %p541 = scmp.lt.s32.totalorder %s31, 1
        %s542 = scalar_select %p541, %s31, 1
        %s543 = smul.addr %s542, 8
        %s544 = scalar_lea.vmem %s4, %s543
        %p545 = scmp.lt.s32.totalorder %s31, 1
        %s546 = scalar_select %p545, %s31, 1
        %s547 = smul.addr %s546, 8
        %s548 = scalar_lea.vmem %s5, %s547
        %p549 = scmp.lt.s32.totalorder %s31, 1
        %s550 = scalar_select %p549, %s31, 1
        %p551 = scmp.lt.s32.totalorder %s32, 0
        %s552 = scalar_select %p551, %s32, 0
        %s553 = sadd.s32 %s552, %s550
        %s554 = smul.addr %s553, 8
        %s555 = scalar_lea.vmem %s11, %s554
        %s556 = smul.u32 8, %s32
        %p557 = scmp.lt.s32.totalorder %s31, 1
        %s558 = scalar_select %p557, %s31, 1
        %p559 = scmp.lt.s32.totalorder %s556, 7
        %s560 = scalar_select %p559, %s556, 7
        %s561 = smul.addr %s558, 8
        %s562 = sadd.s32 %s560, %s561
        %s563 = smul.addr %s562, 8
        %s564 = scalar_lea.vmem %s12, %s563
        %s565 = smul.u32 8, %s32
        %s566 = smul.u32 %s32, 8
        %v567 = vld [vmem:[%s530] sm:$0xff]
        %v568 = vld [vmem:[%s544] sm:$0xff]
        %v569 = vld [vmem:[%s548] sm:$0xff]
        %v570 = vld [vmem:[%s526] sm:$0x1]
        %p571 = scmp.eq.s32.totalorder %s32, 0
        // Predicated region
        $region61: #{egnn_pallas.2} parent=59 // pred_check
          %p572 = pneg %p571
        $region62: #{egnn_pallas.2} parent=59 // pred_check_branch
          %574 = sbr.rel (%p572) target = $region64
        $region63: #{egnn_pallas.2} parent=59 // pred_region
          %v575 = vld [vmem:[%s6 + $0x10] sm:$0xff]
          %v576 = vld [vmem:[%s6 + $0x18] sm:$0xff]
          %v577 = vld [vmem:[%s7] sm:$0x1]
          %v578 = vlaneseq
          %v579 = vshrl.u32 %v578, 7
          %v580 = vsub.s32 0, %v579
          %v581 = vrot.slane %v577, %v580
          %vm582 = vcmask 130048
          %v584 = vsel %vm582, %v567, 0
          %586 = vmatprep.subr.mxu0 0.0
          %587 = vmatpush1.msra.mxu0 %v575
          %588 = vmatprep.subr.mxu0 0.0
          %589 = vmatpush1.msra.mxu0 %v576
          %590 = vmatprep.subr.mxu0 0.0
          %591 = vmatpush1.msra.mxu0 0.0
          %592 = vmatprep.subr.mxu0 0.0
          %593 = vmatpush1.msra.mxu0 0.0
          %594 = vmatprep.subr.mxu0 0.0
          %595 = vmatpush1.msra.mxu0 0.0
          %596 = vmatprep.subr.mxu0 0.0
          %597 = vmatpush1.msra.mxu0 0.0
          %598 = vmatprep.subr.mxu0 0.0
          %599 = vmatpush1.msra.mxu0 0.0
          %600 = vmatprep.subr.mxu0 0.0
          %601 = vmatpush1.msra.mxu0 0.0
          %602 = vmatprep.subr.mxu0 0.0
          %603 = vmatpush1.msra.mxu0 0.0
          %604 = vmatprep.subr.mxu0 0.0
          %605 = vmatpush1.msra.mxu0 0.0
          %606 = vmatprep.subr.mxu0 0.0
          %607 = vmatpush1.msra.mxu0 0.0
          %608 = vmatprep.subr.mxu0 0.0
          %609 = vmatpush1.msra.mxu0 0.0
          %610 = vmatprep.subr.mxu0 0.0
          %611 = vmatpush1.msra.mxu0 0.0
          %612 = vmatprep.subr.mxu0 0.0
          %613 = vmatpush1.msra.mxu0 0.0
          %614 = vmatprep.subr.mxu0 0.0
          %615 = vmatpush1.msra.mxu0 0.0
          %616 = vmatprep.subr.mxu0 0.0
          %617 = vmatpush1.msra.mxu0 0.0
          %618 = vmatprep.subr.mxu0 0.0
          %619 = vmatpush1.msra.mxu0 0.0
          %620 = vmatprep.subr.mxu0 0.0
          %621 = vmatpush1.msra.mxu0 0.0
          %622 = vmatprep.subr.mxu0 0.0
          %623 = vmatpush1.msra.mxu0 0.0
          %624 = vmatprep.subr.mxu0 0.0
          %625 = vmatpush1.msra.mxu0 0.0
          %626 = vmatprep.subr.mxu0 0.0
          %627 = vmatpush1.msra.mxu0 0.0
          %628 = vmatprep.subr.mxu0 0.0
          %629 = vmatpush1.msra.mxu0 0.0
          %630 = vmatprep.subr.mxu0 0.0
          %631 = vmatpush1.msra.mxu0 0.0
          %632 = vmatprep.subr.mxu0 0.0
          %633 = vmatpush1.msra.mxu0 0.0
          %634 = vmatprep.subr.mxu0 0.0
          %635 = vmatpush1.msra.mxu0 0.0
          %636 = vmatprep.subr.mxu0 0.0
          %637 = vmatpush1.msra.mxu0 0.0
          %638 = vmatprep.subr.mxu0 0.0
          %639 = vmatpush1.msra.mxu0 0.0
          %640 = vmatprep.subr.mxu0 0.0
          %641 = vmatpush1.msra.mxu0 0.0
          %642 = vmatprep.subr.mxu0 0.0
          %643 = vmatpush1.msra.mxu0 0.0
          %644 = vmatprep.subr.mxu0 0.0
          %645 = vmatpush1.msra.mxu0 0.0
          %646 = vmatprep.subr.mxu0 0.0
          %647 = vmatpush1.msra.mxu0 0.0
          %648 = vmatprep.subr.mxu0 0.0
          %649 = vmatpush1.msra.mxu0 0.0
          %650 = vmatprep.mubr.f32.mxu0 0.0
          %651 = vmatmul.mubr.f32.gmra.mrb[0].mxu0 %v584
          %v652 = vpop.f32.mrb[0].mxu0
          %v653 = vadd.f32 %v581, %v652
          %v654 = vpop.f32.mrb[0].mxu0
          %655 = vdwg.mxu0
          %vm656 = vcmask 523264
          %657 = vst.msk [vmem:[#allocation2] sm:$0xff] %vm656, %v653
        $region64: #{egnn_pallas.2} parent=59 // pred_fallthru
          _
        %s658 = scalar_lea.vmem %s530, %s566
        %v659 = vld [vmem:[%s658] sm:$0xff]
        %s660 = scalar_lea.vmem %s544, %s566
        %v661 = vld [vmem:[%s660] sm:$0xff]
        %s662 = scalar_lea.vmem %s548, %s566
        %v663 = vld [vmem:[%s662] sm:$0xff]
        %s664 = scalar_lea.vmem %s523, %s566
        %v665 = vld [vmem:[%s664] sm:$0xff]
        %v666 = vlaneseq
        %v667 = vshrl.u32 %v666, 7
        %v668 = vstv %s566
        %v669 = vadd.s32 %v668, %v667
        %v670 = vlaneseq
        %v671 = vand.u32 %v670, 127
        %vm672 = vcmp.ne.s32.totalorder %v669, %v671
        %v673 = vsel %vm672, 1, 0
        %v674 = vcvt.s32.f32 %v673
        %676 = vset.pattern.permute.xlu0 0
        %677 = vperm.xlu0 %676, %v665
        %v678 = vpop.permute.xlu0 %677
        %v681 = vlaneseq
        %v682 = vshrl.u32 %v681, 7
        %v683 = vsub.s32 0, %v682
        %v684 = vrot.slane %v570, %v683
        %v686 = vmul.f32 %v678, %v684
        %v687 = vmul.f32 %v686, %v674
        %v688 = vlaneseq
        %v689 = vshrl.u32 %v688, 7
        %v690 = vsub.s32 0, %v689
        %v691 = vrot.slane %v687, %v690
        %693 = vbcast.lane.b32.xlu0 %v691, 256
        %v694 = vpop.permute.xlu0 %693
        %v695 = vlaneseq
        %v696 = vshrl.u32 %v695, 7
        %v697 = vsub.s32 1, %v696
        %v698 = vrot.slane %v687, %v697
        %700 = vbcast.lane.b32.xlu0 %v698, 256
        %v701 = vpop.permute.xlu0 %700
        %v702 = vlaneseq
        %v703 = vshrl.u32 %v702, 7
        %v704 = vsub.s32 2, %v703
        %v705 = vrot.slane %v687, %v704
        %707 = vbcast.lane.b32.xlu0 %v705, 256
        %v708 = vpop.permute.xlu0 %707
        %v709 = vlaneseq
        %v710 = vshrl.u32 %v709, 7
        %v711 = vsub.s32 3, %v710
        %v712 = vrot.slane %v687, %v711
        %714 = vbcast.lane.b32.xlu0 %v712, 256
        %v715 = vpop.permute.xlu0 %714
        %v716 = vlaneseq
        %v717 = vshrl.u32 %v716, 7
        %v718 = vsub.s32 4, %v717
        %v719 = vrot.slane %v687, %v718
        %721 = vbcast.lane.b32.xlu0 %v719, 256
        %v722 = vpop.permute.xlu0 %721
        %v723 = vlaneseq
        %v724 = vshrl.u32 %v723, 7
        %v725 = vsub.s32 5, %v724
        %v726 = vrot.slane %v687, %v725
        %728 = vbcast.lane.b32.xlu0 %v726, 256
        %v729 = vpop.permute.xlu0 %728
        %v730 = vlaneseq
        %v731 = vshrl.u32 %v730, 7
        %v732 = vsub.s32 6, %v731
        %v733 = vrot.slane %v687, %v732
        %735 = vbcast.lane.b32.xlu0 %v733, 256
        %v736 = vpop.permute.xlu0 %735
        %v737 = vlaneseq
        %v738 = vshrl.u32 %v737, 7
        %v739 = vsub.s32 7, %v738
        %v740 = vrot.slane %v687, %v739
        %742 = vbcast.lane.b32.xlu0 %v740, 256
        %v743 = vpop.permute.xlu0 %742
        %v745 = vcombine.high %v661, %v661
        %v747 = vunpack.c.l.s4 1966171168
        %v748 = vunpack.c.0.s8 %v747
        %v749 = vlaneseq
        %v750 = vshrl.u32 %v749, 7
        %v751 = vsub.s32 %v748, %v750
        %v752 = vrot.slane %v661, %v751
        %v754 = vunpack.c.l.s4 1966171168
        %v755 = vunpack.c.0.s8 %v754
        %v756 = vlaneseq
        %v757 = vshrl.u32 %v756, 7
        %v758 = vsub.s32 %v755, %v757
        %v759 = vrot.slane %v745, %v758
        %v760 = vcombine.high %v752, %v752
        %v761 = vcombine.high %v759, %v759
        %v763 = vunpack.c.l.s4 1966171168
        %v764 = vunpack.c.0.s8 %v763
        %v765 = vlaneseq
        %v766 = vshrl.u32 %v765, 7
        %v767 = vsub.s32 %v764, %v766
        %v768 = vrot.slane %v752, %v767
        %v770 = vunpack.c.l.s4 1966171168
        %v771 = vunpack.c.0.s8 %v770
        %v772 = vlaneseq
        %v773 = vshrl.u32 %v772, 7
        %v774 = vsub.s32 %v771, %v773
        %v775 = vrot.slane %v759, %v774
        %v777 = vunpack.c.l.s4 1966171168
        %v778 = vunpack.c.0.s8 %v777
        %v779 = vlaneseq
        %v780 = vshrl.u32 %v779, 7
        %v781 = vsub.s32 %v778, %v780
        %v782 = vrot.slane %v760, %v781
        %v784 = vunpack.c.l.s4 1966171168
        %v785 = vunpack.c.0.s8 %v784
        %v786 = vlaneseq
        %v787 = vshrl.u32 %v786, 7
        %v788 = vsub.s32 %v785, %v787
        %v789 = vrot.slane %v761, %v788
        %v790 = vcombine.high %v768, %v768
        %v791 = vcombine.high %v775, %v775
        %v792 = vcombine.high %v782, %v782
        %v793 = vcombine.high %v789, %v789
        %v794 = vlaneseq
        %v795 = vshrl.u32 %v794, 7
        %v796 = vsub.s32 0, %v795
        %v797 = vrot.slane %v768, %v796
        %v798 = vlaneseq
        %v799 = vshrl.u32 %v798, 7
        %v800 = vsub.s32 0, %v799
        %v801 = vrot.slane %v782, %v800
        %v802 = vlaneseq
        %v803 = vshrl.u32 %v802, 7
        %v804 = vsub.s32 0, %v803
        %v805 = vrot.slane %v790, %v804
        %v806 = vlaneseq
        %v807 = vshrl.u32 %v806, 7
        %v808 = vsub.s32 0, %v807
        %v809 = vrot.slane %v792, %v808
        %v810 = vlaneseq
        %v811 = vshrl.u32 %v810, 7
        %v812 = vsub.s32 0, %v811
        %v813 = vrot.slane %v775, %v812
        %v814 = vlaneseq
        %v815 = vshrl.u32 %v814, 7
        %v816 = vsub.s32 0, %v815
        %v817 = vrot.slane %v789, %v816
        %v818 = vlaneseq
        %v819 = vshrl.u32 %v818, 7
        %v820 = vsub.s32 0, %v819
        %v821 = vrot.slane %v791, %v820
        %v822 = vlaneseq
        %v823 = vshrl.u32 %v822, 7
        %v824 = vsub.s32 0, %v823
        %v825 = vrot.slane %v793, %v824
        %v834 = vsub.f32 %v797, %v568
        %v835 = vsub.f32 %v801, %v568
        %v836 = vsub.f32 %v805, %v568
        %v837 = vsub.f32 %v809, %v568
        %v838 = vsub.f32 %v813, %v568
        %v839 = vsub.f32 %v817, %v568
        %v840 = vsub.f32 %v821, %v568
        %v841 = vsub.f32 %v825, %v568
        %v842 = vmul.f32 %v834, %v834
        %v843 = vmul.f32 %v835, %v835
        %v844 = vmul.f32 %v836, %v836
        %v845 = vmul.f32 %v837, %v837
        %v846 = vmul.f32 %v838, %v838
        %v847 = vmul.f32 %v839, %v839
        %v848 = vmul.f32 %v840, %v840
        %v849 = vmul.f32 %v841, %v841
        %vm850 = vcmask 23552
        %v851 = vsel %vm850, %v842, 0.0
        %852 = vadd.xlane.f32.xlu0 %v851
        %v853 = vpop.xlane.xlu0 %852
        %v854 = vsel %vm850, %v843, 0.0
        %855 = vadd.xlane.f32.xlu0 %v854
        %v856 = vpop.xlane.xlu0 %855
        %v857 = vsel %vm850, %v844, 0.0
        %858 = vadd.xlane.f32.xlu0 %v857
        %v859 = vpop.xlane.xlu0 %858
        %v860 = vsel %vm850, %v845, 0.0
        %861 = vadd.xlane.f32.xlu0 %v860
        %v862 = vpop.xlane.xlu0 %861
        %v863 = vsel %vm850, %v846, 0.0
        %864 = vadd.xlane.f32.xlu0 %v863
        %v865 = vpop.xlane.xlu0 %864
        %v866 = vsel %vm850, %v847, 0.0
        %867 = vadd.xlane.f32.xlu0 %v866
        %v868 = vpop.xlane.xlu0 %867
        %v869 = vsel %vm850, %v848, 0.0
        %870 = vadd.xlane.f32.xlu0 %v869
        %v871 = vpop.xlane.xlu0 %870
        %v872 = vsel %vm850, %v849, 0.0
        %873 = vadd.xlane.f32.xlu0 %v872
        %v874 = vpop.xlane.xlu0 %873
        %v876 = vcombine.high %v663, %v663
        %v878 = vunpack.c.l.s4 1966171168
        %v879 = vunpack.c.0.s8 %v878
        %v880 = vlaneseq
        %v881 = vshrl.u32 %v880, 7
        %v882 = vsub.s32 %v879, %v881
        %v883 = vrot.slane %v663, %v882
        %v885 = vunpack.c.l.s4 1966171168
        %v886 = vunpack.c.0.s8 %v885
        %v887 = vlaneseq
        %v888 = vshrl.u32 %v887, 7
        %v889 = vsub.s32 %v886, %v888
        %v890 = vrot.slane %v876, %v889
        %v891 = vcombine.high %v883, %v883
        %v892 = vcombine.high %v890, %v890
        %v894 = vunpack.c.l.s4 1966171168
        %v895 = vunpack.c.0.s8 %v894
        %v896 = vlaneseq
        %v897 = vshrl.u32 %v896, 7
        %v898 = vsub.s32 %v895, %v897
        %v899 = vrot.slane %v883, %v898
        %v901 = vunpack.c.l.s4 1966171168
        %v902 = vunpack.c.0.s8 %v901
        %v903 = vlaneseq
        %v904 = vshrl.u32 %v903, 7
        %v905 = vsub.s32 %v902, %v904
        %v906 = vrot.slane %v890, %v905
        %v908 = vunpack.c.l.s4 1966171168
        %v909 = vunpack.c.0.s8 %v908
        %v910 = vlaneseq
        %v911 = vshrl.u32 %v910, 7
        %v912 = vsub.s32 %v909, %v911
        %v913 = vrot.slane %v891, %v912
        %v915 = vunpack.c.l.s4 1966171168
        %v916 = vunpack.c.0.s8 %v915
        %v917 = vlaneseq
        %v918 = vshrl.u32 %v917, 7
        %v919 = vsub.s32 %v916, %v918
        %v920 = vrot.slane %v892, %v919
        %v921 = vcombine.high %v899, %v899
        %v922 = vcombine.high %v906, %v906
        %v923 = vcombine.high %v913, %v913
        %v924 = vcombine.high %v920, %v920
        %v925 = vlaneseq
        %v926 = vshrl.u32 %v925, 7
        %v927 = vsub.s32 0, %v926
        %v928 = vrot.slane %v899, %v927
        %v929 = vlaneseq
        %v930 = vshrl.u32 %v929, 7
        %v931 = vsub.s32 0, %v930
        %v932 = vrot.slane %v913, %v931
        %v933 = vlaneseq
        %v934 = vshrl.u32 %v933, 7
        %v935 = vsub.s32 0, %v934
        %v936 = vrot.slane %v921, %v935
        %v937 = vlaneseq
        %v938 = vshrl.u32 %v937, 7
        %v939 = vsub.s32 0, %v938
        %v940 = vrot.slane %v923, %v939
        %v941 = vlaneseq
        %v942 = vshrl.u32 %v941, 7
        %v943 = vsub.s32 0, %v942
        %v944 = vrot.slane %v906, %v943
        %v945 = vlaneseq
        %v946 = vshrl.u32 %v945, 7
        %v947 = vsub.s32 0, %v946
        %v948 = vrot.slane %v920, %v947
        %v949 = vlaneseq
        %v950 = vshrl.u32 %v949, 7
        %v951 = vsub.s32 0, %v950
        %v952 = vrot.slane %v922, %v951
        %v953 = vlaneseq
        %v954 = vshrl.u32 %v953, 7
        %v955 = vsub.s32 0, %v954
        %v956 = vrot.slane %v924, %v955
        %v965 = vmul.f32 %v928, %v569
        %v966 = vmul.f32 %v932, %v569
        %v967 = vmul.f32 %v936, %v569
        %v968 = vmul.f32 %v940, %v569
        %v969 = vmul.f32 %v944, %v569
        %v970 = vmul.f32 %v948, %v569
        %v971 = vmul.f32 %v952, %v569
        %v972 = vmul.f32 %v956, %v569
        %vm973 = vcmask 31744
        %v974 = vsel %vm973, %v965, 0.0
        %975 = vadd.xlane.f32.xlu0 %v974
        %v976 = vpop.xlane.xlu0 %975
        %v977 = vsel %vm973, %v966, 0.0
        %978 = vadd.xlane.f32.xlu0 %v977
        %v979 = vpop.xlane.xlu0 %978
        %v980 = vsel %vm973, %v967, 0.0
        %981 = vadd.xlane.f32.xlu0 %v980
        %v982 = vpop.xlane.xlu0 %981
        %v983 = vsel %vm973, %v968, 0.0
        %984 = vadd.xlane.f32.xlu0 %v983
        %v985 = vpop.xlane.xlu0 %984
        %v986 = vsel %vm973, %v969, 0.0
        %987 = vadd.xlane.f32.xlu0 %v986
        %v988 = vpop.xlane.xlu0 %987
        %v989 = vsel %vm973, %v970, 0.0
        %990 = vadd.xlane.f32.xlu0 %v989
        %v991 = vpop.xlane.xlu0 %990
        %v992 = vsel %vm973, %v971, 0.0
        %993 = vadd.xlane.f32.xlu0 %v992
        %v994 = vpop.xlane.xlu0 %993
        %v995 = vsel %vm973, %v972, 0.0
        %996 = vadd.xlane.f32.xlu0 %v995
        %v997 = vpop.xlane.xlu0 %996
        %v998 = vand.u32 2147483647, %v976
        %v999 = vand.u32 2147483647, %v979
        %v1000 = vand.u32 2147483647, %v982
        %v1001 = vand.u32 2147483647, %v985
        %v1002 = vand.u32 2147483647, %v988
        %v1003 = vand.u32 2147483647, %v991
        %v1004 = vand.u32 2147483647, %v994
        %v1005 = vand.u32 2147483647, %v997
        %v1006 = vmul.f32 %v569, %v569
        %v1007 = vsel %vm973, %v1006, 0.0
        %1008 = vadd.xlane.f32.xlu0 %v1007
        %v1009 = vpop.xlane.xlu0 %1008
        %v1010 = vmax.f32 %v1009, 1e-24
        %v1011 = vsub.f32 0.0, %v569
        %vm1012 = vcmask 7168
        %v1013 = vsel %vm1012, %v569, %v1011
        %v1014 = vrcp.pop %v1010
        %v1015 = vmul.f32 %v1013, %v1014
        %v1016 = vmul.f32 %v1015, %v834
        %v1017 = vmul.f32 %v1015, %v835
        %v1018 = vmul.f32 %v1015, %v836
        %v1019 = vmul.f32 %v1015, %v837
        %v1020 = vmul.f32 %v1015, %v838
        %v1021 = vmul.f32 %v1015, %v839
        %v1022 = vmul.f32 %v1015, %v840
        %v1023 = vmul.f32 %v1015, %v841
        %1032 = vrot.lane.b32.xlu0 %v834, 2
        %v1033 = vpop.permute.xlu0 %1032
        %1034 = vrot.lane.b32.xlu0 %v835, 2
        %v1035 = vpop.permute.xlu0 %1034
        %1036 = vrot.lane.b32.xlu0 %v836, 2
        %v1037 = vpop.permute.xlu0 %1036
        %1038 = vrot.lane.b32.xlu0 %v837, 2
        %v1039 = vpop.permute.xlu0 %1038
        %1040 = vrot.lane.b32.xlu0 %v838, 2
        %v1041 = vpop.permute.xlu0 %1040
        %1042 = vrot.lane.b32.xlu0 %v839, 2
        %v1043 = vpop.permute.xlu0 %1042
        %1044 = vrot.lane.b32.xlu0 %v840, 2
        %v1045 = vpop.permute.xlu0 %1044
        %1046 = vrot.lane.b32.xlu0 %v841, 2
        %v1047 = vpop.permute.xlu0 %1046
        %v1056 = vmul.f32 %v1015, %v1033
        %v1057 = vmul.f32 %v1015, %v1035
        %v1058 = vmul.f32 %v1015, %v1037
        %v1059 = vmul.f32 %v1015, %v1039
        %v1060 = vmul.f32 %v1015, %v1041
        %v1061 = vmul.f32 %v1015, %v1043
        %v1062 = vmul.f32 %v1015, %v1045
        %v1063 = vmul.f32 %v1015, %v1047
        %1072 = vrot.lane.b32.xlu0 %v1056, 127
        %v1073 = vpop.permute.xlu0 %1072
        %1074 = vrot.lane.b32.xlu0 %v1057, 127
        %v1075 = vpop.permute.xlu0 %1074
        %1076 = vrot.lane.b32.xlu0 %v1058, 127
        %v1077 = vpop.permute.xlu0 %1076
        %1078 = vrot.lane.b32.xlu0 %v1059, 127
        %v1079 = vpop.permute.xlu0 %1078
        %1080 = vrot.lane.b32.xlu0 %v1060, 127
        %v1081 = vpop.permute.xlu0 %1080
        %1082 = vrot.lane.b32.xlu0 %v1061, 127
        %v1083 = vpop.permute.xlu0 %1082
        %1084 = vrot.lane.b32.xlu0 %v1062, 127
        %v1085 = vpop.permute.xlu0 %1084
        %1086 = vrot.lane.b32.xlu0 %v1063, 127
        %v1087 = vpop.permute.xlu0 %1086
        %v1096 = vsub.f32 %v1016, %v1073
        %v1097 = vsub.f32 %v1017, %v1075
        %v1098 = vsub.f32 %v1018, %v1077
        %v1099 = vsub.f32 %v1019, %v1079
        %v1100 = vsub.f32 %v1020, %v1081
        %v1101 = vsub.f32 %v1021, %v1083
        %v1102 = vsub.f32 %v1022, %v1085
        %v1103 = vsub.f32 %v1023, %v1087
        %1104 = vrot.lane.b32.xlu0 %v834, 3
        %v1105 = vpop.permute.xlu0 %1104
        %1106 = vrot.lane.b32.xlu0 %v835, 3
        %v1107 = vpop.permute.xlu0 %1106
        %1108 = vrot.lane.b32.xlu0 %v836, 3
        %v1109 = vpop.permute.xlu0 %1108
        %1110 = vrot.lane.b32.xlu0 %v837, 3
        %v1111 = vpop.permute.xlu0 %1110
        %1112 = vrot.lane.b32.xlu0 %v838, 3
        %v1113 = vpop.permute.xlu0 %1112
        %1114 = vrot.lane.b32.xlu0 %v839, 3
        %v1115 = vpop.permute.xlu0 %1114
        %1116 = vrot.lane.b32.xlu0 %v840, 3
        %v1117 = vpop.permute.xlu0 %1116
        %1118 = vrot.lane.b32.xlu0 %v841, 3
        %v1119 = vpop.permute.xlu0 %1118
        %v1128 = vmul.f32 %v1015, %v1105
        %v1129 = vmul.f32 %v1015, %v1107
        %v1130 = vmul.f32 %v1015, %v1109
        %v1131 = vmul.f32 %v1015, %v1111
        %v1132 = vmul.f32 %v1015, %v1113
        %v1133 = vmul.f32 %v1015, %v1115
        %v1134 = vmul.f32 %v1015, %v1117
        %v1135 = vmul.f32 %v1015, %v1119
        %1136 = vrot.lane.b32.xlu0 %v834, 127
        %v1137 = vpop.permute.xlu0 %1136
        %1138 = vrot.lane.b32.xlu0 %v835, 127
        %v1139 = vpop.permute.xlu0 %1138
        %1140 = vrot.lane.b32.xlu0 %v836, 127
        %v1141 = vpop.permute.xlu0 %1140
        %1142 = vrot.lane.b32.xlu0 %v837, 127
        %v1143 = vpop.permute.xlu0 %1142
        %1144 = vrot.lane.b32.xlu0 %v838, 127
        %v1145 = vpop.permute.xlu0 %1144
        %1146 = vrot.lane.b32.xlu0 %v839, 127
        %v1147 = vpop.permute.xlu0 %1146
        %1148 = vrot.lane.b32.xlu0 %v840, 127
        %v1149 = vpop.permute.xlu0 %1148
        %1150 = vrot.lane.b32.xlu0 %v841, 127
        %v1151 = vpop.permute.xlu0 %1150
        %v1160 = vmul.f32 %v1015, %v1137
        %v1161 = vmul.f32 %v1015, %v1139
        %v1162 = vmul.f32 %v1015, %v1141
        %v1163 = vmul.f32 %v1015, %v1143
        %v1164 = vmul.f32 %v1015, %v1145
        %v1165 = vmul.f32 %v1015, %v1147
        %v1166 = vmul.f32 %v1015, %v1149
        %v1167 = vmul.f32 %v1015, %v1151
        %1176 = vrot.lane.b32.xlu0 %v1160, 2
        %v1177 = vpop.permute.xlu0 %1176
        %1178 = vrot.lane.b32.xlu0 %v1161, 2
        %v1179 = vpop.permute.xlu0 %1178
        %1180 = vrot.lane.b32.xlu0 %v1162, 2
        %v1181 = vpop.permute.xlu0 %1180
        %1182 = vrot.lane.b32.xlu0 %v1163, 2
        %v1183 = vpop.permute.xlu0 %1182
        %1184 = vrot.lane.b32.xlu0 %v1164, 2
        %v1185 = vpop.permute.xlu0 %1184
        %1186 = vrot.lane.b32.xlu0 %v1165, 2
        %v1187 = vpop.permute.xlu0 %1186
        %1188 = vrot.lane.b32.xlu0 %v1166, 2
        %v1189 = vpop.permute.xlu0 %1188
        %1190 = vrot.lane.b32.xlu0 %v1167, 2
        %v1191 = vpop.permute.xlu0 %1190
        %v1200 = vsub.f32 %v1128, %v1177
        %v1201 = vsub.f32 %v1129, %v1179
        %v1202 = vsub.f32 %v1130, %v1181
        %v1203 = vsub.f32 %v1131, %v1183
        %v1204 = vsub.f32 %v1132, %v1185
        %v1205 = vsub.f32 %v1133, %v1187
        %v1206 = vsub.f32 %v1134, %v1189
        %v1207 = vsub.f32 %v1135, %v1191
        %1216 = vrot.lane.b32.xlu0 %v1096, 126
        %v1217 = vpop.permute.xlu0 %1216
        %1218 = vrot.lane.b32.xlu0 %v1097, 126
        %v1219 = vpop.permute.xlu0 %1218
        %1220 = vrot.lane.b32.xlu0 %v1098, 126
        %v1221 = vpop.permute.xlu0 %1220
        %1222 = vrot.lane.b32.xlu0 %v1099, 126
        %v1223 = vpop.permute.xlu0 %1222
        %1224 = vrot.lane.b32.xlu0 %v1100, 126
        %v1225 = vpop.permute.xlu0 %1224
        %1226 = vrot.lane.b32.xlu0 %v1101, 126
        %v1227 = vpop.permute.xlu0 %1226
        %1228 = vrot.lane.b32.xlu0 %v1102, 126
        %v1229 = vpop.permute.xlu0 %1228
        %1230 = vrot.lane.b32.xlu0 %v1103, 126
        %v1231 = vpop.permute.xlu0 %1230
        %1248 = vrot.lane.b32.xlu0 %v1200, 126
        %v1249 = vpop.permute.xlu0 %1248
        %1250 = vrot.lane.b32.xlu0 %v1201, 126
        %v1251 = vpop.permute.xlu0 %1250
        %1252 = vrot.lane.b32.xlu0 %v1202, 126
        %v1253 = vpop.permute.xlu0 %1252
        %1254 = vrot.lane.b32.xlu0 %v1203, 126
        %v1255 = vpop.permute.xlu0 %1254
        %1256 = vrot.lane.b32.xlu0 %v1204, 126
        %v1257 = vpop.permute.xlu0 %1256
        %1258 = vrot.lane.b32.xlu0 %v1205, 126
        %v1259 = vpop.permute.xlu0 %1258
        %1260 = vrot.lane.b32.xlu0 %v1206, 126
        %v1261 = vpop.permute.xlu0 %1260
        %1262 = vrot.lane.b32.xlu0 %v1207, 126
        %v1263 = vpop.permute.xlu0 %1262
        %1272 = vrot.lane.b32.xlu0 %v1096, 1
        %v1273 = vpop.permute.xlu0 %1272
        %1274 = vrot.lane.b32.xlu0 %v1097, 1
        %v1275 = vpop.permute.xlu0 %1274
        %1276 = vrot.lane.b32.xlu0 %v1098, 1
        %v1277 = vpop.permute.xlu0 %1276
        %1278 = vrot.lane.b32.xlu0 %v1099, 1
        %v1279 = vpop.permute.xlu0 %1278
        %1280 = vrot.lane.b32.xlu0 %v1100, 1
        %v1281 = vpop.permute.xlu0 %1280
        %1282 = vrot.lane.b32.xlu0 %v1101, 1
        %v1283 = vpop.permute.xlu0 %1282
        %1284 = vrot.lane.b32.xlu0 %v1102, 1
        %v1285 = vpop.permute.xlu0 %1284
        %1286 = vrot.lane.b32.xlu0 %v1103, 1
        %v1287 = vpop.permute.xlu0 %1286
        %v1296 = vsel %vm1012, %v1217, %v1249
        %v1297 = vsel %vm1012, %v1219, %v1251
        %v1298 = vsel %vm1012, %v1221, %v1253
        %v1299 = vsel %vm1012, %v1223, %v1255
        %v1300 = vsel %vm1012, %v1225, %v1257
        %v1301 = vsel %vm1012, %v1227, %v1259
        %v1302 = vsel %vm1012, %v1229, %v1261
        %v1303 = vsel %vm1012, %v1231, %v1263
        %vm1304 = vcmask 15360
        %v1305 = vsel %vm1304, %v1296, %v1273
        %v1306 = vsel %vm1304, %v1297, %v1275
        %v1307 = vsel %vm1304, %v1298, %v1277
        %v1308 = vsel %vm1304, %v1299, %v1279
        %v1309 = vsel %vm1304, %v1300, %v1281
        %v1310 = vsel %vm1304, %v1301, %v1283
        %v1311 = vsel %vm1304, %v1302, %v1285
        %v1312 = vsel %vm1304, %v1303, %v1287
        %1314 = vset.pattern.permute.xlu0 0
        %1315 = vperm.xlu0 %1314, %v1015
        %v1316 = vpop.permute.xlu0 %1315
        %v1318 = vmul.f32 %v1316, %v834
        %v1319 = vmul.f32 %v1316, %v835
        %v1320 = vmul.f32 %v1316, %v836
        %v1321 = vmul.f32 %v1316, %v837
        %v1322 = vmul.f32 %v1316, %v838
        %v1323 = vmul.f32 %v1316, %v839
        %v1324 = vmul.f32 %v1316, %v840
        %v1325 = vmul.f32 %v1316, %v841
        %v1326 = vadd.f32 %v1305, %v1318
        %v1327 = vadd.f32 %v1306, %v1319
        %v1328 = vadd.f32 %v1307, %v1320
        %v1329 = vadd.f32 %v1308, %v1321
        %v1330 = vadd.f32 %v1309, %v1322
        %v1331 = vadd.f32 %v1310, %v1323
        %v1332 = vadd.f32 %v1311, %v1324
        %v1333 = vadd.f32 %v1312, %v1325
        %v1334 = vmul.f32 %v1015, %v1326
        %v1335 = vmul.f32 %v1015, %v1327
        %v1336 = vmul.f32 %v1015, %v1328
        %v1337 = vmul.f32 %v1015, %v1329
        %v1338 = vmul.f32 %v1015, %v1330
        %v1339 = vmul.f32 %v1015, %v1331
        %v1340 = vmul.f32 %v1015, %v1332
        %v1341 = vmul.f32 %v1015, %v1333
        %1350 = vrot.lane.b32.xlu0 %v1326, 2
        %v1351 = vpop.permute.xlu0 %1350
        %1352 = vrot.lane.b32.xlu0 %v1327, 2
        %v1353 = vpop.permute.xlu0 %1352
        %1354 = vrot.lane.b32.xlu0 %v1328, 2
        %v1355 = vpop.permute.xlu0 %1354
        %1356 = vrot.lane.b32.xlu0 %v1329, 2
        %v1357 = vpop.permute.xlu0 %1356
        %1358 = vrot.lane.b32.xlu0 %v1330, 2
        %v1359 = vpop.permute.xlu0 %1358
        %1360 = vrot.lane.b32.xlu0 %v1331, 2
        %v1361 = vpop.permute.xlu0 %1360
        %1362 = vrot.lane.b32.xlu0 %v1332, 2
        %v1363 = vpop.permute.xlu0 %1362
        %1364 = vrot.lane.b32.xlu0 %v1333, 2
        %v1365 = vpop.permute.xlu0 %1364
        %v1374 = vmul.f32 %v1015, %v1351
        %v1375 = vmul.f32 %v1015, %v1353
        %v1376 = vmul.f32 %v1015, %v1355
        %v1377 = vmul.f32 %v1015, %v1357
        %v1378 = vmul.f32 %v1015, %v1359
        %v1379 = vmul.f32 %v1015, %v1361
        %v1380 = vmul.f32 %v1015, %v1363
        %v1381 = vmul.f32 %v1015, %v1365
        %1390 = vrot.lane.b32.xlu0 %v1374, 127
        %v1391 = vpop.permute.xlu0 %1390
        %1392 = vrot.lane.b32.xlu0 %v1375, 127
        %v1393 = vpop.permute.xlu0 %1392
        %1394 = vrot.lane.b32.xlu0 %v1376, 127
        %v1395 = vpop.permute.xlu0 %1394
        %1396 = vrot.lane.b32.xlu0 %v1377, 127
        %v1397 = vpop.permute.xlu0 %1396
        %1398 = vrot.lane.b32.xlu0 %v1378, 127
        %v1399 = vpop.permute.xlu0 %1398
        %1400 = vrot.lane.b32.xlu0 %v1379, 127
        %v1401 = vpop.permute.xlu0 %1400
        %1402 = vrot.lane.b32.xlu0 %v1380, 127
        %v1403 = vpop.permute.xlu0 %1402
        %1404 = vrot.lane.b32.xlu0 %v1381, 127
        %v1405 = vpop.permute.xlu0 %1404
        %v1414 = vsub.f32 %v1334, %v1391
        %v1415 = vsub.f32 %v1335, %v1393
        %v1416 = vsub.f32 %v1336, %v1395
        %v1417 = vsub.f32 %v1337, %v1397
        %v1418 = vsub.f32 %v1338, %v1399
        %v1419 = vsub.f32 %v1339, %v1401
        %v1420 = vsub.f32 %v1340, %v1403
        %v1421 = vsub.f32 %v1341, %v1405
        %1422 = vrot.lane.b32.xlu0 %v1326, 3
        %v1423 = vpop.permute.xlu0 %1422
        %1424 = vrot.lane.b32.xlu0 %v1327, 3
        %v1425 = vpop.permute.xlu0 %1424
        %1426 = vrot.lane.b32.xlu0 %v1328, 3
        %v1427 = vpop.permute.xlu0 %1426
        %1428 = vrot.lane.b32.xlu0 %v1329, 3
        %v1429 = vpop.permute.xlu0 %1428
        %1430 = vrot.lane.b32.xlu0 %v1330, 3
        %v1431 = vpop.permute.xlu0 %1430
        %1432 = vrot.lane.b32.xlu0 %v1331, 3
        %v1433 = vpop.permute.xlu0 %1432
        %1434 = vrot.lane.b32.xlu0 %v1332, 3
        %v1435 = vpop.permute.xlu0 %1434
        %1436 = vrot.lane.b32.xlu0 %v1333, 3
        %v1437 = vpop.permute.xlu0 %1436
        %v1446 = vmul.f32 %v1015, %v1423
        %v1447 = vmul.f32 %v1015, %v1425
        %v1448 = vmul.f32 %v1015, %v1427
        %v1449 = vmul.f32 %v1015, %v1429
        %v1450 = vmul.f32 %v1015, %v1431
        %v1451 = vmul.f32 %v1015, %v1433
        %v1452 = vmul.f32 %v1015, %v1435
        %v1453 = vmul.f32 %v1015, %v1437
        %1454 = vrot.lane.b32.xlu0 %v1326, 127
        %v1455 = vpop.permute.xlu0 %1454
        %1456 = vrot.lane.b32.xlu0 %v1327, 127
        %v1457 = vpop.permute.xlu0 %1456
        %1458 = vrot.lane.b32.xlu0 %v1328, 127
        %v1459 = vpop.permute.xlu0 %1458
        %1460 = vrot.lane.b32.xlu0 %v1329, 127
        %v1461 = vpop.permute.xlu0 %1460
        %1462 = vrot.lane.b32.xlu0 %v1330, 127
        %v1463 = vpop.permute.xlu0 %1462
        %1464 = vrot.lane.b32.xlu0 %v1331, 127
        %v1465 = vpop.permute.xlu0 %1464
        %1466 = vrot.lane.b32.xlu0 %v1332, 127
        %v1467 = vpop.permute.xlu0 %1466
        %1468 = vrot.lane.b32.xlu0 %v1333, 127
        %v1469 = vpop.permute.xlu0 %1468
        %v1478 = vmul.f32 %v1015, %v1455
        %v1479 = vmul.f32 %v1015, %v1457
        %v1480 = vmul.f32 %v1015, %v1459
        %v1481 = vmul.f32 %v1015, %v1461
        %v1482 = vmul.f32 %v1015, %v1463
        %v1483 = vmul.f32 %v1015, %v1465
        %v1484 = vmul.f32 %v1015, %v1467
        %v1485 = vmul.f32 %v1015, %v1469
        %1494 = vrot.lane.b32.xlu0 %v1478, 2
        %v1495 = vpop.permute.xlu0 %1494
        %1496 = vrot.lane.b32.xlu0 %v1479, 2
        %v1497 = vpop.permute.xlu0 %1496
        %1498 = vrot.lane.b32.xlu0 %v1480, 2
        %v1499 = vpop.permute.xlu0 %1498
        %1500 = vrot.lane.b32.xlu0 %v1481, 2
        %v1501 = vpop.permute.xlu0 %1500
        %1502 = vrot.lane.b32.xlu0 %v1482, 2
        %v1503 = vpop.permute.xlu0 %1502
        %1504 = vrot.lane.b32.xlu0 %v1483, 2
        %v1505 = vpop.permute.xlu0 %1504
        %1506 = vrot.lane.b32.xlu0 %v1484, 2
        %v1507 = vpop.permute.xlu0 %1506
        %1508 = vrot.lane.b32.xlu0 %v1485, 2
        %v1509 = vpop.permute.xlu0 %1508
        %v1518 = vsub.f32 %v1446, %v1495
        %v1519 = vsub.f32 %v1447, %v1497
        %v1520 = vsub.f32 %v1448, %v1499
        %v1521 = vsub.f32 %v1449, %v1501
        %v1522 = vsub.f32 %v1450, %v1503
        %v1523 = vsub.f32 %v1451, %v1505
        %v1524 = vsub.f32 %v1452, %v1507
        %v1525 = vsub.f32 %v1453, %v1509
        %1534 = vrot.lane.b32.xlu0 %v1414, 126
        %v1535 = vpop.permute.xlu0 %1534
        %1536 = vrot.lane.b32.xlu0 %v1415, 126
        %v1537 = vpop.permute.xlu0 %1536
        %1538 = vrot.lane.b32.xlu0 %v1416, 126
        %v1539 = vpop.permute.xlu0 %1538
        %1540 = vrot.lane.b32.xlu0 %v1417, 126
        %v1541 = vpop.permute.xlu0 %1540
        %1542 = vrot.lane.b32.xlu0 %v1418, 126
        %v1543 = vpop.permute.xlu0 %1542
        %1544 = vrot.lane.b32.xlu0 %v1419, 126
        %v1545 = vpop.permute.xlu0 %1544
        %1546 = vrot.lane.b32.xlu0 %v1420, 126
        %v1547 = vpop.permute.xlu0 %1546
        %1548 = vrot.lane.b32.xlu0 %v1421, 126
        %v1549 = vpop.permute.xlu0 %1548
        %1566 = vrot.lane.b32.xlu0 %v1518, 126
        %v1567 = vpop.permute.xlu0 %1566
        %1568 = vrot.lane.b32.xlu0 %v1519, 126
        %v1569 = vpop.permute.xlu0 %1568
        %1570 = vrot.lane.b32.xlu0 %v1520, 126
        %v1571 = vpop.permute.xlu0 %1570
        %1572 = vrot.lane.b32.xlu0 %v1521, 126
        %v1573 = vpop.permute.xlu0 %1572
        %1574 = vrot.lane.b32.xlu0 %v1522, 126
        %v1575 = vpop.permute.xlu0 %1574
        %1576 = vrot.lane.b32.xlu0 %v1523, 126
        %v1577 = vpop.permute.xlu0 %1576
        %1578 = vrot.lane.b32.xlu0 %v1524, 126
        %v1579 = vpop.permute.xlu0 %1578
        %1580 = vrot.lane.b32.xlu0 %v1525, 126
        %v1581 = vpop.permute.xlu0 %1580
        %1590 = vrot.lane.b32.xlu0 %v1414, 1
        %v1591 = vpop.permute.xlu0 %1590
        %1592 = vrot.lane.b32.xlu0 %v1415, 1
        %v1593 = vpop.permute.xlu0 %1592
        %1594 = vrot.lane.b32.xlu0 %v1416, 1
        %v1595 = vpop.permute.xlu0 %1594
        %1596 = vrot.lane.b32.xlu0 %v1417, 1
        %v1597 = vpop.permute.xlu0 %1596
        %1598 = vrot.lane.b32.xlu0 %v1418, 1
        %v1599 = vpop.permute.xlu0 %1598
        %1600 = vrot.lane.b32.xlu0 %v1419, 1
        %v1601 = vpop.permute.xlu0 %1600
        %1602 = vrot.lane.b32.xlu0 %v1420, 1
        %v1603 = vpop.permute.xlu0 %1602
        %1604 = vrot.lane.b32.xlu0 %v1421, 1
        %v1605 = vpop.permute.xlu0 %1604
        %v1614 = vsel %vm1012, %v1535, %v1567
        %v1615 = vsel %vm1012, %v1537, %v1569
        %v1616 = vsel %vm1012, %v1539, %v1571
        %v1617 = vsel %vm1012, %v1541, %v1573
        %v1618 = vsel %vm1012, %v1543, %v1575
        %v1619 = vsel %vm1012, %v1545, %v1577
        %v1620 = vsel %vm1012, %v1547, %v1579
        %v1621 = vsel %vm1012, %v1549, %v1581
        %v1622 = vsel %vm1304, %v1614, %v1591
        %v1623 = vsel %vm1304, %v1615, %v1593
        %v1624 = vsel %vm1304, %v1616, %v1595
        %v1625 = vsel %vm1304, %v1617, %v1597
        %v1626 = vsel %vm1304, %v1618, %v1599
        %v1627 = vsel %vm1304, %v1619, %v1601
        %v1628 = vsel %vm1304, %v1620, %v1603
        %v1629 = vsel %vm1304, %v1621, %v1605
        %v1630 = vmul.f32 %v1622, 2.0
        %v1631 = vmul.f32 %v1623, 2.0
        %v1632 = vmul.f32 %v1624, 2.0
        %v1633 = vmul.f32 %v1625, 2.0
        %v1634 = vmul.f32 %v1626, 2.0
        %v1635 = vmul.f32 %v1627, 2.0
        %v1636 = vmul.f32 %v1628, 2.0
        %v1637 = vmul.f32 %v1629, 2.0
        %v1638 = vadd.f32 %v834, %v1630
        %v1639 = vadd.f32 %v835, %v1631
        %v1640 = vadd.f32 %v836, %v1632
        %v1641 = vadd.f32 %v837, %v1633
        %v1642 = vadd.f32 %v838, %v1634
        %v1643 = vadd.f32 %v839, %v1635
        %v1644 = vadd.f32 %v840, %v1636
        %v1645 = vadd.f32 %v841, %v1637
        %v1646 = vmul.f32 %v1015, %v928
        %v1647 = vmul.f32 %v1015, %v932
        %v1648 = vmul.f32 %v1015, %v936
        %v1649 = vmul.f32 %v1015, %v940
        %v1650 = vmul.f32 %v1015, %v944
        %v1651 = vmul.f32 %v1015, %v948
        %v1652 = vmul.f32 %v1015, %v952
        %v1653 = vmul.f32 %v1015, %v956
        %1662 = vrot.lane.b32.xlu0 %v1646, 127
        %v1663 = vpop.permute.xlu0 %1662
        %1664 = vrot.lane.b32.xlu0 %v1647, 127
        %v1665 = vpop.permute.xlu0 %1664
        %1666 = vrot.lane.b32.xlu0 %v1648, 127
        %v1667 = vpop.permute.xlu0 %1666
        %1668 = vrot.lane.b32.xlu0 %v1649, 127
        %v1669 = vpop.permute.xlu0 %1668
        %1670 = vrot.lane.b32.xlu0 %v1650, 127
        %v1671 = vpop.permute.xlu0 %1670
        %1672 = vrot.lane.b32.xlu0 %v1651, 127
        %v1673 = vpop.permute.xlu0 %1672
        %1674 = vrot.lane.b32.xlu0 %v1652, 127
        %v1675 = vpop.permute.xlu0 %1674
        %1676 = vrot.lane.b32.xlu0 %v1653, 127
        %v1677 = vpop.permute.xlu0 %1676
        %v1686 = vsub.f32 %v1646, %v1663
        %v1687 = vsub.f32 %v1647, %v1665
        %v1688 = vsub.f32 %v1648, %v1667
        %v1689 = vsub.f32 %v1649, %v1669
        %v1690 = vsub.f32 %v1650, %v1671
        %v1691 = vsub.f32 %v1651, %v1673
        %v1692 = vsub.f32 %v1652, %v1675
        %v1693 = vsub.f32 %v1653, %v1677
        %1694 = vrot.lane.b32.xlu0 %v1646, 126
        %v1695 = vpop.permute.xlu0 %1694
        %1696 = vrot.lane.b32.xlu0 %v1647, 126
        %v1697 = vpop.permute.xlu0 %1696
        %1698 = vrot.lane.b32.xlu0 %v1648, 126
        %v1699 = vpop.permute.xlu0 %1698
        %1700 = vrot.lane.b32.xlu0 %v1649, 126
        %v1701 = vpop.permute.xlu0 %1700
        %1702 = vrot.lane.b32.xlu0 %v1650, 126
        %v1703 = vpop.permute.xlu0 %1702
        %1704 = vrot.lane.b32.xlu0 %v1651, 126
        %v1705 = vpop.permute.xlu0 %1704
        %1706 = vrot.lane.b32.xlu0 %v1652, 126
        %v1707 = vpop.permute.xlu0 %1706
        %1708 = vrot.lane.b32.xlu0 %v1653, 126
        %v1709 = vpop.permute.xlu0 %1708
        %v1718 = vsub.f32 %v1686, %v1695
        %v1719 = vsub.f32 %v1687, %v1697
        %v1720 = vsub.f32 %v1688, %v1699
        %v1721 = vsub.f32 %v1689, %v1701
        %v1722 = vsub.f32 %v1690, %v1703
        %v1723 = vsub.f32 %v1691, %v1705
        %v1724 = vsub.f32 %v1692, %v1707
        %v1725 = vsub.f32 %v1693, %v1709
        %1726 = vrot.lane.b32.xlu0 %v1646, 125
        %v1727 = vpop.permute.xlu0 %1726
        %1728 = vrot.lane.b32.xlu0 %v1647, 125
        %v1729 = vpop.permute.xlu0 %1728
        %1730 = vrot.lane.b32.xlu0 %v1648, 125
        %v1731 = vpop.permute.xlu0 %1730
        %1732 = vrot.lane.b32.xlu0 %v1649, 125
        %v1733 = vpop.permute.xlu0 %1732
        %1734 = vrot.lane.b32.xlu0 %v1650, 125
        %v1735 = vpop.permute.xlu0 %1734
        %1736 = vrot.lane.b32.xlu0 %v1651, 125
        %v1737 = vpop.permute.xlu0 %1736
        %1738 = vrot.lane.b32.xlu0 %v1652, 125
        %v1739 = vpop.permute.xlu0 %1738
        %1740 = vrot.lane.b32.xlu0 %v1653, 125
        %v1741 = vpop.permute.xlu0 %1740
        %v1750 = vsub.f32 %v1718, %v1727
        %v1751 = vsub.f32 %v1719, %v1729
        %v1752 = vsub.f32 %v1720, %v1731
        %v1753 = vsub.f32 %v1721, %v1733
        %v1754 = vsub.f32 %v1722, %v1735
        %v1755 = vsub.f32 %v1723, %v1737
        %v1756 = vsub.f32 %v1724, %v1739
        %v1757 = vsub.f32 %v1725, %v1741
        %1758 = vrot.lane.b32.xlu0 %v928, 127
        %v1759 = vpop.permute.xlu0 %1758
        %1760 = vrot.lane.b32.xlu0 %v932, 127
        %v1761 = vpop.permute.xlu0 %1760
        %1762 = vrot.lane.b32.xlu0 %v936, 127
        %v1763 = vpop.permute.xlu0 %1762
        %1764 = vrot.lane.b32.xlu0 %v940, 127
        %v1765 = vpop.permute.xlu0 %1764
        %1766 = vrot.lane.b32.xlu0 %v944, 127
        %v1767 = vpop.permute.xlu0 %1766
        %1768 = vrot.lane.b32.xlu0 %v948, 127
        %v1769 = vpop.permute.xlu0 %1768
        %1770 = vrot.lane.b32.xlu0 %v952, 127
        %v1771 = vpop.permute.xlu0 %1770
        %1772 = vrot.lane.b32.xlu0 %v956, 127
        %v1773 = vpop.permute.xlu0 %1772
        %v1782 = vmul.f32 %v1015, %v1759
        %v1783 = vmul.f32 %v1015, %v1761
        %v1784 = vmul.f32 %v1015, %v1763
        %v1785 = vmul.f32 %v1015, %v1765
        %v1786 = vmul.f32 %v1015, %v1767
        %v1787 = vmul.f32 %v1015, %v1769
        %v1788 = vmul.f32 %v1015, %v1771
        %v1789 = vmul.f32 %v1015, %v1773
        %1790 = vrot.lane.b32.xlu0 %v928, 1
        %v1791 = vpop.permute.xlu0 %1790
        %1792 = vrot.lane.b32.xlu0 %v932, 1
        %v1793 = vpop.permute.xlu0 %1792
        %1794 = vrot.lane.b32.xlu0 %v936, 1
        %v1795 = vpop.permute.xlu0 %1794
        %1796 = vrot.lane.b32.xlu0 %v940, 1
        %v1797 = vpop.permute.xlu0 %1796
        %1798 = vrot.lane.b32.xlu0 %v944, 1
        %v1799 = vpop.permute.xlu0 %1798
        %1800 = vrot.lane.b32.xlu0 %v948, 1
        %v1801 = vpop.permute.xlu0 %1800
        %1802 = vrot.lane.b32.xlu0 %v952, 1
        %v1803 = vpop.permute.xlu0 %1802
        %1804 = vrot.lane.b32.xlu0 %v956, 1
        %v1805 = vpop.permute.xlu0 %1804
        %v1814 = vmul.f32 %v1015, %v1791
        %v1815 = vmul.f32 %v1015, %v1793
        %v1816 = vmul.f32 %v1015, %v1795
        %v1817 = vmul.f32 %v1015, %v1797
        %v1818 = vmul.f32 %v1015, %v1799
        %v1819 = vmul.f32 %v1015, %v1801
        %v1820 = vmul.f32 %v1015, %v1803
        %v1821 = vmul.f32 %v1015, %v1805
        %1830 = vrot.lane.b32.xlu0 %v1814, 127
        %v1831 = vpop.permute.xlu0 %1830
        %1832 = vrot.lane.b32.xlu0 %v1815, 127
        %v1833 = vpop.permute.xlu0 %1832
        %1834 = vrot.lane.b32.xlu0 %v1816, 127
        %v1835 = vpop.permute.xlu0 %1834
        %1836 = vrot.lane.b32.xlu0 %v1817, 127
        %v1837 = vpop.permute.xlu0 %1836
        %1838 = vrot.lane.b32.xlu0 %v1818, 127
        %v1839 = vpop.permute.xlu0 %1838
        %1840 = vrot.lane.b32.xlu0 %v1819, 127
        %v1841 = vpop.permute.xlu0 %1840
        %1842 = vrot.lane.b32.xlu0 %v1820, 127
        %v1843 = vpop.permute.xlu0 %1842
        %1844 = vrot.lane.b32.xlu0 %v1821, 127
        %v1845 = vpop.permute.xlu0 %1844
        %v1854 = vadd.f32 %v1782, %v1831
        %v1855 = vadd.f32 %v1783, %v1833
        %v1856 = vadd.f32 %v1784, %v1835
        %v1857 = vadd.f32 %v1785, %v1837
        %v1858 = vadd.f32 %v1786, %v1839
        %v1859 = vadd.f32 %v1787, %v1841
        %v1860 = vadd.f32 %v1788, %v1843
        %v1861 = vadd.f32 %v1789, %v1845
        %1870 = vrot.lane.b32.xlu0 %v1782, 126
        %v1871 = vpop.permute.xlu0 %1870
        %1872 = vrot.lane.b32.xlu0 %v1783, 126
        %v1873 = vpop.permute.xlu0 %1872
        %1874 = vrot.lane.b32.xlu0 %v1784, 126
        %v1875 = vpop.permute.xlu0 %1874
        %1876 = vrot.lane.b32.xlu0 %v1785, 126
        %v1877 = vpop.permute.xlu0 %1876
        %1878 = vrot.lane.b32.xlu0 %v1786, 126
        %v1879 = vpop.permute.xlu0 %1878
        %1880 = vrot.lane.b32.xlu0 %v1787, 126
        %v1881 = vpop.permute.xlu0 %1880
        %1882 = vrot.lane.b32.xlu0 %v1788, 126
        %v1883 = vpop.permute.xlu0 %1882
        %1884 = vrot.lane.b32.xlu0 %v1789, 126
        %v1885 = vpop.permute.xlu0 %1884
        %v1894 = vadd.f32 %v1854, %v1871
        %v1895 = vadd.f32 %v1855, %v1873
        %v1896 = vadd.f32 %v1856, %v1875
        %v1897 = vadd.f32 %v1857, %v1877
        %v1898 = vadd.f32 %v1858, %v1879
        %v1899 = vadd.f32 %v1859, %v1881
        %v1900 = vadd.f32 %v1860, %v1883
        %v1901 = vadd.f32 %v1861, %v1885
        %1902 = vrot.lane.b32.xlu0 %v1814, 125
        %v1903 = vpop.permute.xlu0 %1902
        %1904 = vrot.lane.b32.xlu0 %v1815, 125
        %v1905 = vpop.permute.xlu0 %1904
        %1906 = vrot.lane.b32.xlu0 %v1816, 125
        %v1907 = vpop.permute.xlu0 %1906
        %1908 = vrot.lane.b32.xlu0 %v1817, 125
        %v1909 = vpop.permute.xlu0 %1908
        %1910 = vrot.lane.b32.xlu0 %v1818, 125
        %v1911 = vpop.permute.xlu0 %1910
        %1912 = vrot.lane.b32.xlu0 %v1819, 125
        %v1913 = vpop.permute.xlu0 %1912
        %1914 = vrot.lane.b32.xlu0 %v1820, 125
        %v1915 = vpop.permute.xlu0 %1914
        %1916 = vrot.lane.b32.xlu0 %v1821, 125
        %v1917 = vpop.permute.xlu0 %1916
        %v1926 = vsub.f32 %v1894, %v1903
        %v1927 = vsub.f32 %v1895, %v1905
        %v1928 = vsub.f32 %v1896, %v1907
        %v1929 = vsub.f32 %v1897, %v1909
        %v1930 = vsub.f32 %v1898, %v1911
        %v1931 = vsub.f32 %v1899, %v1913
        %v1932 = vsub.f32 %v1900, %v1915
        %v1933 = vsub.f32 %v1901, %v1917
        %1934 = vrot.lane.b32.xlu0 %v928, 126
        %v1935 = vpop.permute.xlu0 %1934
        %1936 = vrot.lane.b32.xlu0 %v932, 126
        %v1937 = vpop.permute.xlu0 %1936
        %1938 = vrot.lane.b32.xlu0 %v936, 126
        %v1939 = vpop.permute.xlu0 %1938
        %1940 = vrot.lane.b32.xlu0 %v940, 126
        %v1941 = vpop.permute.xlu0 %1940
        %1942 = vrot.lane.b32.xlu0 %v944, 126
        %v1943 = vpop.permute.xlu0 %1942
        %1944 = vrot.lane.b32.xlu0 %v948, 126
        %v1945 = vpop.permute.xlu0 %1944
        %1946 = vrot.lane.b32.xlu0 %v952, 126
        %v1947 = vpop.permute.xlu0 %1946
        %1948 = vrot.lane.b32.xlu0 %v956, 126
        %v1949 = vpop.permute.xlu0 %1948
        %v1958 = vmul.f32 %v1015, %v1935
        %v1959 = vmul.f32 %v1015, %v1937
        %v1960 = vmul.f32 %v1015, %v1939
        %v1961 = vmul.f32 %v1015, %v1941
        %v1962 = vmul.f32 %v1015, %v1943
        %v1963 = vmul.f32 %v1015, %v1945
        %v1964 = vmul.f32 %v1015, %v1947
        %v1965 = vmul.f32 %v1015, %v1949
        %1974 = vrot.lane.b32.xlu0 %v1958, 127
        %v1975 = vpop.permute.xlu0 %1974
        %1976 = vrot.lane.b32.xlu0 %v1959, 127
        %v1977 = vpop.permute.xlu0 %1976
        %1978 = vrot.lane.b32.xlu0 %v1960, 127
        %v1979 = vpop.permute.xlu0 %1978
        %1980 = vrot.lane.b32.xlu0 %v1961, 127
        %v1981 = vpop.permute.xlu0 %1980
        %1982 = vrot.lane.b32.xlu0 %v1962, 127
        %v1983 = vpop.permute.xlu0 %1982
        %1984 = vrot.lane.b32.xlu0 %v1963, 127
        %v1985 = vpop.permute.xlu0 %1984
        %1986 = vrot.lane.b32.xlu0 %v1964, 127
        %v1987 = vpop.permute.xlu0 %1986
        %1988 = vrot.lane.b32.xlu0 %v1965, 127
        %v1989 = vpop.permute.xlu0 %1988
        %v1998 = vsub.f32 %v1958, %v1975
        %v1999 = vsub.f32 %v1959, %v1977
        %v2000 = vsub.f32 %v1960, %v1979
        %v2001 = vsub.f32 %v1961, %v1981
        %v2002 = vsub.f32 %v1962, %v1983
        %v2003 = vsub.f32 %v1963, %v1985
        %v2004 = vsub.f32 %v1964, %v1987
        %v2005 = vsub.f32 %v1965, %v1989
        %2006 = vrot.lane.b32.xlu0 %v928, 2
        %v2007 = vpop.permute.xlu0 %2006
        %2008 = vrot.lane.b32.xlu0 %v932, 2
        %v2009 = vpop.permute.xlu0 %2008
        %2010 = vrot.lane.b32.xlu0 %v936, 2
        %v2011 = vpop.permute.xlu0 %2010
        %2012 = vrot.lane.b32.xlu0 %v940, 2
        %v2013 = vpop.permute.xlu0 %2012
        %2014 = vrot.lane.b32.xlu0 %v944, 2
        %v2015 = vpop.permute.xlu0 %2014
        %2016 = vrot.lane.b32.xlu0 %v948, 2
        %v2017 = vpop.permute.xlu0 %2016
        %2018 = vrot.lane.b32.xlu0 %v952, 2
        %v2019 = vpop.permute.xlu0 %2018
        %2020 = vrot.lane.b32.xlu0 %v956, 2
        %v2021 = vpop.permute.xlu0 %2020
        %v2030 = vmul.f32 %v1015, %v2007
        %v2031 = vmul.f32 %v1015, %v2009
        %v2032 = vmul.f32 %v1015, %v2011
        %v2033 = vmul.f32 %v1015, %v2013
        %v2034 = vmul.f32 %v1015, %v2015
        %v2035 = vmul.f32 %v1015, %v2017
        %v2036 = vmul.f32 %v1015, %v2019
        %v2037 = vmul.f32 %v1015, %v2021
        %2046 = vrot.lane.b32.xlu0 %v2030, 126
        %v2047 = vpop.permute.xlu0 %2046
        %2048 = vrot.lane.b32.xlu0 %v2031, 126
        %v2049 = vpop.permute.xlu0 %2048
        %2050 = vrot.lane.b32.xlu0 %v2032, 126
        %v2051 = vpop.permute.xlu0 %2050
        %2052 = vrot.lane.b32.xlu0 %v2033, 126
        %v2053 = vpop.permute.xlu0 %2052
        %2054 = vrot.lane.b32.xlu0 %v2034, 126
        %v2055 = vpop.permute.xlu0 %2054
        %2056 = vrot.lane.b32.xlu0 %v2035, 126
        %v2057 = vpop.permute.xlu0 %2056
        %2058 = vrot.lane.b32.xlu0 %v2036, 126
        %v2059 = vpop.permute.xlu0 %2058
        %2060 = vrot.lane.b32.xlu0 %v2037, 126
        %v2061 = vpop.permute.xlu0 %2060
        %v2070 = vadd.f32 %v1998, %v2047
        %v2071 = vadd.f32 %v1999, %v2049
        %v2072 = vadd.f32 %v2000, %v2051
        %v2073 = vadd.f32 %v2001, %v2053
        %v2074 = vadd.f32 %v2002, %v2055
        %v2075 = vadd.f32 %v2003, %v2057
        %v2076 = vadd.f32 %v2004, %v2059
        %v2077 = vadd.f32 %v2005, %v2061
        %2078 = vrot.lane.b32.xlu0 %v2030, 125
        %v2079 = vpop.permute.xlu0 %2078
        %2080 = vrot.lane.b32.xlu0 %v2031, 125
        %v2081 = vpop.permute.xlu0 %2080
        %2082 = vrot.lane.b32.xlu0 %v2032, 125
        %v2083 = vpop.permute.xlu0 %2082
        %2084 = vrot.lane.b32.xlu0 %v2033, 125
        %v2085 = vpop.permute.xlu0 %2084
        %2086 = vrot.lane.b32.xlu0 %v2034, 125
        %v2087 = vpop.permute.xlu0 %2086
        %2088 = vrot.lane.b32.xlu0 %v2035, 125
        %v2089 = vpop.permute.xlu0 %2088
        %2090 = vrot.lane.b32.xlu0 %v2036, 125
        %v2091 = vpop.permute.xlu0 %2090
        %2092 = vrot.lane.b32.xlu0 %v2037, 125
        %v2093 = vpop.permute.xlu0 %2092
        %v2102 = vadd.f32 %v2070, %v2079
        %v2103 = vadd.f32 %v2071, %v2081
        %v2104 = vadd.f32 %v2072, %v2083
        %v2105 = vadd.f32 %v2073, %v2085
        %v2106 = vadd.f32 %v2074, %v2087
        %v2107 = vadd.f32 %v2075, %v2089
        %v2108 = vadd.f32 %v2076, %v2091
        %v2109 = vadd.f32 %v2077, %v2093
        %2110 = vrot.lane.b32.xlu0 %v928, 125
        %v2111 = vpop.permute.xlu0 %2110
        %2112 = vrot.lane.b32.xlu0 %v932, 125
        %v2113 = vpop.permute.xlu0 %2112
        %2114 = vrot.lane.b32.xlu0 %v936, 125
        %v2115 = vpop.permute.xlu0 %2114
        %2116 = vrot.lane.b32.xlu0 %v940, 125
        %v2117 = vpop.permute.xlu0 %2116
        %2118 = vrot.lane.b32.xlu0 %v944, 125
        %v2119 = vpop.permute.xlu0 %2118
        %2120 = vrot.lane.b32.xlu0 %v948, 125
        %v2121 = vpop.permute.xlu0 %2120
        %2122 = vrot.lane.b32.xlu0 %v952, 125
        %v2123 = vpop.permute.xlu0 %2122
        %2124 = vrot.lane.b32.xlu0 %v956, 125
        %v2125 = vpop.permute.xlu0 %2124
        %v2134 = vmul.f32 %v1015, %v2111
        %v2135 = vmul.f32 %v1015, %v2113
        %v2136 = vmul.f32 %v1015, %v2115
        %v2137 = vmul.f32 %v1015, %v2117
        %v2138 = vmul.f32 %v1015, %v2119
        %v2139 = vmul.f32 %v1015, %v2121
        %v2140 = vmul.f32 %v1015, %v2123
        %v2141 = vmul.f32 %v1015, %v2125
        %2142 = vrot.lane.b32.xlu0 %v1782, 127
        %v2143 = vpop.permute.xlu0 %2142
        %2144 = vrot.lane.b32.xlu0 %v1783, 127
        %v2145 = vpop.permute.xlu0 %2144
        %2146 = vrot.lane.b32.xlu0 %v1784, 127
        %v2147 = vpop.permute.xlu0 %2146
        %2148 = vrot.lane.b32.xlu0 %v1785, 127
        %v2149 = vpop.permute.xlu0 %2148
        %2150 = vrot.lane.b32.xlu0 %v1786, 127
        %v2151 = vpop.permute.xlu0 %2150
        %2152 = vrot.lane.b32.xlu0 %v1787, 127
        %v2153 = vpop.permute.xlu0 %2152
        %2154 = vrot.lane.b32.xlu0 %v1788, 127
        %v2155 = vpop.permute.xlu0 %2154
        %2156 = vrot.lane.b32.xlu0 %v1789, 127
        %v2157 = vpop.permute.xlu0 %2156
        %v2166 = vadd.f32 %v2134, %v2143
        %v2167 = vadd.f32 %v2135, %v2145
        %v2168 = vadd.f32 %v2136, %v2147
        %v2169 = vadd.f32 %v2137, %v2149
        %v2170 = vadd.f32 %v2138, %v2151
        %v2171 = vadd.f32 %v2139, %v2153
        %v2172 = vadd.f32 %v2140, %v2155
        %v2173 = vadd.f32 %v2141, %v2157
        %2174 = vrot.lane.b32.xlu0 %v1814, 126
        %v2175 = vpop.permute.xlu0 %2174
        %2176 = vrot.lane.b32.xlu0 %v1815, 126
        %v2177 = vpop.permute.xlu0 %2176
        %2178 = vrot.lane.b32.xlu0 %v1816, 126
        %v2179 = vpop.permute.xlu0 %2178
        %2180 = vrot.lane.b32.xlu0 %v1817, 126
        %v2181 = vpop.permute.xlu0 %2180
        %2182 = vrot.lane.b32.xlu0 %v1818, 126
        %v2183 = vpop.permute.xlu0 %2182
        %2184 = vrot.lane.b32.xlu0 %v1819, 126
        %v2185 = vpop.permute.xlu0 %2184
        %2186 = vrot.lane.b32.xlu0 %v1820, 126
        %v2187 = vpop.permute.xlu0 %2186
        %2188 = vrot.lane.b32.xlu0 %v1821, 126
        %v2189 = vpop.permute.xlu0 %2188
        %v2198 = vsub.f32 %v2166, %v2175
        %v2199 = vsub.f32 %v2167, %v2177
        %v2200 = vsub.f32 %v2168, %v2179
        %v2201 = vsub.f32 %v2169, %v2181
        %v2202 = vsub.f32 %v2170, %v2183
        %v2203 = vsub.f32 %v2171, %v2185
        %v2204 = vsub.f32 %v2172, %v2187
        %v2205 = vsub.f32 %v2173, %v2189
        %2206 = vrot.lane.b32.xlu0 %v928, 3
        %v2207 = vpop.permute.xlu0 %2206
        %2208 = vrot.lane.b32.xlu0 %v932, 3
        %v2209 = vpop.permute.xlu0 %2208
        %2210 = vrot.lane.b32.xlu0 %v936, 3
        %v2211 = vpop.permute.xlu0 %2210
        %2212 = vrot.lane.b32.xlu0 %v940, 3
        %v2213 = vpop.permute.xlu0 %2212
        %2214 = vrot.lane.b32.xlu0 %v944, 3
        %v2215 = vpop.permute.xlu0 %2214
        %2216 = vrot.lane.b32.xlu0 %v948, 3
        %v2217 = vpop.permute.xlu0 %2216
        %2218 = vrot.lane.b32.xlu0 %v952, 3
        %v2219 = vpop.permute.xlu0 %2218
        %2220 = vrot.lane.b32.xlu0 %v956, 3
        %v2221 = vpop.permute.xlu0 %2220
        %v2230 = vmul.f32 %v1015, %v2207
        %v2231 = vmul.f32 %v1015, %v2209
        %v2232 = vmul.f32 %v1015, %v2211
        %v2233 = vmul.f32 %v1015, %v2213
        %v2234 = vmul.f32 %v1015, %v2215
        %v2235 = vmul.f32 %v1015, %v2217
        %v2236 = vmul.f32 %v1015, %v2219
        %v2237 = vmul.f32 %v1015, %v2221
        %2246 = vrot.lane.b32.xlu0 %v2230, 125
        %v2247 = vpop.permute.xlu0 %2246
        %2248 = vrot.lane.b32.xlu0 %v2231, 125
        %v2249 = vpop.permute.xlu0 %2248
        %2250 = vrot.lane.b32.xlu0 %v2232, 125
        %v2251 = vpop.permute.xlu0 %2250
        %2252 = vrot.lane.b32.xlu0 %v2233, 125
        %v2253 = vpop.permute.xlu0 %2252
        %2254 = vrot.lane.b32.xlu0 %v2234, 125
        %v2255 = vpop.permute.xlu0 %2254
        %2256 = vrot.lane.b32.xlu0 %v2235, 125
        %v2257 = vpop.permute.xlu0 %2256
        %2258 = vrot.lane.b32.xlu0 %v2236, 125
        %v2259 = vpop.permute.xlu0 %2258
        %2260 = vrot.lane.b32.xlu0 %v2237, 125
        %v2261 = vpop.permute.xlu0 %2260
        %v2270 = vadd.f32 %v2198, %v2247
        %v2271 = vadd.f32 %v2199, %v2249
        %v2272 = vadd.f32 %v2200, %v2251
        %v2273 = vadd.f32 %v2201, %v2253
        %v2274 = vadd.f32 %v2202, %v2255
        %v2275 = vadd.f32 %v2203, %v2257
        %v2276 = vadd.f32 %v2204, %v2259
        %v2277 = vadd.f32 %v2205, %v2261
        %2286 = vrot.lane.b32.xlu0 %v1926, 1
        %v2287 = vpop.permute.xlu0 %2286
        %2288 = vrot.lane.b32.xlu0 %v1927, 1
        %v2289 = vpop.permute.xlu0 %2288
        %2290 = vrot.lane.b32.xlu0 %v1928, 1
        %v2291 = vpop.permute.xlu0 %2290
        %2292 = vrot.lane.b32.xlu0 %v1929, 1
        %v2293 = vpop.permute.xlu0 %2292
        %2294 = vrot.lane.b32.xlu0 %v1930, 1
        %v2295 = vpop.permute.xlu0 %2294
        %2296 = vrot.lane.b32.xlu0 %v1931, 1
        %v2297 = vpop.permute.xlu0 %2296
        %2298 = vrot.lane.b32.xlu0 %v1932, 1
        %v2299 = vpop.permute.xlu0 %2298
        %2300 = vrot.lane.b32.xlu0 %v1933, 1
        %v2301 = vpop.permute.xlu0 %2300
        %2318 = vrot.lane.b32.xlu0 %v2102, 2
        %v2319 = vpop.permute.xlu0 %2318
        %2320 = vrot.lane.b32.xlu0 %v2103, 2
        %v2321 = vpop.permute.xlu0 %2320
        %2322 = vrot.lane.b32.xlu0 %v2104, 2
        %v2323 = vpop.permute.xlu0 %2322
        %2324 = vrot.lane.b32.xlu0 %v2105, 2
        %v2325 = vpop.permute.xlu0 %2324
        %2326 = vrot.lane.b32.xlu0 %v2106, 2
        %v2327 = vpop.permute.xlu0 %2326
        %2328 = vrot.lane.b32.xlu0 %v2107, 2
        %v2329 = vpop.permute.xlu0 %2328
        %2330 = vrot.lane.b32.xlu0 %v2108, 2
        %v2331 = vpop.permute.xlu0 %2330
        %2332 = vrot.lane.b32.xlu0 %v2109, 2
        %v2333 = vpop.permute.xlu0 %2332
        %2350 = vrot.lane.b32.xlu0 %v2270, 3
        %v2351 = vpop.permute.xlu0 %2350
        %2352 = vrot.lane.b32.xlu0 %v2271, 3
        %v2353 = vpop.permute.xlu0 %2352
        %2354 = vrot.lane.b32.xlu0 %v2272, 3
        %v2355 = vpop.permute.xlu0 %2354
        %2356 = vrot.lane.b32.xlu0 %v2273, 3
        %v2357 = vpop.permute.xlu0 %2356
        %2358 = vrot.lane.b32.xlu0 %v2274, 3
        %v2359 = vpop.permute.xlu0 %2358
        %2360 = vrot.lane.b32.xlu0 %v2275, 3
        %v2361 = vpop.permute.xlu0 %2360
        %2362 = vrot.lane.b32.xlu0 %v2276, 3
        %v2363 = vpop.permute.xlu0 %2362
        %2364 = vrot.lane.b32.xlu0 %v2277, 3
        %v2365 = vpop.permute.xlu0 %2364
        %v2374 = vsel %vm1012, %v1750, %v2287
        %v2375 = vsel %vm1012, %v1751, %v2289
        %v2376 = vsel %vm1012, %v1752, %v2291
        %v2377 = vsel %vm1012, %v1753, %v2293
        %v2378 = vsel %vm1012, %v1754, %v2295
        %v2379 = vsel %vm1012, %v1755, %v2297
        %v2380 = vsel %vm1012, %v1756, %v2299
        %v2381 = vsel %vm1012, %v1757, %v2301
        %v2382 = vsel %vm1304, %v2374, %v2319
        %v2383 = vsel %vm1304, %v2375, %v2321
        %v2384 = vsel %vm1304, %v2376, %v2323
        %v2385 = vsel %vm1304, %v2377, %v2325
        %v2386 = vsel %vm1304, %v2378, %v2327
        %v2387 = vsel %vm1304, %v2379, %v2329
        %v2388 = vsel %vm1304, %v2380, %v2331
        %v2389 = vsel %vm1304, %v2381, %v2333
        %v2390 = vsel %vm850, %v2382, %v2351
        %v2391 = vsel %vm850, %v2383, %v2353
        %v2392 = vsel %vm850, %v2384, %v2355
        %v2393 = vsel %vm850, %v2385, %v2357
        %v2394 = vsel %vm850, %v2386, %v2359
        %v2395 = vsel %vm850, %v2387, %v2361
        %v2396 = vsel %vm850, %v2388, %v2363
        %v2397 = vsel %vm850, %v2389, %v2365
        %v2398 = vld [vmem:[%s6] sm:$0xff]
        %v2399 = vld [vmem:[%s6 + $0x8] sm:$0xff]
        %vm2400 = vcmask 130048
        %v2402 = vsel %vm2400, %v659, 0
        %2404 = vmatprep.subr.mxu0 0.0
        %2405 = vmatpush1.msra.mxu0 %v2398
        %2406 = vmatprep.subr.mxu0 0.0
        %2407 = vmatpush1.msra.mxu0 %v2399
        %2408 = vmatprep.subr.mxu0 0.0
        %2409 = vmatpush1.msra.mxu0 0.0
        %2410 = vmatprep.subr.mxu0 0.0
        %2411 = vmatpush1.msra.mxu0 0.0
        %2412 = vmatprep.subr.mxu0 0.0
        %2413 = vmatpush1.msra.mxu0 0.0
        %2414 = vmatprep.subr.mxu0 0.0
        %2415 = vmatpush1.msra.mxu0 0.0
        %2416 = vmatprep.subr.mxu0 0.0
        %2417 = vmatpush1.msra.mxu0 0.0
        %2418 = vmatprep.subr.mxu0 0.0
        %2419 = vmatpush1.msra.mxu0 0.0
        %2420 = vmatprep.subr.mxu0 0.0
        %2421 = vmatpush1.msra.mxu0 0.0
        %2422 = vmatprep.subr.mxu0 0.0
        %2423 = vmatpush1.msra.mxu0 0.0
        %2424 = vmatprep.subr.mxu0 0.0
        %2425 = vmatpush1.msra.mxu0 0.0
        %2426 = vmatprep.subr.mxu0 0.0
        %2427 = vmatpush1.msra.mxu0 0.0
        %2428 = vmatprep.subr.mxu0 0.0
        %2429 = vmatpush1.msra.mxu0 0.0
        %2430 = vmatprep.subr.mxu0 0.0
        %2431 = vmatpush1.msra.mxu0 0.0
        %2432 = vmatprep.subr.mxu0 0.0
        %2433 = vmatpush1.msra.mxu0 0.0
        %2434 = vmatprep.subr.mxu0 0.0
        %2435 = vmatpush1.msra.mxu0 0.0
        %2436 = vmatprep.subr.mxu0 0.0
        %2437 = vmatpush1.msra.mxu0 0.0
        %2438 = vmatprep.subr.mxu0 0.0
        %2439 = vmatpush1.msra.mxu0 0.0
        %2440 = vmatprep.subr.mxu0 0.0
        %2441 = vmatpush1.msra.mxu0 0.0
        %2442 = vmatprep.subr.mxu0 0.0
        %2443 = vmatpush1.msra.mxu0 0.0
        %2444 = vmatprep.subr.mxu0 0.0
        %2445 = vmatpush1.msra.mxu0 0.0
        %2446 = vmatprep.subr.mxu0 0.0
        %2447 = vmatpush1.msra.mxu0 0.0
        %2448 = vmatprep.subr.mxu0 0.0
        %2449 = vmatpush1.msra.mxu0 0.0
        %2450 = vmatprep.subr.mxu0 0.0
        %2451 = vmatpush1.msra.mxu0 0.0
        %2452 = vmatprep.subr.mxu0 0.0
        %2453 = vmatpush1.msra.mxu0 0.0
        %2454 = vmatprep.subr.mxu0 0.0
        %2455 = vmatpush1.msra.mxu0 0.0
        %2456 = vmatprep.subr.mxu0 0.0
        %2457 = vmatpush1.msra.mxu0 0.0
        %2458 = vmatprep.subr.mxu0 0.0
        %2459 = vmatpush1.msra.mxu0 0.0
        %2460 = vmatprep.subr.mxu0 0.0
        %2461 = vmatpush1.msra.mxu0 0.0
        %2462 = vmatprep.subr.mxu0 0.0
        %2463 = vmatpush1.msra.mxu0 0.0
        %2464 = vmatprep.subr.mxu0 0.0
        %2465 = vmatpush1.msra.mxu0 0.0
        %2466 = vmatprep.subr.mxu0 0.0
        %2467 = vmatpush1.msra.mxu0 0.0
        %2468 = vmatprep.mubr.f32.mxu0 0.0
        %2469 = vmatmul.mubr.f32.gmra.mrb[0].mxu0 %v2402
        %v2470 = vpop.f32.mrb[0].mxu0
        %v2471 = vadd.f32 0.0, %v2470
        %v2472 = vpop.f32.mrb[0].mxu0
        %2473 = vdwg.mxu0
        %v2474 = vld [vmem:[%s539] sm:$0xff]
        %v2475 = vld [vmem:[%s539 + $0x8] sm:$0xff]
        %v2476 = vld [vmem:[%s539 + $0x10] sm:$0xff]
        %v2477 = vld [vmem:[%s539 + $0x18] sm:$0xff]
        %v2478 = vld [vmem:[%s539 + $0x20] sm:$0xff]
        %v2479 = vld [vmem:[%s539 + $0x28] sm:$0xff]
        %v2480 = vld [vmem:[%s539 + $0x30] sm:$0xff]
        %v2481 = vld [vmem:[%s539 + $0x38] sm:$0xff]
        %v2482 = vld [vmem:[%s6 + $0x20] sm:$0xff]
        %v2483 = vld [vmem:[%s6 + $0x28] sm:$0x7]
        %v2485 = vsel %vm850, %v1638, 0
        %v2488 = vsel %vm850, %v1639, 0
        %v2491 = vsel %vm850, %v1640, 0
        %v2494 = vsel %vm850, %v1641, 0
        %v2497 = vsel %vm850, %v1642, 0
        %v2500 = vsel %vm850, %v1643, 0
        %v2503 = vsel %vm850, %v1644, 0
        %v2506 = vsel %vm850, %v1645, 0
        %vm2508 = vcmask 1042432
        %v2510 = vsel %vm2508, %v2483, 0
        %2512 = vmatprep.subr.mxu0 0.0
        %2513 = vmatpush1.msra.mxu0 %v2510
        %2514 = vmatprep.subr.mxu0 0.0
        %2515 = vmatpush1.msra.mxu0 0.0
        %2516 = vmatprep.subr.mxu0 0.0
        %2517 = vmatpush1.msra.mxu0 0.0
        %2518 = vmatprep.subr.mxu0 0.0
        %2519 = vmatpush1.msra.mxu0 0.0
        %2520 = vmatprep.subr.mxu0 0.0
        %2521 = vmatpush1.msra.mxu0 0.0
        %2522 = vmatprep.subr.mxu0 0.0
        %2523 = vmatpush1.msra.mxu0 0.0
        %2524 = vmatprep.subr.mxu0 0.0
        %2525 = vmatpush1.msra.mxu0 0.0
        %2526 = vmatprep.subr.mxu0 0.0
        %2527 = vmatpush1.msra.mxu0 0.0
        %2528 = vmatprep.subr.mxu0 0.0
        %2529 = vmatpush1.msra.mxu0 0.0
        %2530 = vmatprep.subr.mxu0 0.0
        %2531 = vmatpush1.msra.mxu0 0.0
        %2532 = vmatprep.subr.mxu0 0.0
        %2533 = vmatpush1.msra.mxu0 0.0
        %2534 = vmatprep.subr.mxu0 0.0
        %2535 = vmatpush1.msra.mxu0 0.0
        %2536 = vmatprep.subr.mxu0 0.0
        %2537 = vmatpush1.msra.mxu0 0.0
        %2538 = vmatprep.subr.mxu0 0.0
        %2539 = vmatpush1.msra.mxu0 0.0
        %2540 = vmatprep.subr.mxu0 0.0
        %2541 = vmatpush1.msra.mxu0 0.0
        %2542 = vmatprep.subr.mxu0 0.0
        %2543 = vmatpush1.msra.mxu0 0.0
        %2544 = vmatprep.subr.mxu0 0.0
        %2545 = vmatpush1.msra.mxu0 0.0
        %2546 = vmatprep.subr.mxu0 0.0
        %2547 = vmatpush1.msra.mxu0 0.0
        %2548 = vmatprep.subr.mxu0 0.0
        %2549 = vmatpush1.msra.mxu0 0.0
        %2550 = vmatprep.subr.mxu0 0.0
        %2551 = vmatpush1.msra.mxu0 0.0
        %2552 = vmatprep.subr.mxu0 0.0
        %2553 = vmatpush1.msra.mxu0 0.0
        %2554 = vmatprep.subr.mxu0 0.0
        %2555 = vmatpush1.msra.mxu0 0.0
        %2556 = vmatprep.subr.mxu0 0.0
        %2557 = vmatpush1.msra.mxu0 0.0
        %2558 = vmatprep.subr.mxu0 0.0
        %2559 = vmatpush1.msra.mxu0 0.0
        %2560 = vmatprep.subr.mxu0 0.0
        %2561 = vmatpush1.msra.mxu0 0.0
        %2562 = vmatprep.subr.mxu0 0.0
        %2563 = vmatpush1.msra.mxu0 0.0
        %2564 = vmatprep.subr.mxu0 0.0
        %2565 = vmatpush1.msra.mxu0 0.0
        %2566 = vmatprep.subr.mxu0 0.0
        %2567 = vmatpush1.msra.mxu0 0.0
        %2568 = vmatprep.subr.mxu0 0.0
        %2569 = vmatpush1.msra.mxu0 0.0
        %2570 = vmatprep.subr.mxu0 0.0
        %2571 = vmatpush1.msra.mxu0 0.0
        %2572 = vmatprep.subr.mxu0 0.0
        %2573 = vmatpush1.msra.mxu0 0.0
        %2574 = vmatprep.subr.mxu0 0.0
        %2575 = vmatpush1.msra.mxu0 0.0
        %2576 = vmatprep.mubr.f32.mxu0 0.0
        %2577 = vmatmul.mubr.f32.gmra.mrb[0].mxu0 %v2485
        %v2578 = vpop.f32.mrb[0].mxu0
        %v2579 = vadd.f32 0.0, %v2578
        %v2580 = vpop.f32.mrb[0].mxu0
        %2581 = vmatprep.mubr.f32.mxu0 0.0
        %2582 = vmatmul.mubr.f32.gmra.mrb[0].mxu0 %v2488
        %v2583 = vpop.f32.mrb[0].mxu0
        %v2584 = vadd.f32 0.0, %v2583
        %v2585 = vpop.f32.mrb[0].mxu0
        %2586 = vmatprep.mubr.f32.mxu0 0.0
        %2587 = vmatmul.mubr.f32.gmra.mrb[0].mxu0 %v2491
        %v2588 = vpop.f32.mrb[0].mxu0
        %v2589 = vadd.f32 0.0, %v2588
        %v2590 = vpop.f32.mrb[0].mxu0
        %2591 = vmatprep.mubr.f32.mxu0 0.0
        %2592 = vmatmul.mubr.f32.gmra.mrb[0].mxu0 %v2494
        %v2593 = vpop.f32.mrb[0].mxu0
        %v2594 = vadd.f32 0.0, %v2593
        %v2595 = vpop.f32.mrb[0].mxu0
        %2596 = vmatprep.mubr.f32.mxu0 0.0
        %2597 = vmatmul.mubr.f32.gmra.mrb[0].mxu0 %v2497
        %v2598 = vpop.f32.mrb[0].mxu0
        %v2599 = vadd.f32 0.0, %v2598
        %v2600 = vpop.f32.mrb[0].mxu0
        %2601 = vmatprep.mubr.f32.mxu0 0.0
        %2602 = vmatmul.mubr.f32.gmra.mrb[0].mxu0 %v2500
        %v2603 = vpop.f32.mrb[0].mxu0
        %v2604 = vadd.f32 0.0, %v2603
        %v2605 = vpop.f32.mrb[0].mxu0
        %2606 = vmatprep.mubr.f32.mxu0 0.0
        %2607 = vmatmul.mubr.f32.gmra.mrb[0].mxu0 %v2503
        %v2608 = vpop.f32.mrb[0].mxu0
        %v2609 = vadd.f32 0.0, %v2608
        %v2610 = vpop.f32.mrb[0].mxu0
        %2611 = vmatprep.mubr.f32.mxu0 0.0
        %2612 = vmatmul.mubr.f32.gmra.mrb[0].mxu0 %v2506
        %v2613 = vpop.f32.mrb[0].mxu0
        %v2614 = vadd.f32 0.0, %v2613
        %v2615 = vpop.f32.mrb[0].mxu0
        %2616 = vdwg.mxu0
        %v2617 = vld [vmem:[%s6 + $0x2b] sm:$0xf]
        %v2619 = vsel %vm973, %v2390, 0
        %v2622 = vsel %vm973, %v2391, 0
        %v2625 = vsel %vm973, %v2392, 0
        %v2628 = vsel %vm973, %v2393, 0
        %v2631 = vsel %vm973, %v2394, 0
        %v2634 = vsel %vm973, %v2395, 0
        %v2637 = vsel %vm973, %v2396, 0
        %v2640 = vsel %vm973, %v2397, 0
        %vm2642 = vcmask 1043456
        %v2644 = vsel %vm2642, %v2617, 0
        %2646 = vmatprep.subr.mxu0 0.0
        %2647 = vmatpush1.msra.mxu0 %v2644
        %2648 = vmatprep.subr.mxu0 0.0
        %2649 = vmatpush1.msra.mxu0 0.0
        %2650 = vmatprep.subr.mxu0 0.0
        %2651 = vmatpush1.msra.mxu0 0.0
        %2652 = vmatprep.subr.mxu0 0.0
        %2653 = vmatpush1.msra.mxu0 0.0
        %2654 = vmatprep.subr.mxu0 0.0
        %2655 = vmatpush1.msra.mxu0 0.0
        %2656 = vmatprep.subr.mxu0 0.0
        %2657 = vmatpush1.msra.mxu0 0.0
        %2658 = vmatprep.subr.mxu0 0.0
        %2659 = vmatpush1.msra.mxu0 0.0
        %2660 = vmatprep.subr.mxu0 0.0
        %2661 = vmatpush1.msra.mxu0 0.0
        %2662 = vmatprep.subr.mxu0 0.0
        %2663 = vmatpush1.msra.mxu0 0.0
        %2664 = vmatprep.subr.mxu0 0.0
        %2665 = vmatpush1.msra.mxu0 0.0
        %2666 = vmatprep.subr.mxu0 0.0
        %2667 = vmatpush1.msra.mxu0 0.0
        %2668 = vmatprep.subr.mxu0 0.0
        %2669 = vmatpush1.msra.mxu0 0.0
        %2670 = vmatprep.subr.mxu0 0.0
        %2671 = vmatpush1.msra.mxu0 0.0
        %2672 = vmatprep.subr.mxu0 0.0
        %2673 = vmatpush1.msra.mxu0 0.0
        %2674 = vmatprep.subr.mxu0 0.0
        %2675 = vmatpush1.msra.mxu0 0.0
        %2676 = vmatprep.subr.mxu0 0.0
        %2677 = vmatpush1.msra.mxu0 0.0
        %2678 = vmatprep.subr.mxu0 0.0
        %2679 = vmatpush1.msra.mxu0 0.0
        %2680 = vmatprep.subr.mxu0 0.0
        %2681 = vmatpush1.msra.mxu0 0.0
        %2682 = vmatprep.subr.mxu0 0.0
        %2683 = vmatpush1.msra.mxu0 0.0
        %2684 = vmatprep.subr.mxu0 0.0
        %2685 = vmatpush1.msra.mxu0 0.0
        %2686 = vmatprep.subr.mxu0 0.0
        %2687 = vmatpush1.msra.mxu0 0.0
        %2688 = vmatprep.subr.mxu0 0.0
        %2689 = vmatpush1.msra.mxu0 0.0
        %2690 = vmatprep.subr.mxu0 0.0
        %2691 = vmatpush1.msra.mxu0 0.0
        %2692 = vmatprep.subr.mxu0 0.0
        %2693 = vmatpush1.msra.mxu0 0.0
        %2694 = vmatprep.subr.mxu0 0.0
        %2695 = vmatpush1.msra.mxu0 0.0
        %2696 = vmatprep.subr.mxu0 0.0
        %2697 = vmatpush1.msra.mxu0 0.0
        %2698 = vmatprep.subr.mxu0 0.0
        %2699 = vmatpush1.msra.mxu0 0.0
        %2700 = vmatprep.subr.mxu0 0.0
        %2701 = vmatpush1.msra.mxu0 0.0
        %2702 = vmatprep.subr.mxu0 0.0
        %2703 = vmatpush1.msra.mxu0 0.0
        %2704 = vmatprep.subr.mxu0 0.0
        %2705 = vmatpush1.msra.mxu0 0.0
        %2706 = vmatprep.subr.mxu0 0.0
        %2707 = vmatpush1.msra.mxu0 0.0
        %2708 = vmatprep.subr.mxu0 0.0
        %2709 = vmatpush1.msra.mxu0 0.0
        %2710 = vmatprep.mubr.f32.mxu0 0.0
        %2711 = vmatmul.mubr.f32.gmra.mrb[0].mxu0 %v2619
        %v2712 = vpop.f32.mrb[0].mxu0
        %v2713 = vadd.f32 0.0, %v2712
        %v2714 = vpop.f32.mrb[0].mxu0
        %2715 = vmatprep.mubr.f32.mxu0 0.0
        %2716 = vmatmul.mubr.f32.gmra.mrb[0].mxu0 %v2622
        %v2717 = vpop.f32.mrb[0].mxu0
        %v2718 = vadd.f32 0.0, %v2717
        %v2719 = vpop.f32.mrb[0].mxu0
        %2720 = vmatprep.mubr.f32.mxu0 0.0
        %2721 = vmatmul.mubr.f32.gmra.mrb[0].mxu0 %v2625
        %v2722 = vpop.f32.mrb[0].mxu0
        %v2723 = vadd.f32 0.0, %v2722
        %v2724 = vpop.f32.mrb[0].mxu0
        %2725 = vmatprep.mubr.f32.mxu0 0.0
        %2726 = vmatmul.mubr.f32.gmra.mrb[0].mxu0 %v2628
        %v2727 = vpop.f32.mrb[0].mxu0
        %v2728 = vadd.f32 0.0, %v2727
        %v2729 = vpop.f32.mrb[0].mxu0
        %2730 = vmatprep.mubr.f32.mxu0 0.0
        %2731 = vmatmul.mubr.f32.gmra.mrb[0].mxu0 %v2631
        %v2732 = vpop.f32.mrb[0].mxu0
        %v2733 = vadd.f32 0.0, %v2732
        %v2734 = vpop.f32.mrb[0].mxu0
        %2735 = vmatprep.mubr.f32.mxu0 0.0
        %2736 = vmatmul.mubr.f32.gmra.mrb[0].mxu0 %v2634
        %v2737 = vpop.f32.mrb[0].mxu0
        %v2738 = vadd.f32 0.0, %v2737
        %v2739 = vpop.f32.mrb[0].mxu0
        %2740 = vmatprep.mubr.f32.mxu0 0.0
        %2741 = vmatmul.mubr.f32.gmra.mrb[0].mxu0 %v2637
        %v2742 = vpop.f32.mrb[0].mxu0
        %v2743 = vadd.f32 0.0, %v2742
        %v2744 = vpop.f32.mrb[0].mxu0
        %2745 = vmatprep.mubr.f32.mxu0 0.0
        %2746 = vmatmul.mubr.f32.gmra.mrb[0].mxu0 %v2640
        %v2747 = vpop.f32.mrb[0].mxu0
        %v2748 = vadd.f32 0.0, %v2747
        %v2749 = vpop.f32.mrb[0].mxu0
        %2750 = vdwg.mxu0
        %v2751 = vld [vmem:[%s6 + $0x2f] sm:$0x1]
        %v2752 = vlaneseq
        %v2753 = vshrl.u32 %v2752, 7
        %v2754 = vsub.s32 0, %v2753
        %v2755 = vrot.slane %v2751, %v2754
        %v2756 = vmul.f32 %v853, %v2755
        %v2757 = vmul.f32 %v856, %v2755
        %v2758 = vmul.f32 %v859, %v2755
        %v2759 = vmul.f32 %v862, %v2755
        %v2760 = vmul.f32 %v865, %v2755
        %v2761 = vmul.f32 %v868, %v2755
        %v2762 = vmul.f32 %v871, %v2755
        %v2763 = vmul.f32 %v874, %v2755
        %v2764 = vld [vmem:[%s6 + $0x30] sm:$0x1]
        %v2765 = vlaneseq
        %v2766 = vshrl.u32 %v2765, 7
        %v2767 = vsub.s32 0, %v2766
        %v2768 = vrot.slane %v2764, %v2767
        %v2769 = vmul.f32 %v998, %v2768
        %v2770 = vmul.f32 %v999, %v2768
        %v2771 = vmul.f32 %v1000, %v2768
        %v2772 = vmul.f32 %v1001, %v2768
        %v2773 = vmul.f32 %v1002, %v2768
        %v2774 = vmul.f32 %v1003, %v2768
        %v2775 = vmul.f32 %v1004, %v2768
        %v2776 = vmul.f32 %v1005, %v2768
        %vm2777 = vcmask 64512
        %v2779 = vsel %vm2777, %v2474, 0
        %v2782 = vsel %vm2777, %v2475, 0
        %v2785 = vsel %vm2777, %v2476, 0
        %v2788 = vsel %vm2777, %v2477, 0
        %v2791 = vsel %vm2777, %v2478, 0
        %v2794 = vsel %vm2777, %v2479, 0
        %v2797 = vsel %vm2777, %v2480, 0
        %v2800 = vsel %vm2777, %v2481, 0
        %2802 = vmatprep.subr.mxu0 0.0
        %2803 = vmatpush1.msra.mxu0 %v2482
        %2804 = vmatprep.subr.mxu0 0.0
        %2805 = vmatpush1.msra.mxu0 0.0
        %2806 = vmatprep.subr.mxu0 0.0
        %2807 = vmatpush1.msra.mxu0 0.0
        %2808 = vmatprep.subr.mxu0 0.0
        %2809 = vmatpush1.msra.mxu0 0.0
        %2810 = vmatprep.subr.mxu0 0.0
        %2811 = vmatpush1.msra.mxu0 0.0
        %2812 = vmatprep.subr.mxu0 0.0
        %2813 = vmatpush1.msra.mxu0 0.0
        %2814 = vmatprep.subr.mxu0 0.0
        %2815 = vmatpush1.msra.mxu0 0.0
        %2816 = vmatprep.subr.mxu0 0.0
        %2817 = vmatpush1.msra.mxu0 0.0
        %2818 = vmatprep.subr.mxu0 0.0
        %2819 = vmatpush1.msra.mxu0 0.0
        %2820 = vmatprep.subr.mxu0 0.0
        %2821 = vmatpush1.msra.mxu0 0.0
        %2822 = vmatprep.subr.mxu0 0.0
        %2823 = vmatpush1.msra.mxu0 0.0
        %2824 = vmatprep.subr.mxu0 0.0
        %2825 = vmatpush1.msra.mxu0 0.0
        %2826 = vmatprep.subr.mxu0 0.0
        %2827 = vmatpush1.msra.mxu0 0.0
        %2828 = vmatprep.subr.mxu0 0.0
        %2829 = vmatpush1.msra.mxu0 0.0
        %2830 = vmatprep.subr.mxu0 0.0
        %2831 = vmatpush1.msra.mxu0 0.0
        %2832 = vmatprep.subr.mxu0 0.0
        %2833 = vmatpush1.msra.mxu0 0.0
        %2834 = vmatprep.subr.mxu0 0.0
        %2835 = vmatpush1.msra.mxu0 0.0
        %2836 = vmatprep.subr.mxu0 0.0
        %2837 = vmatpush1.msra.mxu0 0.0
        %2838 = vmatprep.subr.mxu0 0.0
        %2839 = vmatpush1.msra.mxu0 0.0
        %2840 = vmatprep.subr.mxu0 0.0
        %2841 = vmatpush1.msra.mxu0 0.0
        %2842 = vmatprep.subr.mxu0 0.0
        %2843 = vmatpush1.msra.mxu0 0.0
        %2844 = vmatprep.subr.mxu0 0.0
        %2845 = vmatpush1.msra.mxu0 0.0
        %2846 = vmatprep.subr.mxu0 0.0
        %2847 = vmatpush1.msra.mxu0 0.0
        %2848 = vmatprep.subr.mxu0 0.0
        %2849 = vmatpush1.msra.mxu0 0.0
        %2850 = vmatprep.subr.mxu0 0.0
        %2851 = vmatpush1.msra.mxu0 0.0
        %2852 = vmatprep.subr.mxu0 0.0
        %2853 = vmatpush1.msra.mxu0 0.0
        %2854 = vmatprep.subr.mxu0 0.0
        %2855 = vmatpush1.msra.mxu0 0.0
        %2856 = vmatprep.subr.mxu0 0.0
        %2857 = vmatpush1.msra.mxu0 0.0
        %2858 = vmatprep.subr.mxu0 0.0
        %2859 = vmatpush1.msra.mxu0 0.0
        %2860 = vmatprep.subr.mxu0 0.0
        %2861 = vmatpush1.msra.mxu0 0.0
        %2862 = vmatprep.subr.mxu0 0.0
        %2863 = vmatpush1.msra.mxu0 0.0
        %2864 = vmatprep.subr.mxu0 0.0
        %2865 = vmatpush1.msra.mxu0 0.0
        %2866 = vmatprep.mubr.f32.mxu0 0.0
        %2867 = vmatmul.mubr.f32.gmra.mrb[0].mxu0 %v2779
        %v2868 = vpop.f32.mrb[0].mxu0
        %v2869 = vadd.f32 %v2579, %v2868
        %v2870 = vpop.f32.mrb[0].mxu0
        %2871 = vmatprep.mubr.f32.mxu0 0.0
        %2872 = vmatmul.mubr.f32.gmra.mrb[0].mxu0 %v2782
        %v2873 = vpop.f32.mrb[0].mxu0
        %v2874 = vadd.f32 %v2584, %v2873
        %v2875 = vpop.f32.mrb[0].mxu0
        %2876 = vmatprep.mubr.f32.mxu0 0.0
        %2877 = vmatmul.mubr.f32.gmra.mrb[0].mxu0 %v2785
        %v2878 = vpop.f32.mrb[0].mxu0
        %v2879 = vadd.f32 %v2589, %v2878
        %v2880 = vpop.f32.mrb[0].mxu0
        %2881 = vmatprep.mubr.f32.mxu0 0.0
        %2882 = vmatmul.mubr.f32.gmra.mrb[0].mxu0 %v2788
        %v2883 = vpop.f32.mrb[0].mxu0
        %v2884 = vadd.f32 %v2594, %v2883
        %v2885 = vpop.f32.mrb[0].mxu0
        %2886 = vmatprep.mubr.f32.mxu0 0.0
        %2887 = vmatmul.mubr.f32.gmra.mrb[0].mxu0 %v2791
        %v2888 = vpop.f32.mrb[0].mxu0
        %v2889 = vadd.f32 %v2599, %v2888
        %v2890 = vpop.f32.mrb[0].mxu0
        %2891 = vmatprep.mubr.f32.mxu0 0.0
        %2892 = vmatmul.mubr.f32.gmra.mrb[0].mxu0 %v2794
        %v2893 = vpop.f32.mrb[0].mxu0
        %v2894 = vadd.f32 %v2604, %v2893
        %v2895 = vpop.f32.mrb[0].mxu0
        %2896 = vmatprep.mubr.f32.mxu0 0.0
        %2897 = vmatmul.mubr.f32.gmra.mrb[0].mxu0 %v2797
        %v2898 = vpop.f32.mrb[0].mxu0
        %v2899 = vadd.f32 %v2609, %v2898
        %v2900 = vpop.f32.mrb[0].mxu0
        %2901 = vmatprep.mubr.f32.mxu0 0.0
        %2902 = vmatmul.mubr.f32.gmra.mrb[0].mxu0 %v2800
        %v2903 = vpop.f32.mrb[0].mxu0
        %v2904 = vadd.f32 %v2614, %v2903
        %v2905 = vpop.f32.mrb[0].mxu0
        %2906 = vdwg.mxu0
        %v2907 = vadd.f32 %v2869, %v2713
        %v2908 = vadd.f32 %v2874, %v2718
        %v2909 = vadd.f32 %v2879, %v2723
        %v2910 = vadd.f32 %v2884, %v2728
        %v2911 = vadd.f32 %v2889, %v2733
        %v2912 = vadd.f32 %v2894, %v2738
        %v2913 = vadd.f32 %v2899, %v2743
        %v2914 = vadd.f32 %v2904, %v2748
        %v2915 = vadd.f32 %v2907, %v2756
        %v2916 = vadd.f32 %v2908, %v2757
        %v2917 = vadd.f32 %v2909, %v2758
        %v2918 = vadd.f32 %v2910, %v2759
        %v2919 = vadd.f32 %v2911, %v2760
        %v2920 = vadd.f32 %v2912, %v2761
        %v2921 = vadd.f32 %v2913, %v2762
        %v2922 = vadd.f32 %v2914, %v2763
        %v2923 = vadd.f32 %v2915, %v2769
        %v2924 = vadd.f32 %v2916, %v2770
        %v2925 = vadd.f32 %v2917, %v2771
        %v2926 = vadd.f32 %v2918, %v2772
        %v2927 = vadd.f32 %v2919, %v2773
        %v2928 = vadd.f32 %v2920, %v2774
        %v2929 = vadd.f32 %v2921, %v2775
        %v2930 = vadd.f32 %v2922, %v2776
        %v2932 = vcombine.high %v2471, %v2471
        %v2934 = vunpack.c.l.s4 1966171168
        %v2935 = vunpack.c.0.s8 %v2934
        %v2936 = vlaneseq
        %v2937 = vshrl.u32 %v2936, 7
        %v2938 = vsub.s32 %v2935, %v2937
        %v2939 = vrot.slane %v2471, %v2938
        %v2941 = vunpack.c.l.s4 1966171168
        %v2942 = vunpack.c.0.s8 %v2941
        %v2943 = vlaneseq
        %v2944 = vshrl.u32 %v2943, 7
        %v2945 = vsub.s32 %v2942, %v2944
        %v2946 = vrot.slane %v2932, %v2945
        %v2947 = vcombine.high %v2939, %v2939
        %v2948 = vcombine.high %v2946, %v2946
        %v2950 = vunpack.c.l.s4 1966171168
        %v2951 = vunpack.c.0.s8 %v2950
        %v2952 = vlaneseq
        %v2953 = vshrl.u32 %v2952, 7
        %v2954 = vsub.s32 %v2951, %v2953
        %v2955 = vrot.slane %v2939, %v2954
        %v2957 = vunpack.c.l.s4 1966171168
        %v2958 = vunpack.c.0.s8 %v2957
        %v2959 = vlaneseq
        %v2960 = vshrl.u32 %v2959, 7
        %v2961 = vsub.s32 %v2958, %v2960
        %v2962 = vrot.slane %v2946, %v2961
        %v2964 = vunpack.c.l.s4 1966171168
        %v2965 = vunpack.c.0.s8 %v2964
        %v2966 = vlaneseq
        %v2967 = vshrl.u32 %v2966, 7
        %v2968 = vsub.s32 %v2965, %v2967
        %v2969 = vrot.slane %v2947, %v2968
        %v2971 = vunpack.c.l.s4 1966171168
        %v2972 = vunpack.c.0.s8 %v2971
        %v2973 = vlaneseq
        %v2974 = vshrl.u32 %v2973, 7
        %v2975 = vsub.s32 %v2972, %v2974
        %v2976 = vrot.slane %v2948, %v2975
        %v2977 = vcombine.high %v2955, %v2955
        %v2978 = vcombine.high %v2962, %v2962
        %v2979 = vcombine.high %v2969, %v2969
        %v2980 = vcombine.high %v2976, %v2976
        %v2981 = vld [vmem:[#allocation2] sm:$0xff]
        %v2982 = vlaneseq
        %v2983 = vshrl.u32 %v2982, 7
        %v2984 = vsub.s32 0, %v2983
        %v2985 = vrot.slane %v2955, %v2984
        %v2986 = vlaneseq
        %v2987 = vshrl.u32 %v2986, 7
        %v2988 = vsub.s32 0, %v2987
        %v2989 = vrot.slane %v2969, %v2988
        %v2990 = vlaneseq
        %v2991 = vshrl.u32 %v2990, 7
        %v2992 = vsub.s32 0, %v2991
        %v2993 = vrot.slane %v2977, %v2992
        %v2994 = vlaneseq
        %v2995 = vshrl.u32 %v2994, 7
        %v2996 = vsub.s32 0, %v2995
        %v2997 = vrot.slane %v2979, %v2996
        %v2998 = vlaneseq
        %v2999 = vshrl.u32 %v2998, 7
        %v3000 = vsub.s32 0, %v2999
        %v3001 = vrot.slane %v2962, %v3000
        %v3002 = vlaneseq
        %v3003 = vshrl.u32 %v3002, 7
        %v3004 = vsub.s32 0, %v3003
        %v3005 = vrot.slane %v2976, %v3004
        %v3006 = vlaneseq
        %v3007 = vshrl.u32 %v3006, 7
        %v3008 = vsub.s32 0, %v3007
        %v3009 = vrot.slane %v2978, %v3008
        %v3010 = vlaneseq
        %v3011 = vshrl.u32 %v3010, 7
        %v3012 = vsub.s32 0, %v3011
        %v3013 = vrot.slane %v2980, %v3012
        %v3022 = vadd.f32 %v2985, %v2981
        %v3023 = vadd.f32 %v2989, %v2981
        %v3024 = vadd.f32 %v2993, %v2981
        %v3025 = vadd.f32 %v2997, %v2981
        %v3026 = vadd.f32 %v3001, %v2981
        %v3027 = vadd.f32 %v3005, %v2981
        %v3028 = vadd.f32 %v3009, %v2981
        %v3029 = vadd.f32 %v3013, %v2981
        %v3030 = vadd.f32 %v3022, %v2923
        %v3031 = vadd.f32 %v3023, %v2924
        %v3032 = vadd.f32 %v3024, %v2925
        %v3033 = vadd.f32 %v3025, %v2926
        %v3034 = vadd.f32 %v3026, %v2927
        %v3035 = vadd.f32 %v3027, %v2928
        %v3036 = vadd.f32 %v3028, %v2929
        %v3037 = vadd.f32 %v3029, %v2930
        %v3038 = vmax.f32 %v3030, 0.0
        %v3039 = vmax.f32 %v3031, 0.0
        %v3040 = vmax.f32 %v3032, 0.0
        %v3041 = vmax.f32 %v3033, 0.0
        %v3042 = vmax.f32 %v3034, 0.0
        %v3043 = vmax.f32 %v3035, 0.0
        %v3044 = vmax.f32 %v3036, 0.0
        %v3045 = vmax.f32 %v3037, 0.0
        %v3046 = vld [vmem:[%s8] sm:$0xff]
        %v3047 = vld [vmem:[%s8 + $0x8] sm:$0xff]
        %v3048 = vld [vmem:[%s8 + $0x10] sm:$0xff]
        %v3049 = vld [vmem:[%s8 + $0x18] sm:$0xff]
        %v3050 = vld [vmem:[%s8 + $0x20] sm:$0xff]
        %v3051 = vld [vmem:[%s8 + $0x28] sm:$0xff]
        %v3052 = vld [vmem:[%s8 + $0x30] sm:$0xff]
        %v3053 = vld [vmem:[%s8 + $0x38] sm:$0xff]
        %v3054 = vld [vmem:[%s9] sm:$0x1]
        %v3056 = vlaneseq
        %v3057 = vshrl.u32 %v3056, 7
        %v3058 = vsub.s32 0, %v3057
        %v3059 = vrot.slane %v3054, %v3058
        %vm3061 = vcmask 523264
        %v3063 = vsel %vm3061, %v3038, 0
        %v3066 = vsel %vm3061, %v3039, 0
        %v3069 = vsel %vm3061, %v3040, 0
        %v3072 = vsel %vm3061, %v3041, 0
        %v3075 = vsel %vm3061, %v3042, 0
        %v3078 = vsel %vm3061, %v3043, 0
        %v3081 = vsel %vm3061, %v3044, 0
        %v3084 = vsel %vm3061, %v3045, 0
        %3086 = vmatprep.subr.mxu0 0.0
        %3087 = vmatpush1.msra.mxu0 %v3046
        %3088 = vmatprep.subr.mxu0 0.0
        %3089 = vmatpush1.msra.mxu0 %v3047
        %3090 = vmatprep.subr.mxu0 0.0
        %3091 = vmatpush1.msra.mxu0 %v3048
        %3092 = vmatprep.subr.mxu0 0.0
        %3093 = vmatpush1.msra.mxu0 %v3049
        %3094 = vmatprep.subr.mxu0 0.0
        %3095 = vmatpush1.msra.mxu0 %v3050
        %3096 = vmatprep.subr.mxu0 0.0
        %3097 = vmatpush1.msra.mxu0 %v3051
        %3098 = vmatprep.subr.mxu0 0.0
        %3099 = vmatpush1.msra.mxu0 %v3052
        %3100 = vmatprep.subr.mxu0 0.0
        %3101 = vmatpush1.msra.mxu0 %v3053
        %3102 = vmatprep.subr.mxu0 0.0
        %3103 = vmatpush1.msra.mxu0 0.0
        %3104 = vmatprep.subr.mxu0 0.0
        %3105 = vmatpush1.msra.mxu0 0.0
        %3106 = vmatprep.subr.mxu0 0.0
        %3107 = vmatpush1.msra.mxu0 0.0
        %3108 = vmatprep.subr.mxu0 0.0
        %3109 = vmatpush1.msra.mxu0 0.0
        %3110 = vmatprep.subr.mxu0 0.0
        %3111 = vmatpush1.msra.mxu0 0.0
        %3112 = vmatprep.subr.mxu0 0.0
        %3113 = vmatpush1.msra.mxu0 0.0
        %3114 = vmatprep.subr.mxu0 0.0
        %3115 = vmatpush1.msra.mxu0 0.0
        %3116 = vmatprep.subr.mxu0 0.0
        %3117 = vmatpush1.msra.mxu0 0.0
        %3118 = vmatprep.subr.mxu0 0.0
        %3119 = vmatpush1.msra.mxu0 0.0
        %3120 = vmatprep.subr.mxu0 0.0
        %3121 = vmatpush1.msra.mxu0 0.0
        %3122 = vmatprep.subr.mxu0 0.0
        %3123 = vmatpush1.msra.mxu0 0.0
        %3124 = vmatprep.subr.mxu0 0.0
        %3125 = vmatpush1.msra.mxu0 0.0
        %3126 = vmatprep.subr.mxu0 0.0
        %3127 = vmatpush1.msra.mxu0 0.0
        %3128 = vmatprep.subr.mxu0 0.0
        %3129 = vmatpush1.msra.mxu0 0.0
        %3130 = vmatprep.subr.mxu0 0.0
        %3131 = vmatpush1.msra.mxu0 0.0
        %3132 = vmatprep.subr.mxu0 0.0
        %3133 = vmatpush1.msra.mxu0 0.0
        %3134 = vmatprep.subr.mxu0 0.0
        %3135 = vmatpush1.msra.mxu0 0.0
        %3136 = vmatprep.subr.mxu0 0.0
        %3137 = vmatpush1.msra.mxu0 0.0
        %3138 = vmatprep.subr.mxu0 0.0
        %3139 = vmatpush1.msra.mxu0 0.0
        %3140 = vmatprep.subr.mxu0 0.0
        %3141 = vmatpush1.msra.mxu0 0.0
        %3142 = vmatprep.subr.mxu0 0.0
        %3143 = vmatpush1.msra.mxu0 0.0
        %3144 = vmatprep.subr.mxu0 0.0
        %3145 = vmatpush1.msra.mxu0 0.0
        %3146 = vmatprep.subr.mxu0 0.0
        %3147 = vmatpush1.msra.mxu0 0.0
        %3148 = vmatprep.subr.mxu0 0.0
        %3149 = vmatpush1.msra.mxu0 0.0
        %3150 = vmatprep.mubr.f32.mxu0 0.0
        %3151 = vmatmul.mubr.f32.gmra.mrb[0].mxu0 %v3063
        %v3152 = vpop.f32.mrb[0].mxu0
        %v3153 = vadd.f32 %v3059, %v3152
        %v3154 = vpop.f32.mrb[0].mxu0
        %3155 = vmatprep.mubr.f32.mxu0 0.0
        %3156 = vmatmul.mubr.f32.gmra.mrb[0].mxu0 %v3066
        %v3157 = vpop.f32.mrb[0].mxu0
        %v3158 = vadd.f32 %v3059, %v3157
        %v3159 = vpop.f32.mrb[0].mxu0
        %3160 = vmatprep.mubr.f32.mxu0 0.0
        %3161 = vmatmul.mubr.f32.gmra.mrb[0].mxu0 %v3069
        %v3162 = vpop.f32.mrb[0].mxu0
        %v3163 = vadd.f32 %v3059, %v3162
        %v3164 = vpop.f32.mrb[0].mxu0
        %3165 = vmatprep.mubr.f32.mxu0 0.0
        %3166 = vmatmul.mubr.f32.gmra.mrb[0].mxu0 %v3072
        %v3167 = vpop.f32.mrb[0].mxu0
        %v3168 = vadd.f32 %v3059, %v3167
        %v3169 = vpop.f32.mrb[0].mxu0
        %3170 = vmatprep.mubr.f32.mxu0 0.0
        %3171 = vmatmul.mubr.f32.gmra.mrb[0].mxu0 %v3075
        %v3172 = vpop.f32.mrb[0].mxu0
        %v3173 = vadd.f32 %v3059, %v3172
        %v3174 = vpop.f32.mrb[0].mxu0
        %3175 = vmatprep.mubr.f32.mxu0 0.0
        %3176 = vmatmul.mubr.f32.gmra.mrb[0].mxu0 %v3078
        %v3177 = vpop.f32.mrb[0].mxu0
        %v3178 = vadd.f32 %v3059, %v3177
        %v3179 = vpop.f32.mrb[0].mxu0
        %3180 = vmatprep.mubr.f32.mxu0 0.0
        %3181 = vmatmul.mubr.f32.gmra.mrb[0].mxu0 %v3081
        %v3182 = vpop.f32.mrb[0].mxu0
        %v3183 = vadd.f32 %v3059, %v3182
        %v3184 = vpop.f32.mrb[0].mxu0
        %3185 = vmatprep.mubr.f32.mxu0 0.0
        %3186 = vmatmul.mubr.f32.gmra.mrb[0].mxu0 %v3084
        %v3187 = vpop.f32.mrb[0].mxu0
        %v3188 = vadd.f32 %v3059, %v3187
        %v3189 = vpop.f32.mrb[0].mxu0
        %3190 = vdwg.mxu0
        %v3191 = vmul.f32 %v3153, %v694
        %v3192 = vmul.f32 %v3158, %v701
        %v3193 = vmul.f32 %v3163, %v708
        %v3194 = vmul.f32 %v3168, %v715
        %v3195 = vmul.f32 %v3173, %v722
        %v3196 = vmul.f32 %v3178, %v729
        %v3197 = vmul.f32 %v3183, %v736
        %v3198 = vmul.f32 %v3188, %v743
        %v3199 = vsel %vm2400, %v3191, 0.0
        %v3200 = vrot.slane %v3199, 4
        %v3201 = vadd.f32 %v3199, %v3200
        %v3202 = vrot.slane %v3201, 2
        %v3203 = vadd.f32 %v3201, %v3202
        %v3204 = vrot.slane %v3203, 1
        %v3205 = vadd.f32 %v3203, %v3204
        %v3206 = vsel %vm2400, %v3192, 0.0
        %v3207 = vrot.slane %v3206, 4
        %v3208 = vadd.f32 %v3206, %v3207
        %v3209 = vrot.slane %v3208, 2
        %v3210 = vadd.f32 %v3208, %v3209
        %v3211 = vrot.slane %v3210, 1
        %v3212 = vadd.f32 %v3210, %v3211
        %v3213 = vsel %vm2400, %v3193, 0.0
        %v3214 = vrot.slane %v3213, 4
        %v3215 = vadd.f32 %v3213, %v3214
        %v3216 = vrot.slane %v3215, 2
        %v3217 = vadd.f32 %v3215, %v3216
        %v3218 = vrot.slane %v3217, 1
        %v3219 = vadd.f32 %v3217, %v3218
        %v3220 = vsel %vm2400, %v3194, 0.0
        %v3221 = vrot.slane %v3220, 4
        %v3222 = vadd.f32 %v3220, %v3221
        %v3223 = vrot.slane %v3222, 2
        %v3224 = vadd.f32 %v3222, %v3223
        %v3225 = vrot.slane %v3224, 1
        %v3226 = vadd.f32 %v3224, %v3225
        %v3227 = vsel %vm2400, %v3195, 0.0
        %v3228 = vrot.slane %v3227, 4
        %v3229 = vadd.f32 %v3227, %v3228
        %v3230 = vrot.slane %v3229, 2
        %v3231 = vadd.f32 %v3229, %v3230
        %v3232 = vrot.slane %v3231, 1
        %v3233 = vadd.f32 %v3231, %v3232
        %v3234 = vsel %vm2400, %v3196, 0.0
        %v3235 = vrot.slane %v3234, 4
        %v3236 = vadd.f32 %v3234, %v3235
        %v3237 = vrot.slane %v3236, 2
        %v3238 = vadd.f32 %v3236, %v3237
        %v3239 = vrot.slane %v3238, 1
        %v3240 = vadd.f32 %v3238, %v3239
        %v3241 = vsel %vm2400, %v3197, 0.0
        %v3242 = vrot.slane %v3241, 4
        %v3243 = vadd.f32 %v3241, %v3242
        %v3244 = vrot.slane %v3243, 2
        %v3245 = vadd.f32 %v3243, %v3244
        %v3246 = vrot.slane %v3245, 1
        %v3247 = vadd.f32 %v3245, %v3246
        %v3248 = vsel %vm2400, %v3198, 0.0
        %v3249 = vrot.slane %v3248, 4
        %v3250 = vadd.f32 %v3248, %v3249
        %v3251 = vrot.slane %v3250, 2
        %v3252 = vadd.f32 %v3250, %v3251
        %v3253 = vrot.slane %v3252, 1
        %v3254 = vadd.f32 %v3252, %v3253
        %v3255 = vld [vmem:[%s6 + $0x31] sm:$0xff]
        %v3256 = vld [vmem:[%s6 + $0x39] sm:$0xff]
        %v3257 = vld [vmem:[%s6 + $0x41] sm:$0xff]
        %v3258 = vld [vmem:[%s6 + $0x49] sm:$0xff]
        %vm3267 = vcmask 1041409
        %v3268 = vsel %vm3267, %v3212, %v3205
        %vm3269 = vcmask 1042434
        %v3270 = vsel %vm3269, %v3219, %v3268
        %vm3271 = vcmask 1043459
        %v3272 = vsel %vm3271, %v3226, %v3270
        %vm3273 = vcmask 1044484
        %v3274 = vsel %vm3273, %v3233, %v3272
        %vm3275 = vcmask 1045509
        %v3276 = vsel %vm3275, %v3240, %v3274
        %vm3277 = vcmask 1046534
        %v3278 = vsel %vm3277, %v3247, %v3276
        %vm3279 = vcmask 1047559
        %v3280 = vsel %vm3279, %v3254, %v3278
        %v3281 = vsel %vm2400, %v3280, 0
        %3283 = vmatprep.subr.mxu0 0.0
        %3284 = vmatpush1.msra.mxu0 %v3257
        %3285 = vmatprep.subr.mxu0 0.0
        %3286 = vmatpush1.msra.mxu0 %v3258
        %3287 = vmatprep.subr.mxu0 0.0
        %3288 = vmatpush1.msra.mxu0 0.0
        %3289 = vmatprep.subr.mxu0 0.0
        %3290 = vmatpush1.msra.mxu0 0.0
        %3291 = vmatprep.subr.mxu0 0.0
        %3292 = vmatpush1.msra.mxu0 0.0
        %3293 = vmatprep.subr.mxu0 0.0
        %3294 = vmatpush1.msra.mxu0 0.0
        %3295 = vmatprep.subr.mxu0 0.0
        %3296 = vmatpush1.msra.mxu0 0.0
        %3297 = vmatprep.subr.mxu0 0.0
        %3298 = vmatpush1.msra.mxu0 0.0
        %3299 = vmatprep.subr.mxu0 0.0
        %3300 = vmatpush1.msra.mxu0 0.0
        %3301 = vmatprep.subr.mxu0 0.0
        %3302 = vmatpush1.msra.mxu0 0.0
        %3303 = vmatprep.subr.mxu0 0.0
        %3304 = vmatpush1.msra.mxu0 0.0
        %3305 = vmatprep.subr.mxu0 0.0
        %3306 = vmatpush1.msra.mxu0 0.0
        %3307 = vmatprep.subr.mxu0 0.0
        %3308 = vmatpush1.msra.mxu0 0.0
        %3309 = vmatprep.subr.mxu0 0.0
        %3310 = vmatpush1.msra.mxu0 0.0
        %3311 = vmatprep.subr.mxu0 0.0
        %3312 = vmatpush1.msra.mxu0 0.0
        %3313 = vmatprep.subr.mxu0 0.0
        %3314 = vmatpush1.msra.mxu0 0.0
        %3315 = vmatprep.subr.mxu0 0.0
        %3316 = vmatpush1.msra.mxu0 0.0
        %3317 = vmatprep.subr.mxu0 0.0
        %3318 = vmatpush1.msra.mxu0 0.0
        %3319 = vmatprep.subr.mxu0 0.0
        %3320 = vmatpush1.msra.mxu0 0.0
        %3321 = vmatprep.subr.mxu0 0.0
        %3322 = vmatpush1.msra.mxu0 0.0
        %3323 = vmatprep.subr.mxu0 0.0
        %3324 = vmatpush1.msra.mxu0 0.0
        %3325 = vmatprep.subr.mxu0 0.0
        %3326 = vmatpush1.msra.mxu0 0.0
        %3327 = vmatprep.subr.mxu0 0.0
        %3328 = vmatpush1.msra.mxu0 0.0
        %3329 = vmatprep.subr.mxu0 0.0
        %3330 = vmatpush1.msra.mxu0 0.0
        %3331 = vmatprep.subr.mxu0 0.0
        %3332 = vmatpush1.msra.mxu0 0.0
        %3333 = vmatprep.subr.mxu0 0.0
        %3334 = vmatpush1.msra.mxu0 0.0
        %3335 = vmatprep.subr.mxu0 0.0
        %3336 = vmatpush1.msra.mxu0 0.0
        %3337 = vmatprep.subr.mxu0 0.0
        %3338 = vmatpush1.msra.mxu0 0.0
        %3339 = vmatprep.subr.mxu0 0.0
        %3340 = vmatpush1.msra.mxu0 0.0
        %3341 = vmatprep.subr.mxu0 0.0
        %3342 = vmatpush1.msra.mxu0 0.0
        %3343 = vmatprep.subr.mxu0 0.0
        %3344 = vmatpush1.msra.mxu0 0.0
        %3345 = vmatprep.subr.mxu0 0.0
        %3346 = vmatpush1.msra.mxu0 0.0
        %3347 = vmatprep.mubr.f32.mxu0 0.0
        %3348 = vmatmul.mubr.f32.gmra.mrb[0].mxu0 %v3281
        %v3349 = vpop.f32.mrb[0].mxu0
        %v3350 = vadd.f32 0.0, %v3349
        %v3351 = vpop.f32.mrb[0].mxu0
        %3352 = vdwg.mxu0
        %3353 = vmatprep.subr.mxu0 0.0
        %3354 = vmatpush1.msra.mxu0 %v3255
        %3355 = vmatprep.subr.mxu0 0.0
        %3356 = vmatpush1.msra.mxu0 %v3256
        %3357 = vmatprep.subr.mxu0 0.0
        %3358 = vmatpush1.msra.mxu0 0.0
        %3359 = vmatprep.subr.mxu0 0.0
        %3360 = vmatpush1.msra.mxu0 0.0
        %3361 = vmatprep.subr.mxu0 0.0
        %3362 = vmatpush1.msra.mxu0 0.0
        %3363 = vmatprep.subr.mxu0 0.0
        %3364 = vmatpush1.msra.mxu0 0.0
        %3365 = vmatprep.subr.mxu0 0.0
        %3366 = vmatpush1.msra.mxu0 0.0
        %3367 = vmatprep.subr.mxu0 0.0
        %3368 = vmatpush1.msra.mxu0 0.0
        %3369 = vmatprep.subr.mxu0 0.0
        %3370 = vmatpush1.msra.mxu0 0.0
        %3371 = vmatprep.subr.mxu0 0.0
        %3372 = vmatpush1.msra.mxu0 0.0
        %3373 = vmatprep.subr.mxu0 0.0
        %3374 = vmatpush1.msra.mxu0 0.0
        %3375 = vmatprep.subr.mxu0 0.0
        %3376 = vmatpush1.msra.mxu0 0.0
        %3377 = vmatprep.subr.mxu0 0.0
        %3378 = vmatpush1.msra.mxu0 0.0
        %3379 = vmatprep.subr.mxu0 0.0
        %3380 = vmatpush1.msra.mxu0 0.0
        %3381 = vmatprep.subr.mxu0 0.0
        %3382 = vmatpush1.msra.mxu0 0.0
        %3383 = vmatprep.subr.mxu0 0.0
        %3384 = vmatpush1.msra.mxu0 0.0
        %3385 = vmatprep.subr.mxu0 0.0
        %3386 = vmatpush1.msra.mxu0 0.0
        %3387 = vmatprep.subr.mxu0 0.0
        %3388 = vmatpush1.msra.mxu0 0.0
        %3389 = vmatprep.subr.mxu0 0.0
        %3390 = vmatpush1.msra.mxu0 0.0
        %3391 = vmatprep.subr.mxu0 0.0
        %3392 = vmatpush1.msra.mxu0 0.0
        %3393 = vmatprep.subr.mxu0 0.0
        %3394 = vmatpush1.msra.mxu0 0.0
        %3395 = vmatprep.subr.mxu0 0.0
        %3396 = vmatpush1.msra.mxu0 0.0
        %3397 = vmatprep.subr.mxu0 0.0
        %3398 = vmatpush1.msra.mxu0 0.0
        %3399 = vmatprep.subr.mxu0 0.0
        %3400 = vmatpush1.msra.mxu0 0.0
        %3401 = vmatprep.subr.mxu0 0.0
        %3402 = vmatpush1.msra.mxu0 0.0
        %3403 = vmatprep.subr.mxu0 0.0
        %3404 = vmatpush1.msra.mxu0 0.0
        %3405 = vmatprep.subr.mxu0 0.0
        %3406 = vmatpush1.msra.mxu0 0.0
        %3407 = vmatprep.subr.mxu0 0.0
        %3408 = vmatpush1.msra.mxu0 0.0
        %3409 = vmatprep.subr.mxu0 0.0
        %3410 = vmatpush1.msra.mxu0 0.0
        %3411 = vmatprep.subr.mxu0 0.0
        %3412 = vmatpush1.msra.mxu0 0.0
        %3413 = vmatprep.subr.mxu0 0.0
        %3414 = vmatpush1.msra.mxu0 0.0
        %3415 = vmatprep.subr.mxu0 0.0
        %3416 = vmatpush1.msra.mxu0 0.0
        %3417 = vmatprep.mubr.f32.mxu0 0.0
        %3418 = vmatmul.mubr.f32.gmra.mrb[0].mxu0 %v2402
        %v3419 = vpop.f32.mrb[0].mxu0
        %v3420 = vadd.f32 %v3350, %v3419
        %v3421 = vpop.f32.mrb[0].mxu0
        %3422 = vdwg.mxu0
        %v3423 = vld [vmem:[%s7 + $0x1] sm:$0x1]
        %v3424 = vlaneseq
        %v3425 = vshrl.u32 %v3424, 7
        %v3426 = vsub.s32 0, %v3425
        %v3427 = vrot.slane %v3423, %v3426
        %v3428 = vadd.f32 %v3420, %v3427
        %v3429 = vmax.f32 %v3428, 0.0
        %3438 = vrot.lane.b32.xlu0 %v3046, 112
        %v3439 = vpop.permute.xlu0 %3438
        %3440 = vrot.lane.b32.xlu0 %v3047, 112
        %v3441 = vpop.permute.xlu0 %3440
        %3442 = vrot.lane.b32.xlu0 %v3048, 112
        %v3443 = vpop.permute.xlu0 %3442
        %3444 = vrot.lane.b32.xlu0 %v3049, 112
        %v3445 = vpop.permute.xlu0 %3444
        %3446 = vrot.lane.b32.xlu0 %v3050, 112
        %v3447 = vpop.permute.xlu0 %3446
        %3448 = vrot.lane.b32.xlu0 %v3051, 112
        %v3449 = vpop.permute.xlu0 %3448
        %3450 = vrot.lane.b32.xlu0 %v3052, 112
        %v3451 = vpop.permute.xlu0 %3450
        %3452 = vrot.lane.b32.xlu0 %v3053, 112
        %v3453 = vpop.permute.xlu0 %3452
        %3462 = vrot.lane.b32.xlu0 %v3059, 112
        %v3463 = vpop.permute.xlu0 %3462
        %v3466 = vsel %vm3061, %v3429, 0
        %3468 = vmatprep.subr.mxu0 0.0
        %3469 = vmatpush1.msra.mxu0 %v3439
        %3470 = vmatprep.subr.mxu0 0.0
        %3471 = vmatpush1.msra.mxu0 %v3441
        %3472 = vmatprep.subr.mxu0 0.0
        %3473 = vmatpush1.msra.mxu0 %v3443
        %3474 = vmatprep.subr.mxu0 0.0
        %3475 = vmatpush1.msra.mxu0 %v3445
        %3476 = vmatprep.subr.mxu0 0.0
        %3477 = vmatpush1.msra.mxu0 %v3447
        %3478 = vmatprep.subr.mxu0 0.0
        %3479 = vmatpush1.msra.mxu0 %v3449
        %3480 = vmatprep.subr.mxu0 0.0
        %3481 = vmatpush1.msra.mxu0 %v3451
        %3482 = vmatprep.subr.mxu0 0.0
        %3483 = vmatpush1.msra.mxu0 %v3453
        %3484 = vmatprep.subr.mxu0 0.0
        %3485 = vmatpush1.msra.mxu0 0.0
        %3486 = vmatprep.subr.mxu0 0.0
        %3487 = vmatpush1.msra.mxu0 0.0
        %3488 = vmatprep.subr.mxu0 0.0
        %3489 = vmatpush1.msra.mxu0 0.0
        %3490 = vmatprep.subr.mxu0 0.0
        %3491 = vmatpush1.msra.mxu0 0.0
        %3492 = vmatprep.subr.mxu0 0.0
        %3493 = vmatpush1.msra.mxu0 0.0
        %3494 = vmatprep.subr.mxu0 0.0
        %3495 = vmatpush1.msra.mxu0 0.0
        %3496 = vmatprep.subr.mxu0 0.0
        %3497 = vmatpush1.msra.mxu0 0.0
        %3498 = vmatprep.subr.mxu0 0.0
        %3499 = vmatpush1.msra.mxu0 0.0
        %3500 = vmatprep.subr.mxu0 0.0
        %3501 = vmatpush1.msra.mxu0 0.0
        %3502 = vmatprep.subr.mxu0 0.0
        %3503 = vmatpush1.msra.mxu0 0.0
        %3504 = vmatprep.subr.mxu0 0.0
        %3505 = vmatpush1.msra.mxu0 0.0
        %3506 = vmatprep.subr.mxu0 0.0
        %3507 = vmatpush1.msra.mxu0 0.0
        %3508 = vmatprep.subr.mxu0 0.0
        %3509 = vmatpush1.msra.mxu0 0.0
        %3510 = vmatprep.subr.mxu0 0.0
        %3511 = vmatpush1.msra.mxu0 0.0
        %3512 = vmatprep.subr.mxu0 0.0
        %3513 = vmatpush1.msra.mxu0 0.0
        %3514 = vmatprep.subr.mxu0 0.0
        %3515 = vmatpush1.msra.mxu0 0.0
        %3516 = vmatprep.subr.mxu0 0.0
        %3517 = vmatpush1.msra.mxu0 0.0
        %3518 = vmatprep.subr.mxu0 0.0
        %3519 = vmatpush1.msra.mxu0 0.0
        %3520 = vmatprep.subr.mxu0 0.0
        %3521 = vmatpush1.msra.mxu0 0.0
        %3522 = vmatprep.subr.mxu0 0.0
        %3523 = vmatpush1.msra.mxu0 0.0
        %3524 = vmatprep.subr.mxu0 0.0
        %3525 = vmatpush1.msra.mxu0 0.0
        %3526 = vmatprep.subr.mxu0 0.0
        %3527 = vmatpush1.msra.mxu0 0.0
        %3528 = vmatprep.subr.mxu0 0.0
        %3529 = vmatpush1.msra.mxu0 0.0
        %3530 = vmatprep.subr.mxu0 0.0
        %3531 = vmatpush1.msra.mxu0 0.0
        %3532 = vmatprep.mubr.f32.mxu0 0.0
        %3533 = vmatmul.mubr.f32.gmra.mrb[0].mxu0 %v3466
        %v3534 = vpop.f32.mrb[0].mxu0
        %v3535 = vadd.f32 %v3463, %v3534
        %v3536 = vpop.f32.mrb[0].mxu0
        %3537 = vdwg.mxu0
        %v3538 = vld [vmem:[%s6 + $0x51] sm:$0xff]
        %v3539 = vld [vmem:[%s6 + $0x59] sm:$0xff]
        %v3540 = vld [vmem:[%s7 + $0x2] sm:$0x1]
        %v3541 = vlaneseq
        %v3542 = vshrl.u32 %v3541, 7
        %v3543 = vsub.s32 0, %v3542
        %v3544 = vrot.slane %v3540, %v3543
        %v3546 = vsel %vm2400, %v3191, 0
        %v3549 = vsel %vm2400, %v3192, 0
        %v3552 = vsel %vm2400, %v3193, 0
        %v3555 = vsel %vm2400, %v3194, 0
        %v3558 = vsel %vm2400, %v3195, 0
        %v3561 = vsel %vm2400, %v3196, 0
        %v3564 = vsel %vm2400, %v3197, 0
        %v3567 = vsel %vm2400, %v3198, 0
        %3569 = vmatprep.subr.mxu0 0.0
        %3570 = vmatpush1.msra.mxu0 %v3538
        %3571 = vmatprep.subr.mxu0 0.0
        %3572 = vmatpush1.msra.mxu0 %v3539
        %3573 = vmatprep.subr.mxu0 0.0
        %3574 = vmatpush1.msra.mxu0 0.0
        %3575 = vmatprep.subr.mxu0 0.0
        %3576 = vmatpush1.msra.mxu0 0.0
        %3577 = vmatprep.subr.mxu0 0.0
        %3578 = vmatpush1.msra.mxu0 0.0
        %3579 = vmatprep.subr.mxu0 0.0
        %3580 = vmatpush1.msra.mxu0 0.0
        %3581 = vmatprep.subr.mxu0 0.0
        %3582 = vmatpush1.msra.mxu0 0.0
        %3583 = vmatprep.subr.mxu0 0.0
        %3584 = vmatpush1.msra.mxu0 0.0
        %3585 = vmatprep.subr.mxu0 0.0
        %3586 = vmatpush1.msra.mxu0 0.0
        %3587 = vmatprep.subr.mxu0 0.0
        %3588 = vmatpush1.msra.mxu0 0.0
        %3589 = vmatprep.subr.mxu0 0.0
        %3590 = vmatpush1.msra.mxu0 0.0
        %3591 = vmatprep.subr.mxu0 0.0
        %3592 = vmatpush1.msra.mxu0 0.0
        %3593 = vmatprep.subr.mxu0 0.0
        %3594 = vmatpush1.msra.mxu0 0.0
        %3595 = vmatprep.subr.mxu0 0.0
        %3596 = vmatpush1.msra.mxu0 0.0
        %3597 = vmatprep.subr.mxu0 0.0
        %3598 = vmatpush1.msra.mxu0 0.0
        %3599 = vmatprep.subr.mxu0 0.0
        %3600 = vmatpush1.msra.mxu0 0.0
        %3601 = vmatprep.subr.mxu0 0.0
        %3602 = vmatpush1.msra.mxu0 0.0
        %3603 = vmatprep.subr.mxu0 0.0
        %3604 = vmatpush1.msra.mxu0 0.0
        %3605 = vmatprep.subr.mxu0 0.0
        %3606 = vmatpush1.msra.mxu0 0.0
        %3607 = vmatprep.subr.mxu0 0.0
        %3608 = vmatpush1.msra.mxu0 0.0
        %3609 = vmatprep.subr.mxu0 0.0
        %3610 = vmatpush1.msra.mxu0 0.0
        %3611 = vmatprep.subr.mxu0 0.0
        %3612 = vmatpush1.msra.mxu0 0.0
        %3613 = vmatprep.subr.mxu0 0.0
        %3614 = vmatpush1.msra.mxu0 0.0
        %3615 = vmatprep.subr.mxu0 0.0
        %3616 = vmatpush1.msra.mxu0 0.0
        %3617 = vmatprep.subr.mxu0 0.0
        %3618 = vmatpush1.msra.mxu0 0.0
        %3619 = vmatprep.subr.mxu0 0.0
        %3620 = vmatpush1.msra.mxu0 0.0
        %3621 = vmatprep.subr.mxu0 0.0
        %3622 = vmatpush1.msra.mxu0 0.0
        %3623 = vmatprep.subr.mxu0 0.0
        %3624 = vmatpush1.msra.mxu0 0.0
        %3625 = vmatprep.subr.mxu0 0.0
        %3626 = vmatpush1.msra.mxu0 0.0
        %3627 = vmatprep.subr.mxu0 0.0
        %3628 = vmatpush1.msra.mxu0 0.0
        %3629 = vmatprep.subr.mxu0 0.0
        %3630 = vmatpush1.msra.mxu0 0.0
        %3631 = vmatprep.subr.mxu0 0.0
        %3632 = vmatpush1.msra.mxu0 0.0
        %3633 = vmatprep.mubr.f32.mxu0 0.0
        %3634 = vmatmul.mubr.f32.gmra.mrb[0].mxu0 %v3546
        %v3635 = vpop.f32.mrb[0].mxu0
        %v3636 = vadd.f32 %v3544, %v3635
        %v3637 = vpop.f32.mrb[0].mxu0
        %3638 = vmatprep.mubr.f32.mxu0 0.0
        %3639 = vmatmul.mubr.f32.gmra.mrb[0].mxu0 %v3549
        %v3640 = vpop.f32.mrb[0].mxu0
        %v3641 = vadd.f32 %v3544, %v3640
        %v3642 = vpop.f32.mrb[0].mxu0
        %3643 = vmatprep.mubr.f32.mxu0 0.0
        %3644 = vmatmul.mubr.f32.gmra.mrb[0].mxu0 %v3552
        %v3645 = vpop.f32.mrb[0].mxu0
        %v3646 = vadd.f32 %v3544, %v3645
        %v3647 = vpop.f32.mrb[0].mxu0
        %3648 = vmatprep.mubr.f32.mxu0 0.0
        %3649 = vmatmul.mubr.f32.gmra.mrb[0].mxu0 %v3555
        %v3650 = vpop.f32.mrb[0].mxu0
        %v3651 = vadd.f32 %v3544, %v3650
        %v3652 = vpop.f32.mrb[0].mxu0
        %3653 = vmatprep.mubr.f32.mxu0 0.0
        %3654 = vmatmul.mubr.f32.gmra.mrb[0].mxu0 %v3558
        %v3655 = vpop.f32.mrb[0].mxu0
        %v3656 = vadd.f32 %v3544, %v3655
        %v3657 = vpop.f32.mrb[0].mxu0
        %3658 = vmatprep.mubr.f32.mxu0 0.0
        %3659 = vmatmul.mubr.f32.gmra.mrb[0].mxu0 %v3561
        %v3660 = vpop.f32.mrb[0].mxu0
        %v3661 = vadd.f32 %v3544, %v3660
        %v3662 = vpop.f32.mrb[0].mxu0
        %3663 = vmatprep.mubr.f32.mxu0 0.0
        %3664 = vmatmul.mubr.f32.gmra.mrb[0].mxu0 %v3564
        %v3665 = vpop.f32.mrb[0].mxu0
        %v3666 = vadd.f32 %v3544, %v3665
        %v3667 = vpop.f32.mrb[0].mxu0
        %3668 = vmatprep.mubr.f32.mxu0 0.0
        %3669 = vmatmul.mubr.f32.gmra.mrb[0].mxu0 %v3567
        %v3670 = vpop.f32.mrb[0].mxu0
        %v3671 = vadd.f32 %v3544, %v3670
        %v3672 = vpop.f32.mrb[0].mxu0
        %3673 = vdwg.mxu0
        %v3674 = vmax.f32 %v3636, 0.0
        %v3675 = vmax.f32 %v3641, 0.0
        %v3676 = vmax.f32 %v3646, 0.0
        %v3677 = vmax.f32 %v3651, 0.0
        %v3678 = vmax.f32 %v3656, 0.0
        %v3679 = vmax.f32 %v3661, 0.0
        %v3680 = vmax.f32 %v3666, 0.0
        %v3681 = vmax.f32 %v3671, 0.0
        %3682 = vrot.lane.b32.xlu0 %v3046, 96
        %v3683 = vpop.permute.xlu0 %3682
        %3684 = vrot.lane.b32.xlu0 %v3047, 96
        %v3685 = vpop.permute.xlu0 %3684
        %3686 = vrot.lane.b32.xlu0 %v3048, 96
        %v3687 = vpop.permute.xlu0 %3686
        %3688 = vrot.lane.b32.xlu0 %v3049, 96
        %v3689 = vpop.permute.xlu0 %3688
        %3690 = vrot.lane.b32.xlu0 %v3050, 96
        %v3691 = vpop.permute.xlu0 %3690
        %3692 = vrot.lane.b32.xlu0 %v3051, 96
        %v3693 = vpop.permute.xlu0 %3692
        %3694 = vrot.lane.b32.xlu0 %v3052, 96
        %v3695 = vpop.permute.xlu0 %3694
        %3696 = vrot.lane.b32.xlu0 %v3053, 96
        %v3697 = vpop.permute.xlu0 %3696
        %3706 = vrot.lane.b32.xlu0 %v3059, 96
        %v3707 = vpop.permute.xlu0 %3706
        %v3710 = vsel %vm3061, %v3674, 0
        %v3713 = vsel %vm3061, %v3675, 0
        %v3716 = vsel %vm3061, %v3676, 0
        %v3719 = vsel %vm3061, %v3677, 0
        %v3722 = vsel %vm3061, %v3678, 0
        %v3725 = vsel %vm3061, %v3679, 0
        %v3728 = vsel %vm3061, %v3680, 0
        %v3731 = vsel %vm3061, %v3681, 0
        %3733 = vmatprep.subr.mxu0 0.0
        %3734 = vmatpush1.msra.mxu0 %v3683
        %3735 = vmatprep.subr.mxu0 0.0
        %3736 = vmatpush1.msra.mxu0 %v3685
        %3737 = vmatprep.subr.mxu0 0.0
        %3738 = vmatpush1.msra.mxu0 %v3687
        %3739 = vmatprep.subr.mxu0 0.0
        %3740 = vmatpush1.msra.mxu0 %v3689
        %3741 = vmatprep.subr.mxu0 0.0
        %3742 = vmatpush1.msra.mxu0 %v3691
        %3743 = vmatprep.subr.mxu0 0.0
        %3744 = vmatpush1.msra.mxu0 %v3693
        %3745 = vmatprep.subr.mxu0 0.0
        %3746 = vmatpush1.msra.mxu0 %v3695
        %3747 = vmatprep.subr.mxu0 0.0
        %3748 = vmatpush1.msra.mxu0 %v3697
        %3749 = vmatprep.subr.mxu0 0.0
        %3750 = vmatpush1.msra.mxu0 0.0
        %3751 = vmatprep.subr.mxu0 0.0
        %3752 = vmatpush1.msra.mxu0 0.0
        %3753 = vmatprep.subr.mxu0 0.0
        %3754 = vmatpush1.msra.mxu0 0.0
        %3755 = vmatprep.subr.mxu0 0.0
        %3756 = vmatpush1.msra.mxu0 0.0
        %3757 = vmatprep.subr.mxu0 0.0
        %3758 = vmatpush1.msra.mxu0 0.0
        %3759 = vmatprep.subr.mxu0 0.0
        %3760 = vmatpush1.msra.mxu0 0.0
        %3761 = vmatprep.subr.mxu0 0.0
        %3762 = vmatpush1.msra.mxu0 0.0
        %3763 = vmatprep.subr.mxu0 0.0
        %3764 = vmatpush1.msra.mxu0 0.0
        %3765 = vmatprep.subr.mxu0 0.0
        %3766 = vmatpush1.msra.mxu0 0.0
        %3767 = vmatprep.subr.mxu0 0.0
        %3768 = vmatpush1.msra.mxu0 0.0
        %3769 = vmatprep.subr.mxu0 0.0
        %3770 = vmatpush1.msra.mxu0 0.0
        %3771 = vmatprep.subr.mxu0 0.0
        %3772 = vmatpush1.msra.mxu0 0.0
        %3773 = vmatprep.subr.mxu0 0.0
        %3774 = vmatpush1.msra.mxu0 0.0
        %3775 = vmatprep.subr.mxu0 0.0
        %3776 = vmatpush1.msra.mxu0 0.0
        %3777 = vmatprep.subr.mxu0 0.0
        %3778 = vmatpush1.msra.mxu0 0.0
        %3779 = vmatprep.subr.mxu0 0.0
        %3780 = vmatpush1.msra.mxu0 0.0
        %3781 = vmatprep.subr.mxu0 0.0
        %3782 = vmatpush1.msra.mxu0 0.0
        %3783 = vmatprep.subr.mxu0 0.0
        %3784 = vmatpush1.msra.mxu0 0.0
        %3785 = vmatprep.subr.mxu0 0.0
        %3786 = vmatpush1.msra.mxu0 0.0
        %3787 = vmatprep.subr.mxu0 0.0
        %3788 = vmatpush1.msra.mxu0 0.0
        %3789 = vmatprep.subr.mxu0 0.0
        %3790 = vmatpush1.msra.mxu0 0.0
        %3791 = vmatprep.subr.mxu0 0.0
        %3792 = vmatpush1.msra.mxu0 0.0
        %3793 = vmatprep.subr.mxu0 0.0
        %3794 = vmatpush1.msra.mxu0 0.0
        %3795 = vmatprep.subr.mxu0 0.0
        %3796 = vmatpush1.msra.mxu0 0.0
        %3797 = vmatprep.mubr.f32.mxu0 0.0
        %3798 = vmatmul.mubr.f32.gmra.mrb[0].mxu0 %v3710
        %v3799 = vpop.f32.mrb[0].mxu0
        %v3800 = vadd.f32 %v3707, %v3799
        %v3801 = vpop.f32.mrb[0].mxu0
        %3802 = vmatprep.mubr.f32.mxu0 0.0
        %3803 = vmatmul.mubr.f32.gmra.mrb[0].mxu0 %v3713
        %v3804 = vpop.f32.mrb[0].mxu0
        %v3805 = vadd.f32 %v3707, %v3804
        %v3806 = vpop.f32.mrb[0].mxu0
        %3807 = vmatprep.mubr.f32.mxu0 0.0
        %3808 = vmatmul.mubr.f32.gmra.mrb[0].mxu0 %v3716
        %v3809 = vpop.f32.mrb[0].mxu0
        %v3810 = vadd.f32 %v3707, %v3809
        %v3811 = vpop.f32.mrb[0].mxu0
        %3812 = vmatprep.mubr.f32.mxu0 0.0
        %3813 = vmatmul.mubr.f32.gmra.mrb[0].mxu0 %v3719
        %v3814 = vpop.f32.mrb[0].mxu0
        %v3815 = vadd.f32 %v3707, %v3814
        %v3816 = vpop.f32.mrb[0].mxu0
        %3817 = vmatprep.mubr.f32.mxu0 0.0
        %3818 = vmatmul.mubr.f32.gmra.mrb[0].mxu0 %v3722
        %v3819 = vpop.f32.mrb[0].mxu0
        %v3820 = vadd.f32 %v3707, %v3819
        %v3821 = vpop.f32.mrb[0].mxu0
        %3822 = vmatprep.mubr.f32.mxu0 0.0
        %3823 = vmatmul.mubr.f32.gmra.mrb[0].mxu0 %v3725
        %v3824 = vpop.f32.mrb[0].mxu0
        %v3825 = vadd.f32 %v3707, %v3824
        %v3826 = vpop.f32.mrb[0].mxu0
        %3827 = vmatprep.mubr.f32.mxu0 0.0
        %3828 = vmatmul.mubr.f32.gmra.mrb[0].mxu0 %v3728
        %v3829 = vpop.f32.mrb[0].mxu0
        %v3830 = vadd.f32 %v3707, %v3829
        %v3831 = vpop.f32.mrb[0].mxu0
        %3832 = vmatprep.mubr.f32.mxu0 0.0
        %3833 = vmatmul.mubr.f32.gmra.mrb[0].mxu0 %v3731
        %v3834 = vpop.f32.mrb[0].mxu0
        %v3835 = vadd.f32 %v3707, %v3834
        %v3836 = vpop.f32.mrb[0].mxu0
        %3837 = vdwg.mxu0
        %v3838 = vmul.f32 %v3800, %v694
        %v3839 = vmul.f32 %v3805, %v701
        %v3840 = vmul.f32 %v3810, %v708
        %v3841 = vmul.f32 %v3815, %v715
        %v3842 = vmul.f32 %v3820, %v722
        %v3843 = vmul.f32 %v3825, %v729
        %v3844 = vmul.f32 %v3830, %v736
        %v3845 = vmul.f32 %v3835, %v743
        %v3846 = vld [vmem:[%s6 + $0x61] sm:$0xff]
        %v3847 = vld [vmem:[%s6 + $0x69] sm:$0xff]
        %v3848 = vld [vmem:[%s7 + $0x3] sm:$0x1]
        %v3849 = vlaneseq
        %v3850 = vshrl.u32 %v3849, 7
        %v3851 = vsub.s32 0, %v3850
        %v3852 = vrot.slane %v3848, %v3851
        %3853 = vmatprep.subr.mxu0 0.0
        %3854 = vmatpush1.msra.mxu0 %v3846
        %3855 = vmatprep.subr.mxu0 0.0
        %3856 = vmatpush1.msra.mxu0 %v3847
        %3857 = vmatprep.subr.mxu0 0.0
        %3858 = vmatpush1.msra.mxu0 0.0
        %3859 = vmatprep.subr.mxu0 0.0
        %3860 = vmatpush1.msra.mxu0 0.0
        %3861 = vmatprep.subr.mxu0 0.0
        %3862 = vmatpush1.msra.mxu0 0.0
        %3863 = vmatprep.subr.mxu0 0.0
        %3864 = vmatpush1.msra.mxu0 0.0
        %3865 = vmatprep.subr.mxu0 0.0
        %3866 = vmatpush1.msra.mxu0 0.0
        %3867 = vmatprep.subr.mxu0 0.0
        %3868 = vmatpush1.msra.mxu0 0.0
        %3869 = vmatprep.subr.mxu0 0.0
        %3870 = vmatpush1.msra.mxu0 0.0
        %3871 = vmatprep.subr.mxu0 0.0
        %3872 = vmatpush1.msra.mxu0 0.0
        %3873 = vmatprep.subr.mxu0 0.0
        %3874 = vmatpush1.msra.mxu0 0.0
        %3875 = vmatprep.subr.mxu0 0.0
        %3876 = vmatpush1.msra.mxu0 0.0
        %3877 = vmatprep.subr.mxu0 0.0
        %3878 = vmatpush1.msra.mxu0 0.0
        %3879 = vmatprep.subr.mxu0 0.0
        %3880 = vmatpush1.msra.mxu0 0.0
        %3881 = vmatprep.subr.mxu0 0.0
        %3882 = vmatpush1.msra.mxu0 0.0
        %3883 = vmatprep.subr.mxu0 0.0
        %3884 = vmatpush1.msra.mxu0 0.0
        %3885 = vmatprep.subr.mxu0 0.0
        %3886 = vmatpush1.msra.mxu0 0.0
        %3887 = vmatprep.subr.mxu0 0.0
        %3888 = vmatpush1.msra.mxu0 0.0
        %3889 = vmatprep.subr.mxu0 0.0
        %3890 = vmatpush1.msra.mxu0 0.0
        %3891 = vmatprep.subr.mxu0 0.0
        %3892 = vmatpush1.msra.mxu0 0.0
        %3893 = vmatprep.subr.mxu0 0.0
        %3894 = vmatpush1.msra.mxu0 0.0
        %3895 = vmatprep.subr.mxu0 0.0
        %3896 = vmatpush1.msra.mxu0 0.0
        %3897 = vmatprep.subr.mxu0 0.0
        %3898 = vmatpush1.msra.mxu0 0.0
        %3899 = vmatprep.subr.mxu0 0.0
        %3900 = vmatpush1.msra.mxu0 0.0
        %3901 = vmatprep.subr.mxu0 0.0
        %3902 = vmatpush1.msra.mxu0 0.0
        %3903 = vmatprep.subr.mxu0 0.0
        %3904 = vmatpush1.msra.mxu0 0.0
        %3905 = vmatprep.subr.mxu0 0.0
        %3906 = vmatpush1.msra.mxu0 0.0
        %3907 = vmatprep.subr.mxu0 0.0
        %3908 = vmatpush1.msra.mxu0 0.0
        %3909 = vmatprep.subr.mxu0 0.0
        %3910 = vmatpush1.msra.mxu0 0.0
        %3911 = vmatprep.subr.mxu0 0.0
        %3912 = vmatpush1.msra.mxu0 0.0
        %3913 = vmatprep.subr.mxu0 0.0
        %3914 = vmatpush1.msra.mxu0 0.0
        %3915 = vmatprep.subr.mxu0 0.0
        %3916 = vmatpush1.msra.mxu0 0.0
        %3917 = vmatprep.mubr.f32.mxu0 0.0
        %3918 = vmatmul.mubr.f32.gmra.mrb[0].mxu0 %v3281
        %v3919 = vpop.f32.mrb[0].mxu0
        %v3920 = vadd.f32 %v3852, %v3919
        %v3921 = vpop.f32.mrb[0].mxu0
        %3922 = vdwg.mxu0
        %v3923 = vmax.f32 %v3920, 0.0
        %3924 = vrot.lane.b32.xlu0 %v3046, 93
        %v3925 = vpop.permute.xlu0 %3924
        %3926 = vrot.lane.b32.xlu0 %v3047, 93
        %v3927 = vpop.permute.xlu0 %3926
        %3928 = vrot.lane.b32.xlu0 %v3048, 93
        %v3929 = vpop.permute.xlu0 %3928
        %3930 = vrot.lane.b32.xlu0 %v3049, 93
        %v3931 = vpop.permute.xlu0 %3930
        %3932 = vrot.lane.b32.xlu0 %v3050, 93
        %v3933 = vpop.permute.xlu0 %3932
        %3934 = vrot.lane.b32.xlu0 %v3051, 93
        %v3935 = vpop.permute.xlu0 %3934
        %3936 = vrot.lane.b32.xlu0 %v3052, 93
        %v3937 = vpop.permute.xlu0 %3936
        %3938 = vrot.lane.b32.xlu0 %v3053, 93
        %v3939 = vpop.permute.xlu0 %3938
        %3948 = vrot.lane.b32.xlu0 %v3059, 93
        %v3949 = vpop.permute.xlu0 %3948
        %v3952 = vsel %vm3061, %v3923, 0
        %3954 = vmatprep.subr.mxu0 0.0
        %3955 = vmatpush1.msra.mxu0 %v3925
        %3956 = vmatprep.subr.mxu0 0.0
        %3957 = vmatpush1.msra.mxu0 %v3927
        %3958 = vmatprep.subr.mxu0 0.0
        %3959 = vmatpush1.msra.mxu0 %v3929
        %3960 = vmatprep.subr.mxu0 0.0
        %3961 = vmatpush1.msra.mxu0 %v3931
        %3962 = vmatprep.subr.mxu0 0.0
        %3963 = vmatpush1.msra.mxu0 %v3933
        %3964 = vmatprep.subr.mxu0 0.0
        %3965 = vmatpush1.msra.mxu0 %v3935
        %3966 = vmatprep.subr.mxu0 0.0
        %3967 = vmatpush1.msra.mxu0 %v3937
        %3968 = vmatprep.subr.mxu0 0.0
        %3969 = vmatpush1.msra.mxu0 %v3939
        %3970 = vmatprep.subr.mxu0 0.0
        %3971 = vmatpush1.msra.mxu0 0.0
        %3972 = vmatprep.subr.mxu0 0.0
        %3973 = vmatpush1.msra.mxu0 0.0
        %3974 = vmatprep.subr.mxu0 0.0
        %3975 = vmatpush1.msra.mxu0 0.0
        %3976 = vmatprep.subr.mxu0 0.0
        %3977 = vmatpush1.msra.mxu0 0.0
        %3978 = vmatprep.subr.mxu0 0.0
        %3979 = vmatpush1.msra.mxu0 0.0
        %3980 = vmatprep.subr.mxu0 0.0
        %3981 = vmatpush1.msra.mxu0 0.0
        %3982 = vmatprep.subr.mxu0 0.0
        %3983 = vmatpush1.msra.mxu0 0.0
        %3984 = vmatprep.subr.mxu0 0.0
        %3985 = vmatpush1.msra.mxu0 0.0
        %3986 = vmatprep.subr.mxu0 0.0
        %3987 = vmatpush1.msra.mxu0 0.0
        %3988 = vmatprep.subr.mxu0 0.0
        %3989 = vmatpush1.msra.mxu0 0.0
        %3990 = vmatprep.subr.mxu0 0.0
        %3991 = vmatpush1.msra.mxu0 0.0
        %3992 = vmatprep.subr.mxu0 0.0
        %3993 = vmatpush1.msra.mxu0 0.0
        %3994 = vmatprep.subr.mxu0 0.0
        %3995 = vmatpush1.msra.mxu0 0.0
        %3996 = vmatprep.subr.mxu0 0.0
        %3997 = vmatpush1.msra.mxu0 0.0
        %3998 = vmatprep.subr.mxu0 0.0
        %3999 = vmatpush1.msra.mxu0 0.0
        %4000 = vmatprep.subr.mxu0 0.0
        %4001 = vmatpush1.msra.mxu0 0.0
        %4002 = vmatprep.subr.mxu0 0.0
        %4003 = vmatpush1.msra.mxu0 0.0
        %4004 = vmatprep.subr.mxu0 0.0
        %4005 = vmatpush1.msra.mxu0 0.0
        %4006 = vmatprep.subr.mxu0 0.0
        %4007 = vmatpush1.msra.mxu0 0.0
        %4008 = vmatprep.subr.mxu0 0.0
        %4009 = vmatpush1.msra.mxu0 0.0
        %4010 = vmatprep.subr.mxu0 0.0
        %4011 = vmatpush1.msra.mxu0 0.0
        %4012 = vmatprep.subr.mxu0 0.0
        %4013 = vmatpush1.msra.mxu0 0.0
        %4014 = vmatprep.subr.mxu0 0.0
        %4015 = vmatpush1.msra.mxu0 0.0
        %4016 = vmatprep.subr.mxu0 0.0
        %4017 = vmatpush1.msra.mxu0 0.0
        %4018 = vmatprep.mubr.f32.mxu0 0.0
        %4019 = vmatmul.mubr.f32.gmra.mrb[0].mxu0 %v3952
        %v4020 = vpop.f32.mrb[0].mxu0
        %v4021 = vadd.f32 %v3949, %v4020
        %v4022 = vpop.f32.mrb[0].mxu0
        %4023 = vdwg.mxu0
        %vm4024 = vcmp.eq.s32.totalorder %v671, 0
        %v4025 = vsel %vm4024, 1, 0
        %v4026 = vcvt.s32.f32 %v4025
        %vm4027 = vcmp.gt.f32.partialorder %v665, 0.5
        %v4028 = vsel %vm4027, 1, 0
        %4029 = vset.pattern.permute.xlu0 0
        %4030 = vperm.xlu0 %4029, %v4028
        %v4031 = vpop.permute.xlu0 %4030
        %vm4032 = vcmp.eq.s32.totalorder %v4031, 1
        %v4033 = vsel %vm4032, %v4021, %v4026
        %v4034 = vmul.f32 %v4033, %v4033
        %v4035 = vsel %vm973, %v4034, 0.0
        %4036 = vadd.xlane.f32.xlu0 %v4035
        %v4037 = vpop.xlane.xlu0 %4036
        %v4038 = vmax.f32 %v4037, 1e-24
        %v4039 = vrsqrt.pop %v4038
        %v4040 = vmul.f32 %v4033, %v4039
        %v4041 = vmul.f32 %v663, %v4040
        %4043 = vrot.lane.b32.xlu0 %v4041, 127
        %v4044 = vpop.permute.xlu0 %4043
        %v4046 = vsub.f32 %v4041, %v4044
        %4047 = vrot.lane.b32.xlu0 %v4041, 126
        %v4048 = vpop.permute.xlu0 %4047
        %v4050 = vsub.f32 %v4046, %v4048
        %4051 = vrot.lane.b32.xlu0 %v4041, 125
        %v4052 = vpop.permute.xlu0 %4051
        %v4054 = vsub.f32 %v4050, %v4052
        %4056 = vrot.lane.b32.xlu0 %v4040, 127
        %v4057 = vpop.permute.xlu0 %4056
        %v4059 = vmul.f32 %v663, %v4057
        %4060 = vrot.lane.b32.xlu0 %v4040, 1
        %v4061 = vpop.permute.xlu0 %4060
        %v4063 = vmul.f32 %v663, %v4061
        %4065 = vrot.lane.b32.xlu0 %v4063, 127
        %v4066 = vpop.permute.xlu0 %4065
        %v4068 = vadd.f32 %v4059, %v4066
        %4070 = vrot.lane.b32.xlu0 %v4059, 126
        %v4071 = vpop.permute.xlu0 %4070
        %v4073 = vadd.f32 %v4068, %v4071
        %4074 = vrot.lane.b32.xlu0 %v4063, 125
        %v4075 = vpop.permute.xlu0 %4074
        %v4077 = vsub.f32 %v4073, %v4075
        %4078 = vrot.lane.b32.xlu0 %v4040, 126
        %v4079 = vpop.permute.xlu0 %4078
        %v4081 = vmul.f32 %v663, %v4079
        %4083 = vrot.lane.b32.xlu0 %v4081, 127
        %v4084 = vpop.permute.xlu0 %4083
        %v4086 = vsub.f32 %v4081, %v4084
        %4087 = vrot.lane.b32.xlu0 %v4040, 2
        %v4088 = vpop.permute.xlu0 %4087
        %v4090 = vmul.f32 %v663, %v4088
        %4092 = vrot.lane.b32.xlu0 %v4090, 126
        %v4093 = vpop.permute.xlu0 %4092
        %v4095 = vadd.f32 %v4086, %v4093
        %4096 = vrot.lane.b32.xlu0 %v4090, 125
        %v4097 = vpop.permute.xlu0 %4096
        %v4099 = vadd.f32 %v4095, %v4097
        %4100 = vrot.lane.b32.xlu0 %v4040, 125
        %v4101 = vpop.permute.xlu0 %4100
        %v4103 = vmul.f32 %v663, %v4101
        %4104 = vrot.lane.b32.xlu0 %v4059, 127
        %v4105 = vpop.permute.xlu0 %4104
        %v4107 = vadd.f32 %v4103, %v4105
        %4108 = vrot.lane.b32.xlu0 %v4063, 126
        %v4109 = vpop.permute.xlu0 %4108
        %v4111 = vsub.f32 %v4107, %v4109
        %4112 = vrot.lane.b32.xlu0 %v4040, 3
        %v4113 = vpop.permute.xlu0 %4112
        %v4115 = vmul.f32 %v663, %v4113
        %4117 = vrot.lane.b32.xlu0 %v4115, 125
        %v4118 = vpop.permute.xlu0 %4117
        %v4120 = vadd.f32 %v4111, %v4118
        %4122 = vrot.lane.b32.xlu0 %v4077, 1
        %v4123 = vpop.permute.xlu0 %4122
        %4126 = vrot.lane.b32.xlu0 %v4099, 2
        %v4127 = vpop.permute.xlu0 %4126
        %4130 = vrot.lane.b32.xlu0 %v4120, 3
        %v4131 = vpop.permute.xlu0 %4130
        %v4133 = vsel %vm1012, %v4054, %v4123
        %v4134 = vsel %vm1304, %v4133, %v4127
        %v4135 = vsel %vm850, %v4134, %v4131
        %v4136 = vsel %vm4032, %v4135, %v4026
        %v4137 = vmul.f32 %v4136, %v4136
        %v4138 = vsel %vm973, %v4137, 0.0
        %4139 = vadd.xlane.f32.xlu0 %v4138
        %v4140 = vpop.xlane.xlu0 %4139
        %v4141 = vmax.f32 %v4140, 1e-24
        %v4142 = vrsqrt.pop %v4141
        %v4143 = vmul.f32 %v4136, %v4142
        %4144 = vst.msk [vmem:[%s499] sm:$0xff] %vm2400, %v3535
        %4145 = vst.msk [vmem:[%s555] sm:$0xff] %vm973, %v4143
        %4146 = vst.msk [vmem:[%s564] sm:$0xff] %vm850, %v3838
        %4147 = vst.msk [vmem:[%s564 + $0x8] sm:$0xff] %vm850, %v3839
        %4148 = vst.msk [vmem:[%s564 + $0x10] sm:$0xff] %vm850, %v3840
        %4149 = vst.msk [vmem:[%s564 + $0x18] sm:$0xff] %vm850, %v3841
        %4150 = vst.msk [vmem:[%s564 + $0x20] sm:$0xff] %vm850, %v3842
        %4151 = vst.msk [vmem:[%s564 + $0x28] sm:$0xff] %vm850, %v3843
        %4152 = vst.msk [vmem:[%s564 + $0x30] sm:$0xff] %vm850, %v3844
        %4153 = vst.msk [vmem:[%s564 + $0x38] sm:$0xff] %vm850, %v3845
        %s4154 = sand.u32 %s291, 1
        %s4155 = scalar_lea.sflag [#allocation4], %s4154
        %s4156 = sand.u32 %s291, 1
        %s4157 = smul.addr %s4156, 8
        %s4158 = scalar_lea.vmem [#allocation3], %s4157
        %p4159 = scmp.lt.s32.totalorder %s31, 1
        %s4160 = scalar_select %p4159, %s31, 1
        %p4161 = scmp.lt.s32.totalorder %s32, 0
        %s4162 = scalar_select %p4161, %s32, 0
        %s4163 = sadd.s32 %s4162, %s4160
        %s4164 = smul.addr %s4163, 8
        %s4165 = scalar_lea.vmem %s11, %s4164
        %s4166 = smul.u32 8, %s32
        %p4167 = scmp.lt.s32.totalorder %s31, 1
        %s4168 = scalar_select %p4167, %s31, 1
        %p4169 = scmp.lt.s32.totalorder %s4166, 7
        %s4170 = scalar_select %p4169, %s4166, 7
        %s4171 = smul.addr %s4168, 8
        %s4172 = sadd.s32 %s4170, %s4171
        %s4173 = smul.addr %s4172, 8
        %s4174 = scalar_lea.vmem %s12, %s4173
        // Predicated region
        $region65: #{egnn_pallas.2} parent=59 // pred_check
          %p4175 = pneg %p301
        $region66: #{egnn_pallas.2} parent=59 // pred_check_branch
          %4177 = sbr.rel (%p4175) target = $region68
        $region67: #{egnn_pallas.2} parent=59 // pred_region
          %s4179 = ssub.s32 128, 128
          %4180 = vsyncadd %s4155, %s4179
          %s4181 = sadd.s32 %s32, %s31
          %s4182 = smul.addr %s4181, 128
          %s4183 = scalar_lea.hbm %s10, %s4182
          %s4185 = sshll.u32 %s4158, 4
          %s4186 = int_to_ptr.vmem [resolvable:$true] %s4185
          %4188 = dma.vmem_to_hbm [thread:$0]  %s4186, 128, %s4183, %s4155
        $region68: #{egnn_pallas.2} parent=59 // pred_fallthru
          _
        // Predicated region
        $region69: #{egnn_pallas.2} parent=59 // pred_check
          %p4189 = pneg %p329
        $region70: #{egnn_pallas.2} parent=59 // pred_check_branch
          %4191 = sbr.rel (%p4189) target = $region72
        $region71: #{egnn_pallas.2} parent=59 // pred_region
          _
        $region72: #{egnn_pallas.2} parent=59 // pred_fallthru
          _
        // Predicated region
        $region73: #{egnn_pallas.2} parent=59 // pred_check
          %p4192 = pneg %p357
        $region74: #{egnn_pallas.2} parent=59 // pred_check_branch
          %4194 = sbr.rel (%p4192) target = $region76
        $region75: #{egnn_pallas.2} parent=59 // pred_region
          %s4195 = smul.u32 8, %s32
        $region76: #{egnn_pallas.2} parent=59 // pred_fallthru
          _
      $region60: #{egnn_pallas.2} parent=5 // pred_fallthru
        _
      %p4196 = scmp.le.s32.totalorder 2, %s22
      // Predicated region
      $region77: #{egnn_pallas.2} parent=5 // pred_check
        %p4197 = pneg %p4196
      $region78: #{egnn_pallas.2} parent=5 // pred_check_branch
        %4199 = sbr.rel (%p4197) target = $region80
      $region79: #{egnn_pallas.2} parent=5 // pred_region
        %s4200 = ssub.s32 %s22, 2
        // Predicated region
        $region81: #{egnn_pallas.2} parent=79 // pred_check
          %p4201 = pneg %p307
        $region82: #{egnn_pallas.2} parent=79 // pred_check_branch
          %4203 = sbr.rel (%p4201) target = $region84
        $region83: #{egnn_pallas.2} parent=79 // pred_region
          %s4204 = sand.u32 %s292, 1
          %s4205 = scalar_lea.sflag [#allocation4], %s4204
          %s4206 = sand.u32 %s292, 1
          %s4207 = smul.addr %s4206, 8
          %s4208 = scalar_lea.vmem [#allocation3], %s4207
          %4209 = dma.done %s4205, 128
        $region84: #{egnn_pallas.2} parent=79 // pred_fallthru
          _
        // Predicated region
        $region85: #{egnn_pallas.2} parent=79 // pred_check
          %p4210 = pneg %p335
        $region86: #{egnn_pallas.2} parent=79 // pred_check_branch
          %4212 = sbr.rel (%p4210) target = $region88
        $region87: #{egnn_pallas.2} parent=79 // pred_region
          %p4213 = scmp.lt.s32.totalorder %s33, 1
          %s4214 = scalar_select %p4213, %s33, 1
          %p4215 = scmp.lt.s32.totalorder %s34, 0
          %s4216 = scalar_select %p4215, %s34, 0
          %s4217 = sadd.s32 %s4216, %s4214
          %s4218 = smul.addr %s4217, 8
          %s4219 = scalar_lea.vmem %s11, %s4218
        $region88: #{egnn_pallas.2} parent=79 // pred_fallthru
          _
        // Predicated region
        $region89: #{egnn_pallas.2} parent=79 // pred_check
          %p4220 = pneg %p363
        $region90: #{egnn_pallas.2} parent=79 // pred_check_branch
          %4222 = sbr.rel (%p4220) target = $region92
        $region91: #{egnn_pallas.2} parent=79 // pred_region
          %s4223 = smul.u32 8, %s34
          %p4224 = scmp.lt.s32.totalorder %s33, 1
          %s4225 = scalar_select %p4224, %s33, 1
          %p4226 = scmp.lt.s32.totalorder %s4223, 7
          %s4227 = scalar_select %p4226, %s4223, 7
          %s4228 = smul.addr %s4225, 8
          %s4229 = sadd.s32 %s4227, %s4228
          %s4230 = smul.addr %s4229, 8
          %s4231 = scalar_lea.vmem %s12, %s4230
        $region92: #{egnn_pallas.2} parent=79 // pred_fallthru
          _
      $region80: #{egnn_pallas.2} parent=5 // pred_fallthru
        _
    $region6: #{egnn_pallas.2} parent=1 // loop_footer
      %s26 = sadd.s32 1, %s22
    $region7: #{egnn_pallas.2} parent=1 // loop_footer_branch
      %21 = sbr.rel target = $region3
    $region8: #{egnn_pallas.2} parent=1 // loop_exit
      _
    %4232 = vsyncpa [#allocation4], 1
    %s4233 = scalar_lea.sflag [#allocation4], 1
    %4234 = vsyncpa %s4233, 1

</llo_original>
